<compile_context>
chip_gen: v7x
topology: tpu7x:2x2x1
jax: 0.10.0
libtpu: 0.0.40
codegen_flags: <defaults>
</compile_context>

<pallas_src>
import functools
import math

import jax
import jax.numpy as jnp
from jax import lax
from jax.experimental import pallas as pl
from jax.experimental.pallas import tpu as pltpu


# -----------------------------------------------------------------------------
# In-kernel building blocks (operate on arrays loaded from refs)
# -----------------------------------------------------------------------------
def _mha_block(x_q, x_kv, bias, wq_h, bq_h, wk_h, bk_h, wv_h, bv_h, wo_h, bo,
               *, scale):
    """Multi-head attention for one batch element.

    x_q:  (Sq, D), x_kv: (Sk, D), bias: (Sq, Sk) or None
    w*_h: (H, D, depth) per-head projection weights, b*_h: (H, 1, depth)
    wo_h: (H, depth, D), bo: (1, D)
    Returns (out (Sq, D), attn (H, Sq, Sk)).
    All heads are processed by single batched dot_generals (no per-head loop,
    no lane-axis concatenation).
    """
    H, D, dep = wq_h.shape
    Sq, Sk = x_q.shape[0], x_kv.shape[0]

    xq_b = jnp.broadcast_to(x_q[None], (H, Sq, D))
    xkv_b = jnp.broadcast_to(x_kv[None], (H, Sk, D))

    dn_proj = (((2,), (1,)), ((0,), (0,)))          # 'hsd,hdk->hsk'
    q = lax.dot_general(xq_b, wq_h, dn_proj,
                        preferred_element_type=jnp.float32) + bq_h   # (H,Sq,dep)
    k = lax.dot_general(xkv_b, wk_h, dn_proj,
                        preferred_element_type=jnp.float32) + bk_h   # (H,Sk,dep)
    v = lax.dot_general(xkv_b, wv_h, dn_proj,
                        preferred_element_type=jnp.float32) + bv_h   # (H,Sk,dep)

    # scores: 'hqd,hkd->hqk'
    scores = lax.dot_general(q, k, (((2,), (2,)), ((0,), (0,))),
                             preferred_element_type=jnp.float32) * scale
    if bias is not None:
        scores = scores + bias[None]                # broadcast over heads

    # numerically-stable softmax; reciprocal+multiply instead of divide
    m = jnp.max(scores, axis=-1, keepdims=True)
    e = jnp.exp(scores - m)
    attn = e * pl.reciprocal(jnp.sum(e, axis=-1, keepdims=True))     # (H,Sq,Sk)

    # context: 'hqk,hkd->hqd'
    ctx = lax.dot_general(attn, v, (((2,), (1,)), ((0,), (0,))),
                          preferred_element_type=jnp.float32)        # (H,Sq,dep)

    # output projection: per-head 'hqd,hdD->hqD', then reduce over heads
    proj = lax.dot_general(ctx, wo_h, (((2,), (1,)), ((0,), (0,))),
                           preferred_element_type=jnp.float32)       # (H,Sq,D)
    out = jnp.sum(proj, axis=0) + bo                                  # (Sq,D)
    return out, attn


def _layer_norm(z, gamma, beta, eps=1e-5):
    mean = jnp.mean(z, axis=-1, keepdims=True)
    var = jnp.mean((z - mean) ** 2, axis=-1, keepdims=True)
    return (z - mean) * lax.rsqrt(var + eps) * gamma + beta


# -----------------------------------------------------------------------------
# Fused decoder-layer kernel (one grid step = one batch element)
# -----------------------------------------------------------------------------
def decoder_layer_kernel(*refs, depth, has_self_bias, has_cross_bias):
    it = iter(refs)
    x_ref = next(it)                       # (1, Sq, D)
    mem_ref = next(it)                     # (1, Sk, D)
    bias_s_ref = next(it) if has_self_bias else None
    bias_c_ref = next(it) if has_cross_bias else None
    sa = [next(it) for _ in range(8)]      # wq_h,bq_h,wk_h,bk_h,wv_h,bv_h,wo_h,bo
    ca = [next(it) for _ in range(8)]
    w1_ref, b1_ref, w2_ref, b2_ref = (next(it) for _ in range(4))
    g1, be1, g2, be2, g3, be3 = (next(it) for _ in range(6))
    out_ref, sa_attn_ref, ca_attn_ref = (next(it) for _ in range(3))

    x = x_ref[0]                           # (Sq, D)
    mem = mem_ref[0]                       # (Sk, D)
    bias_s = bias_s_ref[0] if has_self_bias else None
    bias_c = bias_c_ref[0] if has_cross_bias else None
    scale = 1.0 / math.sqrt(depth)

    # ---- self-attention + residual LayerNorm (dropout = identity) ----
    sa_out, sa_attn = _mha_block(x, x, bias_s, *(r[...] for r in sa), scale=scale)
    sa_attn_ref[0] = sa_attn
    out1 = _layer_norm(x + sa_out, g1[...], be1[...])

    # ---- cross-attention + residual LayerNorm ----
    ca_out, ca_attn = _mha_block(out1, mem, bias_c, *(r[...] for r in ca),
                                 scale=scale)
    ca_attn_ref[0] = ca_attn
    out2 = _layer_norm(out1 + ca_out, g2[...], be2[...])

    # ---- feed-forward (fc1 -> ReLU -> fc2) + residual LayerNorm ----
    h = jnp.maximum(
        jnp.dot(out2, w1_ref[...], preferred_element_type=jnp.float32) + b1_ref[...],
        0.0)
    ff = jnp.dot(h, w2_ref[...], preferred_element_type=jnp.float32) + b2_ref[...]
    out_ref[0] = _layer_norm(out2 + ff, g3[...], be3[...])


# -----------------------------------------------------------------------------
# Host-side parameter preparation (done ONCE, outside the hot path)
# -----------------------------------------------------------------------------
def prepare_params(raw, num_heads):
    """Convert PyTorch-layout params ((out,in) Linear weights) into the layout
    the fused kernel expects: per-head (H, D, depth) projections, (H, depth, D)
    output projection, (1, D)/(1, dff) biases and LN params."""
    D = raw["norm1_g"].shape[0]
    H = num_heads
    dep = D // H

    def prep_attn(a):
        def split_w(w):                    # (out,in) -> (H, in, dep)
            return jnp.transpose(w.T.reshape(D, H, dep), (1, 0, 2))

        def split_b(b):                    # (D,) -> (H, 1, dep)
            return b.reshape(H, 1, dep)

        return {
            "wq_h": split_w(a["wq"]), "bq_h": split_b(a["bq"]),
            "wk_h": split_w(a["wk"]), "bk_h": split_b(a["bk"]),
            "wv_h": split_w(a["wv"]), "bv_h": split_b(a["bv"]),
            "wo_h": a["wo"].T.reshape(H, dep, D),
            "bo": a["bo"].reshape(1, D),
        }

    return {
        "self_attn": prep_attn(raw["self_attn"]),
        "cross_attn": prep_attn(raw["cross_attn"]),
        "ffn": {
            "w1_t": raw["ffn"]["w1"].T,                 # (D, dff)
            "b1": raw["ffn"]["b1"].reshape(1, -1),
            "w2_t": raw["ffn"]["w2"].T,                 # (dff, D)
            "b2": raw["ffn"]["b2"].reshape(1, -1),
        },
        "norm1_g": raw["norm1_g"].reshape(1, D), "norm1_b": raw["norm1_b"].reshape(1, D),
        "norm2_g": raw["norm2_g"].reshape(1, D), "norm2_b": raw["norm2_b"].reshape(1, D),
        "norm3_g": raw["norm3_g"].reshape(1, D), "norm3_b": raw["norm3_b"].reshape(1, D),
    }


def _build_bias(B, Sq, Sk, mask, key_padding_mask):
    """Additive logits bias (B, Sq, Sk): float mask is added, key_padding_mask
    positions become -inf (matching the PyTorch reference)."""
    bias = jnp.zeros((B, Sq, Sk), jnp.float32)
    if mask is not None:
        bias = bias + mask[None, :, :]
    if key_padding_mask is not None:
        bias = jnp.where(key_padding_mask[:, None, :], -jnp.inf, bias)
    return bias


# -----------------------------------------------------------------------------
# Forward wrapper: single fused pallas_call, grid over batch
# -----------------------------------------------------------------------------
def decoder_layer_forward(x, memory, prep, num_heads,
                          tgt_mask=None, memory_mask=None,
                          tgt_key_padding_mask=None, memory_key_padding_mask=None):
    B, Sq, D = x.shape
    Sk = memory.shape[1]
    H = num_heads
    dep = D // H

    has_self_bias = (tgt_mask is not None) or (tgt_key_padding_mask is not None)
    has_cross_bias = (memory_mask is not None) or (memory_key_padding_mask is not None)

    def batch_spec(shape):
        n = len(shape)
        return pl.BlockSpec((1,) + shape, lambda b, n=n: (b,) + (0,) * n)

    def const_spec(arr):
        n = arr.ndim
        return pl.BlockSpec(arr.shape, lambda b, n=n: (0,) * n)

    inputs = [x, memory]
    in_specs = [batch_spec((Sq, D)), batch_spec((Sk, D))]

    if has_self_bias:
        inputs.append(_build_bias(B, Sq, Sq, tgt_mask, tgt_key_padding_mask))
        in_specs.append(batch_spec((Sq, Sq)))
    if has_cross_bias:
        inputs.append(_build_bias(B, Sq, Sk, memory_mask, memory_key_padding_mask))
        in_specs.append(batch_spec((Sq, Sk)))

    weight_list = []
    for name in ("self_attn", "cross_attn"):
        a = prep[name]
        weight_list += [a["wq_h"], a["bq_h"], a["wk_h"], a["bk_h"],
                        a["wv_h"], a["bv_h"], a["wo_h"], a["bo"]]
    f = prep["ffn"]
    weight_list += [f["w1_t"], f["b1"], f["w2_t"], f["b2"]]
    weight_list += [prep["norm1_g"], prep["norm1_b"],
                    prep["norm2_g"], prep["norm2_b"],
                    prep["norm3_g"], prep["norm3_b"]]
    inputs += weight_list
    in_specs += [const_spec(w) for w in weight_list]

    kernel = functools.partial(decoder_layer_kernel, depth=dep,
                               has_self_bias=has_self_bias,
                               has_cross_bias=has_cross_bias)

    out3, sa_w, ca_w = pl.pallas_call(
        kernel,
        out_shape=(jax.ShapeDtypeStruct((B, Sq, D), jnp.float32),
                   jax.ShapeDtypeStruct((B, H, Sq, Sq), jnp.float32),
                   jax.ShapeDtypeStruct((B, H, Sq, Sk), jnp.float32)),
        grid=(B,),
        in_specs=in_specs,
        out_specs=(batch_spec((Sq, D)),
                   batch_spec((H, Sq, Sq)),
                   batch_spec((H, Sq, Sk))),
        compiler_params=pltpu.CompilerParams(
            dimension_semantics=("parallel",)),
    )(*inputs)
    return out3, sa_w, ca_w


# -----------------------------------------------------------------------------
# Pure-JAX reference (for correctness check), on raw PyTorch-layout params
# -----------------------------------------------------------------------------
def _ref_mha(xq, xkv, p, H, bias):
    B, Sq, D = xq.shape
    Sk = xkv.shape[1]
    dep = D // H
    q = xq @ p["wq"].T + p["bq"]
    k = xkv @ p["wk"].T + p["bk"]
    v = xkv @ p["wv"].T + p["bv"]
    split = lambda t, S: t.reshape(B, S, H, dep).transpose(0, 2, 1, 3)
    q, k, v = split(q, Sq), split(k, Sk), split(v, Sk)
    scores = jnp.einsum("bhqd,bhkd->bhqk", q, k) / math.sqrt(dep)
    if bias is not None:
        scores = scores + bias[:, None]
    attn = jax.nn.softmax(scores, axis=-1)
    ctx = jnp.einsum("bhqk,bhkd->bhqd", attn, v)
    ctx = ctx.transpose(0, 2, 1, 3).reshape(B, Sq, D)
    return ctx @ p["wo"].T + p["bo"], attn


def _ref_ln(z, g, b):
    mean = jnp.mean(z, axis=-1, keepdims=True)
    var = jnp.mean((z - mean) ** 2, axis=-1, keepdims=True)
    return (z - mean) / jnp.sqrt(var + 1e-5) * g + b


def _ref_decoder(x, memory, params, H, bias_s, bias_c):
    sa, saw = _ref_mha(x, x, params["self_attn"], H, bias_s)
    out1 = _ref_ln(x + sa, params["norm1_g"], params["norm1_b"])
    ca, caw = _ref_mha(out1, memory, params["cross_attn"], H, bias_c)
    out2 = _ref_ln(out1 + ca, params["norm2_g"], params["norm2_b"])
    p = params["ffn"]
    ff = jnp.maximum(out2 @ p["w1"].T + p["b1"], 0.0) @ p["w2"].T + p["b2"]
    out3 = _ref_ln(out2 + ff, params["norm3_g"], params["norm3_b"])
    return out3, saw, caw


# -----------------------------------------------------------------------------
# Deterministic parameter init (shapes mirror the PyTorch module)
# -----------------------------------------------------------------------------
def init_params(key, d_model, num_heads, dff):
    def attn_params(k):
        ks = jax.random.split(k, 8)
        return {
            "wq": jax.random.normal(ks[0], (d_model, d_model), jnp.float32) * 0.05,
            "bq": jax.random.normal(ks[1], (d_model,), jnp.float32) * 0.05,
            "wk": jax.random.normal(ks[2], (d_model, d_model), jnp.float32) * 0.05,
            "bk": jax.random.normal(ks[3], (d_model,), jnp.float32) * 0.05,
            "wv": jax.random.normal(ks[4], (d_model, d_model), jnp.float32) * 0.05,
            "bv": jax.random.normal(ks[5], (d_model,), jnp.float32) * 0.05,
            "wo": jax.random.normal(ks[6], (d_model, d_model), jnp.float32) * 0.05,
            "bo": jax.random.normal(ks[7], (d_model,), jnp.float32) * 0.05,
        }

    k_sa, k_ca, k_f1, k_f2, k_b1, k_b2 = jax.random.split(key, 6)
    return {
        "self_attn": attn_params(k_sa),
        "cross_attn": attn_params(k_ca),
        "ffn": {
            "w1": jax.random.normal(k_f1, (dff, d_model), jnp.float32) * 0.05,
            "b1": jax.random.normal(k_b1, (dff,), jnp.float32) * 0.05,
            "w2": jax.random.normal(k_f2, (d_model, dff), jnp.float32) * 0.05,
            "b2": jax.random.normal(k_b2, (d_model,), jnp.float32) * 0.05,
        },
        "norm1_g": jnp.ones((d_model,), jnp.float32),
        "norm1_b": jnp.zeros((d_model,), jnp.float32),
        "norm2_g": jnp.ones((d_model,), jnp.float32),
        "norm2_b": jnp.zeros((d_model,), jnp.float32),
        "norm3_g": jnp.ones((d_model,), jnp.float32),
        "norm3_b": jnp.zeros((d_model,), jnp.float32),
    }


if __name__ == "__main__":
    B, S_TGT, S_SRC = 2, 8, 8
    D_MODEL, NUM_HEADS, DFF = 32, 4, 64

    key = jax.random.PRNGKey(0)
    k_x, k_mem, k_p = jax.random.split(key, 3)
    x = jax.random.normal(k_x, (B, S_TGT, D_MODEL), jnp.float32)
    memory = jax.random.normal(k_mem, (B, S_SRC, D_MODEL), jnp.float32)
    raw = init_params(k_p, D_MODEL, NUM_HEADS, DFF)
    prep = prepare_params(raw, NUM_HEADS)          # one-time layout prep

    # ---------------- run 1: no masks (bias inputs skipped) ----------------
    out3, sa_w, ca_w = decoder_layer_forward(x, memory, prep, NUM_HEADS)
    out3, sa_w, ca_w = jax.block_until_ready((out3, sa_w, ca_w))

    ref_out, ref_sw, ref_cw = _ref_decoder(x, memory, raw, NUM_HEADS, None, None)
    assert out3.shape == (B, S_TGT, D_MODEL)
    assert sa_w.shape == (B, NUM_HEADS, S_TGT, S_TGT)
    assert ca_w.shape == (B, NUM_HEADS, S_TGT, S_SRC)
    assert jnp.allclose(out3, ref_out, atol=1e-4, rtol=1e-4)
    assert jnp.allclose(sa_w, ref_sw, atol=1e-4, rtol=1e-4)
    assert jnp.allclose(ca_w, ref_cw, atol=1e-4, rtol=1e-4)

    # ------- run 2: causal tgt_mask + memory key-padding mask (bias path) ----
    causal = jnp.where(jnp.tril(jnp.ones((S_TGT, S_TGT), dtype=bool)),
                       0.0, -1e9).astype(jnp.float32)
    mem_kpm = jnp.zeros((B, S_SRC), dtype=bool).at[1, -2:].set(True)

    out3m, sa_wm, ca_wm = decoder_layer_forward(
        x, memory, prep, NUM_HEADS,
        tgt_mask=causal, memory_key_padding_mask=mem_kpm)
    out3m, sa_wm, ca_wm = jax.block_until_ready((out3m, sa_wm, ca_wm))

    bias_s = _build_bias(B, S_TGT, S_TGT, causal, None)
    bias_c = _build_bias(B, S_TGT, S_SRC, None, mem_kpm)
    ref_outm, ref_swm, ref_cwm = _ref_decoder(x, memory, raw, NUM_HEADS,
                                              bias_s, bias_c)
    assert jnp.allclose(out3m, ref_outm, atol=1e-4, rtol=1e-4)
    assert jnp.allclose(sa_wm, ref_swm, atol=1e-4, rtol=1e-4)
    assert jnp.allclose(ca_wm, ref_cwm, atol=1e-4, rtol=1e-4)

    print("KERNEL_OK")
</pallas_src>

<mosaic_0001>
module attributes {stable_mosaic.version = 11 : i64} {
  func.func @decoder_layer_kernel(%arg0: i32, %arg1: memref<1x8x32xf32, #tpu.memory_space<vmem>>, %arg2: memref<1x8x32xf32, #tpu.memory_space<vmem>>, %arg3: memref<4x32x8xf32, #tpu.memory_space<vmem>>, %arg4: memref<4x1x8xf32, #tpu.memory_space<vmem>>, %arg5: memref<4x32x8xf32, #tpu.memory_space<vmem>>, %arg6: memref<4x1x8xf32, #tpu.memory_space<vmem>>, %arg7: memref<4x32x8xf32, #tpu.memory_space<vmem>>, %arg8: memref<4x1x8xf32, #tpu.memory_space<vmem>>, %arg9: memref<4x8x32xf32, #tpu.memory_space<vmem>>, %arg10: memref<1x32xf32, #tpu.memory_space<vmem>>, %arg11: memref<4x32x8xf32, #tpu.memory_space<vmem>>, %arg12: memref<4x1x8xf32, #tpu.memory_space<vmem>>, %arg13: memref<4x32x8xf32, #tpu.memory_space<vmem>>, %arg14: memref<4x1x8xf32, #tpu.memory_space<vmem>>, %arg15: memref<4x32x8xf32, #tpu.memory_space<vmem>>, %arg16: memref<4x1x8xf32, #tpu.memory_space<vmem>>, %arg17: memref<4x8x32xf32, #tpu.memory_space<vmem>>, %arg18: memref<1x32xf32, #tpu.memory_space<vmem>>, %arg19: memref<32x64xf32, #tpu.memory_space<vmem>>, %arg20: memref<1x64xf32, #tpu.memory_space<vmem>>, %arg21: memref<64x32xf32, #tpu.memory_space<vmem>>, %arg22: memref<1x32xf32, #tpu.memory_space<vmem>>, %arg23: memref<1x32xf32, #tpu.memory_space<vmem>>, %arg24: memref<1x32xf32, #tpu.memory_space<vmem>>, %arg25: memref<1x32xf32, #tpu.memory_space<vmem>>, %arg26: memref<1x32xf32, #tpu.memory_space<vmem>>, %arg27: memref<1x32xf32, #tpu.memory_space<vmem>>, %arg28: memref<1x32xf32, #tpu.memory_space<vmem>>, %arg29: memref<1x8x32xf32, #tpu.memory_space<vmem>>, %arg30: memref<1x4x8x8xf32, #tpu.memory_space<vmem>>, %arg31: memref<1x4x8x8xf32, #tpu.memory_space<vmem>>) attributes {dimension_semantics = [#tpu.dimension_semantics<parallel>], iteration_bounds = array<i64: 2>, scalar_prefetch = 0 : i64, scratch_operands = 0 : i64, tpu.core_type = #tpu.core_type<tc>, window_params = [{transform_indices = @transform_0, window_bounds = array<i64: 1, 8, 32>}, {transform_indices = @transform_1, window_bounds = array<i64: 1, 8, 32>}, {pipeline_mode = #tpu.pipeline_mode<synchronous>, transform_indices = @transform_2, window_bounds = array<i64: 4, 32, 8>}, {pipeline_mode = #tpu.pipeline_mode<synchronous>, transform_indices = @transform_3, window_bounds = array<i64: 4, 1, 8>}, {pipeline_mode = #tpu.pipeline_mode<synchronous>, transform_indices = @transform_4, window_bounds = array<i64: 4, 32, 8>}, {pipeline_mode = #tpu.pipeline_mode<synchronous>, transform_indices = @transform_5, window_bounds = array<i64: 4, 1, 8>}, {pipeline_mode = #tpu.pipeline_mode<synchronous>, transform_indices = @transform_6, window_bounds = array<i64: 4, 32, 8>}, {pipeline_mode = #tpu.pipeline_mode<synchronous>, transform_indices = @transform_7, window_bounds = array<i64: 4, 1, 8>}, {pipeline_mode = #tpu.pipeline_mode<synchronous>, transform_indices = @transform_8, window_bounds = array<i64: 4, 8, 32>}, {pipeline_mode = #tpu.pipeline_mode<synchronous>, transform_indices = @transform_9, window_bounds = array<i64: 1, 32>}, {pipeline_mode = #tpu.pipeline_mode<synchronous>, transform_indices = @transform_10, window_bounds = array<i64: 4, 32, 8>}, {pipeline_mode = #tpu.pipeline_mode<synchronous>, transform_indices = @transform_11, window_bounds = array<i64: 4, 1, 8>}, {pipeline_mode = #tpu.pipeline_mode<synchronous>, transform_indices = @transform_12, window_bounds = array<i64: 4, 32, 8>}, {pipeline_mode = #tpu.pipeline_mode<synchronous>, transform_indices = @transform_13, window_bounds = array<i64: 4, 1, 8>}, {pipeline_mode = #tpu.pipeline_mode<synchronous>, transform_indices = @transform_14, window_bounds = array<i64: 4, 32, 8>}, {pipeline_mode = #tpu.pipeline_mode<synchronous>, transform_indices = @transform_15, window_bounds = array<i64: 4, 1, 8>}, {pipeline_mode = #tpu.pipeline_mode<synchronous>, transform_indices = @transform_16, window_bounds = array<i64: 4, 8, 32>}, {pipeline_mode = #tpu.pipeline_mode<synchronous>, transform_indices = @transform_17, window_bounds = array<i64: 1, 32>}, {pipeline_mode = #tpu.pipeline_mode<synchronous>, transform_indices = @transform_18, window_bounds = array<i64: 32, 64>}, {pipeline_mode = #tpu.pipeline_mode<synchronous>, transform_indices = @transform_19, window_bounds = array<i64: 1, 64>}, {pipeline_mode = #tpu.pipeline_mode<synchronous>, transform_indices = @transform_20, window_bounds = array<i64: 64, 32>}, {pipeline_mode = #tpu.pipeline_mode<synchronous>, transform_indices = @transform_21, window_bounds = array<i64: 1, 32>}, {pipeline_mode = #tpu.pipeline_mode<synchronous>, transform_indices = @transform_22, window_bounds = array<i64: 1, 32>}, {pipeline_mode = #tpu.pipeline_mode<synchronous>, transform_indices = @transform_23, window_bounds = array<i64: 1, 32>}, {pipeline_mode = #tpu.pipeline_mode<synchronous>, transform_indices = @transform_24, window_bounds = array<i64: 1, 32>}, {pipeline_mode = #tpu.pipeline_mode<synchronous>, transform_indices = @transform_25, window_bounds = array<i64: 1, 32>}, {pipeline_mode = #tpu.pipeline_mode<synchronous>, transform_indices = @transform_26, window_bounds = array<i64: 1, 32>}, {pipeline_mode = #tpu.pipeline_mode<synchronous>, transform_indices = @transform_27, window_bounds = array<i64: 1, 32>}, {transform_indices = @transform_28, window_bounds = array<i64: 1, 8, 32>}, {transform_indices = @transform_29, window_bounds = array<i64: 1, 4, 8, 8>}, {transform_indices = @transform_30, window_bounds = array<i64: 1, 4, 8, 8>}]} {
    %c0 = arith.constant 0 : index
    %c0_0 = arith.constant 0 : index
    %c0_1 = arith.constant 0 : index
    %0 = vector.load %arg1[%c0, %c0_0, %c0_1] : memref<1x8x32xf32, #tpu.memory_space<vmem>>, vector<1x8x32xf32>
    %1 = vector.shape_cast %0 : vector<1x8x32xf32> to vector<8x32xf32>
    %c0_2 = arith.constant 0 : index
    %c0_3 = arith.constant 0 : index
    %c0_4 = arith.constant 0 : index
    %2 = vector.load %arg2[%c0_2, %c0_3, %c0_4] : memref<1x8x32xf32, #tpu.memory_space<vmem>>, vector<1x8x32xf32>
    %3 = vector.shape_cast %2 : vector<1x8x32xf32> to vector<8x32xf32>
    %c0_5 = arith.constant 0 : index
    %c0_6 = arith.constant 0 : index
    %c0_7 = arith.constant 0 : index
    %4 = vector.load %arg3[%c0_5, %c0_6, %c0_7] : memref<4x32x8xf32, #tpu.memory_space<vmem>>, vector<4x32x8xf32>
    %c0_8 = arith.constant 0 : index
    %c0_9 = arith.constant 0 : index
    %c0_10 = arith.constant 0 : index
    %5 = vector.load %arg4[%c0_8, %c0_9, %c0_10] : memref<4x1x8xf32, #tpu.memory_space<vmem>>, vector<4x1x8xf32>
    %c0_11 = arith.constant 0 : index
    %c0_12 = arith.constant 0 : index
    %c0_13 = arith.constant 0 : index
    %6 = vector.load %arg5[%c0_11, %c0_12, %c0_13] : memref<4x32x8xf32, #tpu.memory_space<vmem>>, vector<4x32x8xf32>
    %c0_14 = arith.constant 0 : index
    %c0_15 = arith.constant 0 : index
    %c0_16 = arith.constant 0 : index
    %7 = vector.load %arg6[%c0_14, %c0_15, %c0_16] : memref<4x1x8xf32, #tpu.memory_space<vmem>>, vector<4x1x8xf32>
    %c0_17 = arith.constant 0 : index
    %c0_18 = arith.constant 0 : index
    %c0_19 = arith.constant 0 : index
    %8 = vector.load %arg7[%c0_17, %c0_18, %c0_19] : memref<4x32x8xf32, #tpu.memory_space<vmem>>, vector<4x32x8xf32>
    %c0_20 = arith.constant 0 : index
    %c0_21 = arith.constant 0 : index
    %c0_22 = arith.constant 0 : index
    %9 = vector.load %arg8[%c0_20, %c0_21, %c0_22] : memref<4x1x8xf32, #tpu.memory_space<vmem>>, vector<4x1x8xf32>
    %c0_23 = arith.constant 0 : index
    %c0_24 = arith.constant 0 : index
    %c0_25 = arith.constant 0 : index
    %10 = vector.load %arg9[%c0_23, %c0_24, %c0_25] : memref<4x8x32xf32, #tpu.memory_space<vmem>>, vector<4x8x32xf32>
    %c0_26 = arith.constant 0 : index
    %c0_27 = arith.constant 0 : index
    %11 = vector.load %arg10[%c0_26, %c0_27] : memref<1x32xf32, #tpu.memory_space<vmem>>, vector<1x32xf32>
    %12 = vector.shape_cast %1 : vector<8x32xf32> to vector<1x8x32xf32>
    %13 = vector.shape_cast %12 : vector<1x8x32xf32> to vector<1x8x32xf32>
    %14 = vector.broadcast %13 : vector<1x8x32xf32> to vector<4x8x32xf32>
    %15 = vector.shape_cast %1 : vector<8x32xf32> to vector<1x8x32xf32>
    %16 = vector.shape_cast %15 : vector<1x8x32xf32> to vector<1x8x32xf32>
    %17 = vector.broadcast %16 : vector<1x8x32xf32> to vector<4x8x32xf32>
    %cst = arith.constant dense<0.000000e+00> : vector<4x8x8xf32>
    %18 = tpu.matmul %14, %4, %cst {dimension_numbers = #tpu.dot_dimension_numbers<[2], [1], [1], [2], [0, 0, 0, 1, 1, 2], [0], [0]>} : vector<4x8x32xf32>, vector<4x32x8xf32>, vector<4x8x8xf32> -> vector<4x8x8xf32>
    %19 = vector.broadcast %5 : vector<4x1x8xf32> to vector<4x8x8xf32>
    %20 = arith.addf %18, %19 : vector<4x8x8xf32>
    %cst_28 = arith.constant dense<0.000000e+00> : vector<4x8x8xf32>
    %21 = tpu.matmul %17, %6, %cst_28 {dimension_numbers = #tpu.dot_dimension_numbers<[2], [1], [1], [2], [0, 0, 0, 1, 1, 2], [0], [0]>} : vector<4x8x32xf32>, vector<4x32x8xf32>, vector<4x8x8xf32> -> vector<4x8x8xf32>
    %22 = vector.broadcast %7 : vector<4x1x8xf32> to vector<4x8x8xf32>
    %23 = arith.addf %21, %22 : vector<4x8x8xf32>
    %cst_29 = arith.constant dense<0.000000e+00> : vector<4x8x8xf32>
    %24 = tpu.matmul %17, %8, %cst_29 {dimension_numbers = #tpu.dot_dimension_numbers<[2], [1], [1], [2], [0, 0, 0, 1, 1, 2], [0], [0]>} : vector<4x8x32xf32>, vector<4x32x8xf32>, vector<4x8x8xf32> -> vector<4x8x8xf32>
    %25 = vector.broadcast %9 : vector<4x1x8xf32> to vector<4x8x8xf32>
    %26 = arith.addf %24, %25 : vector<4x8x8xf32>
    %cst_30 = arith.constant dense<0.000000e+00> : vector<4x8x8xf32>
    %27 = tpu.matmul %20, %23, %cst_30 {dimension_numbers = #tpu.dot_dimension_numbers<[2], [2], [1], [1], [0, 0, 0, 1, 1, 1], [0], [0]>} : vector<4x8x8xf32>, vector<4x8x8xf32>, vector<4x8x8xf32> -> vector<4x8x8xf32>
    %cst_31 = arith.constant 0.353553385 : f32
    %28 = vector.broadcast %cst_31 : f32 to vector<4x8x8xf32>
    %29 = arith.mulf %27, %28 : vector<4x8x8xf32>
    %cst_32 = arith.constant dense<0xFF800000> : vector<4x8xf32>
    %30 = vector.multi_reduction <maximumf>, %29, %cst_32 [2] : vector<4x8x8xf32> to vector<4x8xf32>
    %31 = vector.shape_cast %30 : vector<4x8xf32> to vector<4x8x1xf32>
    %32 = vector.broadcast %31 : vector<4x8x1xf32> to vector<4x8x8xf32>
    %33 = arith.subf %29, %32 : vector<4x8x8xf32>
    %34 = math.exp %33 : vector<4x8x8xf32>
    %cst_33 = arith.constant dense<0.000000e+00> : vector<4x8xf32>
    %35 = vector.multi_reduction <add>, %34, %cst_33 [2] : vector<4x8x8xf32> to vector<4x8xf32>
    %36 = vector.shape_cast %35 : vector<4x8xf32> to vector<4x8x1xf32>
    %37 = tpu.reciprocal %36 : vector<4x8x1xf32> -> vector<4x8x1xf32>
    %38 = vector.broadcast %37 : vector<4x8x1xf32> to vector<4x8x8xf32>
    %39 = arith.mulf %34, %38 : vector<4x8x8xf32>
    %cst_34 = arith.constant dense<0.000000e+00> : vector<4x8x8xf32>
    %40 = tpu.matmul %39, %26, %cst_34 {dimension_numbers = #tpu.dot_dimension_numbers<[2], [1], [1], [2], [0, 0, 0, 1, 1, 2], [0], [0]>} : vector<4x8x8xf32>, vector<4x8x8xf32>, vector<4x8x8xf32> -> vector<4x8x8xf32>
    %cst_35 = arith.constant dense<0.000000e+00> : vector<4x8x32xf32>
    %41 = tpu.matmul %40, %10, %cst_35 {dimension_numbers = #tpu.dot_dimension_numbers<[2], [1], [1], [2], [0, 0, 0, 1, 1, 2], [0], [0]>} : vector<4x8x8xf32>, vector<4x8x32xf32>, vector<4x8x32xf32> -> vector<4x8x32xf32>
    %cst_36 = arith.constant dense<0.000000e+00> : vector<8x32xf32>
    %42 = vector.multi_reduction <add>, %41, %cst_36 [0] : vector<4x8x32xf32> to vector<8x32xf32>
    %43 = vector.broadcast %11 : vector<1x32xf32> to vector<8x32xf32>
    %44 = arith.addf %42, %43 : vector<8x32xf32>
    %c0_37 = arith.constant 0 : index
    %c0_38 = arith.constant 0 : index
    %c0_39 = arith.constant 0 : index
    %c0_40 = arith.constant 0 : index
    %45 = vector.load %arg30[%c0_37, %c0_38, %c0_39, %c0_40] : memref<1x4x8x8xf32, #tpu.memory_space<vmem>>, vector<1x4x8x8xf32>
    %46 = vector.shape_cast %45 : vector<1x4x8x8xf32> to vector<4x8x8xf32>
    %47 = vector.shape_cast %39 : vector<4x8x8xf32> to vector<1x4x8x8xf32>
    tpu.vector_store %arg30[%c0_37, %c0_38, %c0_39, %c0_40], %47 {strides = array<i32>} : memref<1x4x8x8xf32, #tpu.memory_space<vmem>>, vector<1x4x8x8xf32>,
    %48 = arith.addf %1, %44 : vector<8x32xf32>
    %c0_41 = arith.constant 0 : index
    %c0_42 = arith.constant 0 : index
    %49 = vector.load %arg23[%c0_41, %c0_42] : memref<1x32xf32, #tpu.memory_space<vmem>>, vector<1x32xf32>
    %c0_43 = arith.constant 0 : index
    %c0_44 = arith.constant 0 : index
    %50 = vector.load %arg24[%c0_43, %c0_44] : memref<1x32xf32, #tpu.memory_space<vmem>>, vector<1x32xf32>
    %cst_45 = arith.constant dense<0.000000e+00> : vector<8xf32>
    %51 = vector.multi_reduction <add>, %48, %cst_45 [1] : vector<8x32xf32> to vector<8xf32>
    %52 = vector.shape_cast %51 : vector<8xf32> to vector<8x1xf32>
    %cst_46 = arith.constant 3.200000e+01 : f32
    %53 = vector.broadcast %cst_46 : f32 to vector<8x1xf32>
    %54 = arith.divf %52, %53 : vector<8x1xf32>
    %55 = vector.broadcast %54 : vector<8x1xf32> to vector<8x32xf32>
    %56 = arith.subf %48, %55 : vector<8x32xf32>
    %57 = arith.mulf %56, %56 : vector<8x32xf32>
    %cst_47 = arith.constant dense<0.000000e+00> : vector<8xf32>
    %58 = vector.multi_reduction <add>, %57, %cst_47 [1] : vector<8x32xf32> to vector<8xf32>
    %59 = vector.shape_cast %58 : vector<8xf32> to vector<8x1xf32>
    %cst_48 = arith.constant 3.200000e+01 : f32
    %60 = vector.broadcast %cst_48 : f32 to vector<8x1xf32>
    %61 = arith.divf %59, %60 : vector<8x1xf32>
    %62 = vector.broadcast %54 : vector<8x1xf32> to vector<8x32xf32>
    %63 = arith.subf %48, %62 : vector<8x32xf32>
    %cst_49 = arith.constant 9.99999974E-6 : f32
    %64 = vector.broadcast %cst_49 : f32 to vector<8x1xf32>
    %65 = arith.addf %61, %64 : vector<8x1xf32>
    %66 = math.rsqrt %65 : vector<8x1xf32>
    %67 = vector.broadcast %66 : vector<8x1xf32> to vector<8x32xf32>
    %68 = arith.mulf %63, %67 : vector<8x32xf32>
    %69 = vector.broadcast %49 : vector<1x32xf32> to vector<8x32xf32>
    %70 = arith.mulf %68, %69 : vector<8x32xf32>
    %71 = vector.broadcast %50 : vector<1x32xf32> to vector<8x32xf32>
    %72 = arith.addf %70, %71 : vector<8x32xf32>
    %c0_50 = arith.constant 0 : index
    %c0_51 = arith.constant 0 : index
    %c0_52 = arith.constant 0 : index
    %73 = vector.load %arg11[%c0_50, %c0_51, %c0_52] : memref<4x32x8xf32, #tpu.memory_space<vmem>>, vector<4x32x8xf32>
    %c0_53 = arith.constant 0 : index
    %c0_54 = arith.constant 0 : index
    %c0_55 = arith.constant 0 : index
    %74 = vector.load %arg12[%c0_53, %c0_54, %c0_55] : memref<4x1x8xf32, #tpu.memory_space<vmem>>, vector<4x1x8xf32>
    %c0_56 = arith.constant 0 : index
    %c0_57 = arith.constant 0 : index
    %c0_58 = arith.constant 0 : index
    %75 = vector.load %arg13[%c0_56, %c0_57, %c0_58] : memref<4x32x8xf32, #tpu.memory_space<vmem>>, vector<4x32x8xf32>
    %c0_59 = arith.constant 0 : index
    %c0_60 = arith.constant 0 : index
    %c0_61 = arith.constant 0 : index
    %76 = vector.load %arg14[%c0_59, %c0_60, %c0_61] : memref<4x1x8xf32, #tpu.memory_space<vmem>>, vector<4x1x8xf32>
    %c0_62 = arith.constant 0 : index
    %c0_63 = arith.constant 0 : index
    %c0_64 = arith.constant 0 : index
    %77 = vector.load %arg15[%c0_62, %c0_63, %c0_64] : memref<4x32x8xf32, #tpu.memory_space<vmem>>, vector<4x32x8xf32>
    %c0_65 = arith.constant 0 : index
    %c0_66 = arith.constant 0 : index
    %c0_67 = arith.constant 0 : index
    %78 = vector.load %arg16[%c0_65, %c0_66, %c0_67] : memref<4x1x8xf32, #tpu.memory_space<vmem>>, vector<4x1x8xf32>
    %c0_68 = arith.constant 0 : index
    %c0_69 = arith.constant 0 : index
    %c0_70 = arith.constant 0 : index
    %79 = vector.load %arg17[%c0_68, %c0_69, %c0_70] : memref<4x8x32xf32, #tpu.memory_space<vmem>>, vector<4x8x32xf32>
    %c0_71 = arith.constant 0 : index
    %c0_72 = arith.constant 0 : index
    %80 = vector.load %arg18[%c0_71, %c0_72] : memref<1x32xf32, #tpu.memory_space<vmem>>, vector<1x32xf32>
    %81 = vector.shape_cast %72 : vector<8x32xf32> to vector<1x8x32xf32>
    %82 = vector.shape_cast %81 : vector<1x8x32xf32> to vector<1x8x32xf32>
    %83 = vector.broadcast %82 : vector<1x8x32xf32> to vector<4x8x32xf32>
    %84 = vector.shape_cast %3 : vector<8x32xf32> to vector<1x8x32xf32>
    %85 = vector.shape_cast %84 : vector<1x8x32xf32> to vector<1x8x32xf32>
    %86 = vector.broadcast %85 : vector<1x8x32xf32> to vector<4x8x32xf32>
    %cst_73 = arith.constant dense<0.000000e+00> : vector<4x8x8xf32>
    %87 = tpu.matmul %83, %73, %cst_73 {dimension_numbers = #tpu.dot_dimension_numbers<[2], [1], [1], [2], [0, 0, 0, 1, 1, 2], [0], [0]>} : vector<4x8x32xf32>, vector<4x32x8xf32>, vector<4x8x8xf32> -> vector<4x8x8xf32>
    %88 = vector.broadcast %74 : vector<4x1x8xf32> to vector<4x8x8xf32>
    %89 = arith.addf %87, %88 : vector<4x8x8xf32>
    %cst_74 = arith.constant dense<0.000000e+00> : vector<4x8x8xf32>
    %90 = tpu.matmul %86, %75, %cst_74 {dimension_numbers = #tpu.dot_dimension_numbers<[2], [1], [1], [2], [0, 0, 0, 1, 1, 2], [0], [0]>} : vector<4x8x32xf32>, vector<4x32x8xf32>, vector<4x8x8xf32> -> vector<4x8x8xf32>
    %91 = vector.broadcast %76 : vector<4x1x8xf32> to vector<4x8x8xf32>
    %92 = arith.addf %90, %91 : vector<4x8x8xf32>
    %cst_75 = arith.constant dense<0.000000e+00> : vector<4x8x8xf32>
    %93 = tpu.matmul %86, %77, %cst_75 {dimension_numbers = #tpu.dot_dimension_numbers<[2], [1], [1], [2], [0, 0, 0, 1, 1, 2], [0], [0]>} : vector<4x8x32xf32>, vector<4x32x8xf32>, vector<4x8x8xf32> -> vector<4x8x8xf32>
    %94 = vector.broadcast %78 : vector<4x1x8xf32> to vector<4x8x8xf32>
    %95 = arith.addf %93, %94 : vector<4x8x8xf32>
    %cst_76 = arith.constant dense<0.000000e+00> : vector<4x8x8xf32>
    %96 = tpu.matmul %89, %92, %cst_76 {dimension_numbers = #tpu.dot_dimension_numbers<[2], [2], [1], [1], [0, 0, 0, 1, 1, 1], [0], [0]>} : vector<4x8x8xf32>, vector<4x8x8xf32>, vector<4x8x8xf32> -> vector<4x8x8xf32>
    %cst_77 = arith.constant 0.353553385 : f32
    %97 = vector.broadcast %cst_77 : f32 to vector<4x8x8xf32>
    %98 = arith.mulf %96, %97 : vector<4x8x8xf32>
    %cst_78 = arith.constant dense<0xFF800000> : vector<4x8xf32>
    %99 = vector.multi_reduction <maximumf>, %98, %cst_78 [2] : vector<4x8x8xf32> to vector<4x8xf32>
    %100 = vector.shape_cast %99 : vector<4x8xf32> to vector<4x8x1xf32>
    %101 = vector.broadcast %100 : vector<4x8x1xf32> to vector<4x8x8xf32>
    %102 = arith.subf %98, %101 : vector<4x8x8xf32>
    %103 = math.exp %102 : vector<4x8x8xf32>
    %cst_79 = arith.constant dense<0.000000e+00> : vector<4x8xf32>
    %104 = vector.multi_reduction <add>, %103, %cst_79 [2] : vector<4x8x8xf32> to vector<4x8xf32>
    %105 = vector.shape_cast %104 : vector<4x8xf32> to vector<4x8x1xf32>
    %106 = tpu.reciprocal %105 : vector<4x8x1xf32> -> vector<4x8x1xf32>
    %107 = vector.broadcast %106 : vector<4x8x1xf32> to vector<4x8x8xf32>
    %108 = arith.mulf %103, %107 : vector<4x8x8xf32>
    %cst_80 = arith.constant dense<0.000000e+00> : vector<4x8x8xf32>
    %109 = tpu.matmul %108, %95, %cst_80 {dimension_numbers = #tpu.dot_dimension_numbers<[2], [1], [1], [2], [0, 0, 0, 1, 1, 2], [0], [0]>} : vector<4x8x8xf32>, vector<4x8x8xf32>, vector<4x8x8xf32> -> vector<4x8x8xf32>
    %cst_81 = arith.constant dense<0.000000e+00> : vector<4x8x32xf32>
    %110 = tpu.matmul %109, %79, %cst_81 {dimension_numbers = #tpu.dot_dimension_numbers<[2], [1], [1], [2], [0, 0, 0, 1, 1, 2], [0], [0]>} : vector<4x8x8xf32>, vector<4x8x32xf32>, vector<4x8x32xf32> -> vector<4x8x32xf32>
    %cst_82 = arith.constant dense<0.000000e+00> : vector<8x32xf32>
    %111 = vector.multi_reduction <add>, %110, %cst_82 [0] : vector<4x8x32xf32> to vector<8x32xf32>
    %112 = vector.broadcast %80 : vector<1x32xf32> to vector<8x32xf32>
    %113 = arith.addf %111, %112 : vector<8x32xf32>
    %c0_83 = arith.constant 0 : index
    %c0_84 = arith.constant 0 : index
    %c0_85 = arith.constant 0 : index
    %c0_86 = arith.constant 0 : index
    %114 = vector.load %arg31[%c0_83, %c0_84, %c0_85, %c0_86] : memref<1x4x8x8xf32, #tpu.memory_space<vmem>>, vector<1x4x8x8xf32>
    %115 = vector.shape_cast %114 : vector<1x4x8x8xf32> to vector<4x8x8xf32>
    %116 = vector.shape_cast %108 : vector<4x8x8xf32> to vector<1x4x8x8xf32>
    tpu.vector_store %arg31[%c0_83, %c0_84, %c0_85, %c0_86], %116 {strides = array<i32>} : memref<1x4x8x8xf32, #tpu.memory_space<vmem>>, vector<1x4x8x8xf32>,
    %117 = arith.addf %72, %113 : vector<8x32xf32>
    %c0_87 = arith.constant 0 : index
    %c0_88 = arith.constant 0 : index
    %118 = vector.load %arg25[%c0_87, %c0_88] : memref<1x32xf32, #tpu.memory_space<vmem>>, vector<1x32xf32>
    %c0_89 = arith.constant 0 : index
    %c0_90 = arith.constant 0 : index
    %119 = vector.load %arg26[%c0_89, %c0_90] : memref<1x32xf32, #tpu.memory_space<vmem>>, vector<1x32xf32>
    %cst_91 = arith.constant dense<0.000000e+00> : vector<8xf32>
    %120 = vector.multi_reduction <add>, %117, %cst_91 [1] : vector<8x32xf32> to vector<8xf32>
    %121 = vector.shape_cast %120 : vector<8xf32> to vector<8x1xf32>
    %cst_92 = arith.constant 3.200000e+01 : f32
    %122 = vector.broadcast %cst_92 : f32 to vector<8x1xf32>
    %123 = arith.divf %121, %122 : vector<8x1xf32>
    %124 = vector.broadcast %123 : vector<8x1xf32> to vector<8x32xf32>
    %125 = arith.subf %117, %124 : vector<8x32xf32>
    %126 = arith.mulf %125, %125 : vector<8x32xf32>
    %cst_93 = arith.constant dense<0.000000e+00> : vector<8xf32>
    %127 = vector.multi_reduction <add>, %126, %cst_93 [1] : vector<8x32xf32> to vector<8xf32>
    %128 = vector.shape_cast %127 : vector<8xf32> to vector<8x1xf32>
    %cst_94 = arith.constant 3.200000e+01 : f32
    %129 = vector.broadcast %cst_94 : f32 to vector<8x1xf32>
    %130 = arith.divf %128, %129 : vector<8x1xf32>
    %131 = vector.broadcast %123 : vector<8x1xf32> to vector<8x32xf32>
    %132 = arith.subf %117, %131 : vector<8x32xf32>
    %cst_95 = arith.constant 9.99999974E-6 : f32
    %133 = vector.broadcast %cst_95 : f32 to vector<8x1xf32>
    %134 = arith.addf %130, %133 : vector<8x1xf32>
    %135 = math.rsqrt %134 : vector<8x1xf32>
    %136 = vector.broadcast %135 : vector<8x1xf32> to vector<8x32xf32>
    %137 = arith.mulf %132, %136 : vector<8x32xf32>
    %138 = vector.broadcast %118 : vector<1x32xf32> to vector<8x32xf32>
    %139 = arith.mulf %137, %138 : vector<8x32xf32>
    %140 = vector.broadcast %119 : vector<1x32xf32> to vector<8x32xf32>
    %141 = arith.addf %139, %140 : vector<8x32xf32>
    %c0_96 = arith.constant 0 : index
    %c0_97 = arith.constant 0 : index
    %142 = vector.load %arg19[%c0_96, %c0_97] : memref<32x64xf32, #tpu.memory_space<vmem>>, vector<32x64xf32>
    %cst_98 = arith.constant dense<0.000000e+00> : vector<8x64xf32>
    %143 = tpu.matmul %141, %142, %cst_98 {dimension_numbers = #tpu.dot_dimension_numbers<[1], [0], [0], [1], [0, 0, 1, 1], [], []>} : vector<8x32xf32>, vector<32x64xf32>, vector<8x64xf32> -> vector<8x64xf32>
    %c0_99 = arith.constant 0 : index
    %c0_100 = arith.constant 0 : index
    %144 = vector.load %arg20[%c0_99, %c0_100] : memref<1x64xf32, #tpu.memory_space<vmem>>, vector<1x64xf32>
    %145 = vector.broadcast %144 : vector<1x64xf32> to vector<8x64xf32>
    %146 = arith.addf %143, %145 : vector<8x64xf32>
    %cst_101 = arith.constant 0.000000e+00 : f32
    %147 = vector.broadcast %cst_101 : f32 to vector<8x64xf32>
    %148 = arith.maximumf %146, %147 : vector<8x64xf32>
    %c0_102 = arith.constant 0 : index
    %c0_103 = arith.constant 0 : index
    %149 = vector.load %arg21[%c0_102, %c0_103] : memref<64x32xf32, #tpu.memory_space<vmem>>, vector<64x32xf32>
    %cst_104 = arith.constant dense<0.000000e+00> : vector<8x32xf32>
    %150 = tpu.matmul %148, %149, %cst_104 {dimension_numbers = #tpu.dot_dimension_numbers<[1], [0], [0], [1], [0, 0, 1, 1], [], []>} : vector<8x64xf32>, vector<64x32xf32>, vector<8x32xf32> -> vector<8x32xf32>
    %c0_105 = arith.constant 0 : index
    %c0_106 = arith.constant 0 : index
    %151 = vector.load %arg22[%c0_105, %c0_106] : memref<1x32xf32, #tpu.memory_space<vmem>>, vector<1x32xf32>
    %152 = vector.broadcast %151 : vector<1x32xf32> to vector<8x32xf32>
    %153 = arith.addf %150, %152 : vector<8x32xf32>
    %154 = arith.addf %141, %153 : vector<8x32xf32>
    %c0_107 = arith.constant 0 : index
    %c0_108 = arith.constant 0 : index
    %155 = vector.load %arg27[%c0_107, %c0_108] : memref<1x32xf32, #tpu.memory_space<vmem>>, vector<1x32xf32>
    %c0_109 = arith.constant 0 : index
    %c0_110 = arith.constant 0 : index
    %156 = vector.load %arg28[%c0_109, %c0_110] : memref<1x32xf32, #tpu.memory_space<vmem>>, vector<1x32xf32>
    %cst_111 = arith.constant dense<0.000000e+00> : vector<8xf32>
    %157 = vector.multi_reduction <add>, %154, %cst_111 [1] : vector<8x32xf32> to vector<8xf32>
    %158 = vector.shape_cast %157 : vector<8xf32> to vector<8x1xf32>
    %cst_112 = arith.constant 3.200000e+01 : f32
    %159 = vector.broadcast %cst_112 : f32 to vector<8x1xf32>
    %160 = arith.divf %158, %159 : vector<8x1xf32>
    %161 = vector.broadcast %160 : vector<8x1xf32> to vector<8x32xf32>
    %162 = arith.subf %154, %161 : vector<8x32xf32>
    %163 = arith.mulf %162, %162 : vector<8x32xf32>
    %cst_113 = arith.constant dense<0.000000e+00> : vector<8xf32>
    %164 = vector.multi_reduction <add>, %163, %cst_113 [1] : vector<8x32xf32> to vector<8xf32>
    %165 = vector.shape_cast %164 : vector<8xf32> to vector<8x1xf32>
    %cst_114 = arith.constant 3.200000e+01 : f32
    %166 = vector.broadcast %cst_114 : f32 to vector<8x1xf32>
    %167 = arith.divf %165, %166 : vector<8x1xf32>
    %168 = vector.broadcast %160 : vector<8x1xf32> to vector<8x32xf32>
    %169 = arith.subf %154, %168 : vector<8x32xf32>
    %cst_115 = arith.constant 9.99999974E-6 : f32
    %170 = vector.broadcast %cst_115 : f32 to vector<8x1xf32>
    %171 = arith.addf %167, %170 : vector<8x1xf32>
    %172 = math.rsqrt %171 : vector<8x1xf32>
    %173 = vector.broadcast %172 : vector<8x1xf32> to vector<8x32xf32>
    %174 = arith.mulf %169, %173 : vector<8x32xf32>
    %175 = vector.broadcast %155 : vector<1x32xf32> to vector<8x32xf32>
    %176 = arith.mulf %174, %175 : vector<8x32xf32>
    %177 = vector.broadcast %156 : vector<1x32xf32> to vector<8x32xf32>
    %178 = arith.addf %176, %177 : vector<8x32xf32>
    %c0_116 = arith.constant 0 : index
    %c0_117 = arith.constant 0 : index
    %c0_118 = arith.constant 0 : index
    %179 = vector.load %arg29[%c0_116, %c0_117, %c0_118] : memref<1x8x32xf32, #tpu.memory_space<vmem>>, vector<1x8x32xf32>
    %180 = vector.shape_cast %179 : vector<1x8x32xf32> to vector<8x32xf32>
    %181 = vector.shape_cast %178 : vector<8x32xf32> to vector<1x8x32xf32>
    tpu.vector_store %arg29[%c0_116, %c0_117, %c0_118], %181 {strides = array<i32>} : memref<1x8x32xf32, #tpu.memory_space<vmem>>, vector<1x8x32xf32>,
    return
  }
  func.func @transform_0(%arg0: i32) -> (i32, i32, i32) {
    %c0_i32 = arith.constant 0 : i32
    %c0_i32_0 = arith.constant 0 : i32
    %c0_i32_1 = arith.constant 0 : i32
    return %arg0, %c0_i32, %c0_i32_0 : i32, i32, i32
  }
  func.func @transform_1(%arg0: i32) -> (i32, i32, i32) {
    %c0_i32 = arith.constant 0 : i32
    %c0_i32_0 = arith.constant 0 : i32
    %c0_i32_1 = arith.constant 0 : i32
    return %arg0, %c0_i32, %c0_i32_0 : i32, i32, i32
  }
  func.func @transform_2(%arg0: i32) -> (i32, i32, i32) {
    %c0_i32 = arith.constant 0 : i32
    %c0_i32_0 = arith.constant 0 : i32
    %c0_i32_1 = arith.constant 0 : i32
    %c0_i32_2 = arith.constant 0 : i32
    return %c0_i32, %c0_i32_0, %c0_i32_1 : i32, i32, i32
  }
  func.func @transform_3(%arg0: i32) -> (i32, i32, i32) {
    %c0_i32 = arith.constant 0 : i32
    %c0_i32_0 = arith.constant 0 : i32
    %c0_i32_1 = arith.constant 0 : i32
    %c0_i32_2 = arith.constant 0 : i32
    return %c0_i32, %c0_i32_0, %c0_i32_1 : i32, i32, i32
  }
  func.func @transform_4(%arg0: i32) -> (i32, i32, i32) {
    %c0_i32 = arith.constant 0 : i32
    %c0_i32_0 = arith.constant 0 : i32
    %c0_i32_1 = arith.constant 0 : i32
    %c0_i32_2 = arith.constant 0 : i32
    return %c0_i32, %c0_i32_0, %c0_i32_1 : i32, i32, i32
  }
  func.func @transform_5(%arg0: i32) -> (i32, i32, i32) {
    %c0_i32 = arith.constant 0 : i32
    %c0_i32_0 = arith.constant 0 : i32
    %c0_i32_1 = arith.constant 0 : i32
    %c0_i32_2 = arith.constant 0 : i32
    return %c0_i32, %c0_i32_0, %c0_i32_1 : i32, i32, i32
  }
  func.func @transform_6(%arg0: i32) -> (i32, i32, i32) {
    %c0_i32 = arith.constant 0 : i32
    %c0_i32_0 = arith.constant 0 : i32
    %c0_i32_1 = arith.constant 0 : i32
    %c0_i32_2 = arith.constant 0 : i32
    return %c0_i32, %c0_i32_0, %c0_i32_1 : i32, i32, i32
  }
  func.func @transform_7(%arg0: i32) -> (i32, i32, i32) {
    %c0_i32 = arith.constant 0 : i32
    %c0_i32_0 = arith.constant 0 : i32
    %c0_i32_1 = arith.constant 0 : i32
    %c0_i32_2 = arith.constant 0 : i32
    return %c0_i32, %c0_i32_0, %c0_i32_1 : i32, i32, i32
  }
  func.func @transform_8(%arg0: i32) -> (i32, i32, i32) {
    %c0_i32 = arith.constant 0 : i32
    %c0_i32_0 = arith.constant 0 : i32
    %c0_i32_1 = arith.constant 0 : i32
    %c0_i32_2 = arith.constant 0 : i32
    return %c0_i32, %c0_i32_0, %c0_i32_1 : i32, i32, i32
  }
  func.func @transform_9(%arg0: i32) -> (i32, i32) {
    %c0_i32 = arith.constant 0 : i32
    %c0_i32_0 = arith.constant 0 : i32
    %c0_i32_1 = arith.constant 0 : i32
    return %c0_i32, %c0_i32_0 : i32, i32
  }
  func.func @transform_10(%arg0: i32) -> (i32, i32, i32) {
    %c0_i32 = arith.constant 0 : i32
    %c0_i32_0 = arith.constant 0 : i32
    %c0_i32_1 = arith.constant 0 : i32
    %c0_i32_2 = arith.constant 0 : i32
    return %c0_i32, %c0_i32_0, %c0_i32_1 : i32, i32, i32
  }
  func.func @transform_11(%arg0: i32) -> (i32, i32, i32) {
    %c0_i32 = arith.constant 0 : i32
    %c0_i32_0 = arith.constant 0 : i32
    %c0_i32_1 = arith.constant 0 : i32
    %c0_i32_2 = arith.constant 0 : i32
    return %c0_i32, %c0_i32_0, %c0_i32_1 : i32, i32, i32
  }
  func.func @transform_12(%arg0: i32) -> (i32, i32, i32) {
    %c0_i32 = arith.constant 0 : i32
    %c0_i32_0 = arith.constant 0 : i32
    %c0_i32_1 = arith.constant 0 : i32
    %c0_i32_2 = arith.constant 0 : i32
    return %c0_i32, %c0_i32_0, %c0_i32_1 : i32, i32, i32
  }
  func.func @transform_13(%arg0: i32) -> (i32, i32, i32) {
    %c0_i32 = arith.constant 0 : i32
    %c0_i32_0 = arith.constant 0 : i32
    %c0_i32_1 = arith.constant 0 : i32
    %c0_i32_2 = arith.constant 0 : i32
    return %c0_i32, %c0_i32_0, %c0_i32_1 : i32, i32, i32
  }
  func.func @transform_14(%arg0: i32) -> (i32, i32, i32) {
    %c0_i32 = arith.constant 0 : i32
    %c0_i32_0 = arith.constant 0 : i32
    %c0_i32_1 = arith.constant 0 : i32
    %c0_i32_2 = arith.constant 0 : i32
    return %c0_i32, %c0_i32_0, %c0_i32_1 : i32, i32, i32
  }
  func.func @transform_15(%arg0: i32) -> (i32, i32, i32) {
    %c0_i32 = arith.constant 0 : i32
    %c0_i32_0 = arith.constant 0 : i32
    %c0_i32_1 = arith.constant 0 : i32
    %c0_i32_2 = arith.constant 0 : i32
    return %c0_i32, %c0_i32_0, %c0_i32_1 : i32, i32, i32
  }
  func.func @transform_16(%arg0: i32) -> (i32, i32, i32) {
    %c0_i32 = arith.constant 0 : i32
    %c0_i32_0 = arith.constant 0 : i32
    %c0_i32_1 = arith.constant 0 : i32
    %c0_i32_2 = arith.constant 0 : i32
    return %c0_i32, %c0_i32_0, %c0_i32_1 : i32, i32, i32
  }
  func.func @transform_17(%arg0: i32) -> (i32, i32) {
    %c0_i32 = arith.constant 0 : i32
    %c0_i32_0 = arith.constant 0 : i32
    %c0_i32_1 = arith.constant 0 : i32
    return %c0_i32, %c0_i32_0 : i32, i32
  }
  func.func @transform_18(%arg0: i32) -> (i32, i32) {
    %c0_i32 = arith.constant 0 : i32
    %c0_i32_0 = arith.constant 0 : i32
    %c0_i32_1 = arith.constant 0 : i32
    return %c0_i32, %c0_i32_0 : i32, i32
  }
  func.func @transform_19(%arg0: i32) -> (i32, i32) {
    %c0_i32 = arith.constant 0 : i32
    %c0_i32_0 = arith.constant 0 : i32
    %c0_i32_1 = arith.constant 0 : i32
    return %c0_i32, %c0_i32_0 : i32, i32
  }
  func.func @transform_20(%arg0: i32) -> (i32, i32) {
    %c0_i32 = arith.constant 0 : i32
    %c0_i32_0 = arith.constant 0 : i32
    %c0_i32_1 = arith.constant 0 : i32
    return %c0_i32, %c0_i32_0 : i32, i32
  }
  func.func @transform_21(%arg0: i32) -> (i32, i32) {
    %c0_i32 = arith.constant 0 : i32
    %c0_i32_0 = arith.constant 0 : i32
    %c0_i32_1 = arith.constant 0 : i32
    return %c0_i32, %c0_i32_0 : i32, i32
  }
  func.func @transform_22(%arg0: i32) -> (i32, i32) {
    %c0_i32 = arith.constant 0 : i32
    %c0_i32_0 = arith.constant 0 : i32
    %c0_i32_1 = arith.constant 0 : i32
    return %c0_i32, %c0_i32_0 : i32, i32
  }
  func.func @transform_23(%arg0: i32) -> (i32, i32) {
    %c0_i32 = arith.constant 0 : i32
    %c0_i32_0 = arith.constant 0 : i32
    %c0_i32_1 = arith.constant 0 : i32
    return %c0_i32, %c0_i32_0 : i32, i32
  }
  func.func @transform_24(%arg0: i32) -> (i32, i32) {
    %c0_i32 = arith.constant 0 : i32
    %c0_i32_0 = arith.constant 0 : i32
    %c0_i32_1 = arith.constant 0 : i32
    return %c0_i32, %c0_i32_0 : i32, i32
  }
  func.func @transform_25(%arg0: i32) -> (i32, i32) {
    %c0_i32 = arith.constant 0 : i32
    %c0_i32_0 = arith.constant 0 : i32
    %c0_i32_1 = arith.constant 0 : i32
    return %c0_i32, %c0_i32_0 : i32, i32
  }
  func.func @transform_26(%arg0: i32) -> (i32, i32) {
    %c0_i32 = arith.constant 0 : i32
    %c0_i32_0 = arith.constant 0 : i32
    %c0_i32_1 = arith.constant 0 : i32
    return %c0_i32, %c0_i32_0 : i32, i32
  }
  func.func @transform_27(%arg0: i32) -> (i32, i32) {
    %c0_i32 = arith.constant 0 : i32
    %c0_i32_0 = arith.constant 0 : i32
    %c0_i32_1 = arith.constant 0 : i32
    return %c0_i32, %c0_i32_0 : i32, i32
  }
  func.func @transform_28(%arg0: i32) -> (i32, i32, i32) {
    %c0_i32 = arith.constant 0 : i32
    %c0_i32_0 = arith.constant 0 : i32
    %c0_i32_1 = arith.constant 0 : i32
    return %arg0, %c0_i32, %c0_i32_0 : i32, i32, i32
  }
  func.func @transform_29(%arg0: i32) -> (i32, i32, i32, i32) {
    %c0_i32 = arith.constant 0 : i32
    %c0_i32_0 = arith.constant 0 : i32
    %c0_i32_1 = arith.constant 0 : i32
    %c0_i32_2 = arith.constant 0 : i32
    return %arg0, %c0_i32, %c0_i32_0, %c0_i32_1 : i32, i32, i32, i32
  }
  func.func @transform_30(%arg0: i32) -> (i32, i32, i32, i32) {
    %c0_i32 = arith.constant 0 : i32
    %c0_i32_0 = arith.constant 0 : i32
    %c0_i32_1 = arith.constant 0 : i32
    %c0_i32_2 = arith.constant 0 : i32
    return %arg0, %c0_i32, %c0_i32_0, %c0_i32_1 : i32, i32, i32, i32
  }
}

</mosaic_0001>

<llo_original>
// kernel: tpu_custom_call.1
$region0: #{tpu_custom_call.1}
  #allocation0 [shape = 'u32[]', space=smem, size = 0x4, offset = 0x4, fixed_abs, tag = 'smem constant byte address 0x4 - core index']
  #allocation1 [shape = 'u32[144,128]{1,0:T(1,128)}', space=vmem, size = 0x12000, scoped, tag = 'internal scratch']
  %s0 = inlined_call_operand.smem [shape: u32[31], index: -1, kind: input, shape index: {}]
  %s1 = sld [smem:[%s0]]
  %s2 = scalar_lea.smem %s0, 1
  %s3 = sld [smem:[%s2]]
  %s4 = scalar_lea.smem %s0, 2
  %s5 = sld [smem:[%s4]]
  %s6 = scalar_lea.smem %s0, 3
  %s7 = sld [smem:[%s6]]
  %s8 = scalar_lea.smem %s0, 4
  %s9 = sld [smem:[%s8]]
  %s10 = scalar_lea.smem %s0, 5
  %s11 = sld [smem:[%s10]]
  %s12 = scalar_lea.smem %s0, 6
  %s13 = sld [smem:[%s12]]
  %s14 = scalar_lea.smem %s0, 7
  %s15 = sld [smem:[%s14]]
  %s16 = scalar_lea.smem %s0, 8
  %s17 = sld [smem:[%s16]]
  %s18 = scalar_lea.smem %s0, 9
  %s19 = sld [smem:[%s18]]
  %s20 = scalar_lea.smem %s0, 10
  %s21 = sld [smem:[%s20]]
  %s22 = scalar_lea.smem %s0, 11
  %s23 = sld [smem:[%s22]]
  %s24 = scalar_lea.smem %s0, 12
  %s25 = sld [smem:[%s24]]
  %s26 = scalar_lea.smem %s0, 13
  %s27 = sld [smem:[%s26]]
  %s28 = scalar_lea.smem %s0, 14
  %s29 = sld [smem:[%s28]]
  %s30 = scalar_lea.smem %s0, 15
  %s31 = sld [smem:[%s30]]
  %s32 = scalar_lea.smem %s0, 16
  %s33 = sld [smem:[%s32]]
  %s34 = scalar_lea.smem %s0, 17
  %s35 = sld [smem:[%s34]]
  %s36 = scalar_lea.smem %s0, 18
  %s37 = sld [smem:[%s36]]
  %s38 = scalar_lea.smem %s0, 19
  %s39 = sld [smem:[%s38]]
  %s40 = scalar_lea.smem %s0, 20
  %s41 = sld [smem:[%s40]]
  %s42 = scalar_lea.smem %s0, 21
  %s43 = sld [smem:[%s42]]
  %s44 = scalar_lea.smem %s0, 22
  %s45 = sld [smem:[%s44]]
  %s46 = scalar_lea.smem %s0, 23
  %s47 = sld [smem:[%s46]]
  %s48 = scalar_lea.smem %s0, 24
  %s49 = sld [smem:[%s48]]
  %s50 = scalar_lea.smem %s0, 25
  %s51 = sld [smem:[%s50]]
  %s52 = scalar_lea.smem %s0, 26
  %s53 = sld [smem:[%s52]]
  %s54 = scalar_lea.smem %s0, 27
  %s55 = sld [smem:[%s54]]
  %s56 = scalar_lea.smem %s0, 28
  %s57 = sld [smem:[%s56]]
  %s58 = scalar_lea.smem %s0, 29
  %s59 = sld [smem:[%s58]]
  %s60 = scalar_lea.smem %s0, 30
  %s61 = sld [smem:[%s60]]
  %62 = xla_tuple %s57, %s59, %s61
  %s63 = sld [smem:[#allocation0]]
  $region161: #{tpu_custom_call.1} parent=0
    _
  %s65 = ssub.s32 1, %s63
  %s66 = scalar_select 0, %s65, %s63
  $region1: #{tpu_custom_call.1} parent=0
    #allocation2 [shape = 'u8[8192]{0}', space=vmem, size = 0x2000, scoped, tag = 'output window, operand 0']
    #allocation3 [shape = 's32[2]{0}', space=sflag, size = 0x8, scoped, tag = 'scoped memory for tpu_custom_call.1']
    #allocation4 [shape = 'u8[32768]{0}', space=vmem, size = 0x8000, scoped, tag = 'output window, operand 1']
    #allocation5 [shape = 's32[2]{0}', space=sflag, size = 0x8, scoped, tag = 'scoped memory for tpu_custom_call.1']
    #allocation6 [shape = 'u8[32768]{0}', space=vmem, size = 0x8000, scoped, tag = 'output window, operand 2']
    %67 = vsyncpa [#allocation3], 0
    %s68 = scalar_lea.sflag [#allocation3], 1
    %69 = vsyncpa %s68, 0
    %70 = vsyncpa [#allocation5], 0
    %s71 = scalar_lea.sflag [#allocation5], 1
    %72 = vsyncpa %s71, 0
    loop: start=0, step=1, limit=4
    $region2: #{tpu_custom_call.1} parent=1 // loop_pre_header
      _
    $region3: #{tpu_custom_call.1} parent=1 // loop_header
      %s74 = sphi 0, %s78
      %p75 = scmp.ge.s32.totalorder %s74, 4
      %s84 = sphi 0, %s86
      %s87 = sphi 0, %s84
      %s88 = sphi 0, %s87
      %s104 = sphi 0, %s88
      %s110 = sphi 0, %s112
      %s113 = sphi 0, %s110
      %s114 = sphi 0, %s113
      %s130 = sphi 0, %s114
      %s134 = sphi 0, %s134
      %s136 = sphi 0, %s134
      %s137 = sphi 0, %s136
      %s151 = sphi 0, %s137
      %s155 = sphi 0, %s155
      %s157 = sphi 0, %s155
      %s158 = sphi 0, %s157
      %s172 = sphi 0, %s158
      %s176 = sphi 0, %s176
      %s178 = sphi 0, %s176
      %s179 = sphi 0, %s178
      %s193 = sphi 0, %s179
      %s197 = sphi 0, %s197
      %s199 = sphi 0, %s197
      %s200 = sphi 0, %s199
      %s214 = sphi 0, %s200
      %s218 = sphi 0, %s218
      %s220 = sphi 0, %s218
      %s221 = sphi 0, %s220
      %s235 = sphi 0, %s221
      %s239 = sphi 0, %s239
      %s241 = sphi 0, %s239
      %s242 = sphi 0, %s241
      %s256 = sphi 0, %s242
      %s260 = sphi 0, %s260
      %s262 = sphi 0, %s260
      %s263 = sphi 0, %s262
      %s277 = sphi 0, %s263
      %s281 = sphi 0, %s281
      %s283 = sphi 0, %s281
      %s284 = sphi 0, %s283
      %s298 = sphi 0, %s284
      %s302 = sphi 0, %s302
      %s304 = sphi 0, %s302
      %s305 = sphi 0, %s304
      %s319 = sphi 0, %s305
      %s323 = sphi 0, %s323
      %s325 = sphi 0, %s323
      %s326 = sphi 0, %s325
      %s340 = sphi 0, %s326
      %s344 = sphi 0, %s344
      %s346 = sphi 0, %s344
      %s347 = sphi 0, %s346
      %s361 = sphi 0, %s347
      %s365 = sphi 0, %s365
      %s367 = sphi 0, %s365
      %s368 = sphi 0, %s367
      %s382 = sphi 0, %s368
      %s386 = sphi 0, %s386
      %s388 = sphi 0, %s386
      %s389 = sphi 0, %s388
      %s403 = sphi 0, %s389
      %s407 = sphi 0, %s407
      %s409 = sphi 0, %s407
      %s410 = sphi 0, %s409
      %s424 = sphi 0, %s410
      %s428 = sphi 0, %s428
      %s430 = sphi 0, %s428
      %s431 = sphi 0, %s430
      %s445 = sphi 0, %s431
      %s449 = sphi 0, %s449
      %s451 = sphi 0, %s449
      %s452 = sphi 0, %s451
      %s466 = sphi 0, %s452
      %s470 = sphi 0, %s470
      %s472 = sphi 0, %s470
      %s473 = sphi 0, %s472
      %s487 = sphi 0, %s473
      %s491 = sphi 0, %s491
      %s493 = sphi 0, %s491
      %s494 = sphi 0, %s493
      %s508 = sphi 0, %s494
      %s512 = sphi 0, %s512
      %s514 = sphi 0, %s512
      %s515 = sphi 0, %s514
      %s529 = sphi 0, %s515
      %s533 = sphi 0, %s533
      %s535 = sphi 0, %s533
      %s536 = sphi 0, %s535
      %s550 = sphi 0, %s536
      %s554 = sphi 0, %s554
      %s556 = sphi 0, %s554
      %s557 = sphi 0, %s556
      %s571 = sphi 0, %s557
      %s575 = sphi 0, %s575
      %s577 = sphi 0, %s575
      %s578 = sphi 0, %s577
      %s592 = sphi 0, %s578
      %s596 = sphi 0, %s596
      %s598 = sphi 0, %s596
      %s599 = sphi 0, %s598
      %s613 = sphi 0, %s599
      %s617 = sphi 0, %s617
      %s619 = sphi 0, %s617
      %s620 = sphi 0, %s619
      %s634 = sphi 0, %s620
      %s638 = sphi 0, %s638
      %s640 = sphi 0, %s638
      %s641 = sphi 0, %s640
      %s655 = sphi 0, %s641
      %s659 = sphi 0, %s659
      %s661 = sphi 0, %s659
      %s662 = sphi 0, %s661
      %s676 = sphi 0, %s662
      %s682 = sphi 0, %s684
      %s685 = sphi 0, %s682
      %s686 = sphi 0, %s685
      %s702 = sphi 0, %s686
      %s708 = sphi 0, %s710
      %s711 = sphi 0, %s708
      %s712 = sphi 0, %s711
      %s728 = sphi 0, %s712
      %s734 = sphi 0, %s736
      %s737 = sphi 0, %s734
      %s738 = sphi 0, %s737
      %s754 = sphi 0, %s738
    $region4: #{tpu_custom_call.1} parent=1 // loop_header_branch
      %77 = sbr.rel (%p75) target = $region8
    $region5: #{tpu_custom_call.1} parent=1 // loop_body
      %s79 = ssub.s32 %s74, 1
      %s80 = ssub.s32 %s74, 2
      %s81 = sadd.s32 %s74, 1
      %s82 = ssub.s32 %s74, %s81
      %p83 = scmp.eq.s32.totalorder %s82, 0
      %s85 = sadd.s32 %s84, 1
      %s86 = scalar_select %p83, %s84, %s85
      %p89 = pneg %p83
      %p90 = scmp.eq.s32.totalorder %s74, 1
      %p91 = por %p89, %p90
      %p92 = scmp.ne.s32.totalorder %s84, %s87
      %p93 = scmp.eq.s32.totalorder %s74, 0
      %p94 = por %p92, %p93
      %p95 = scmp.ne.s32.totalorder %s84, %s87
      %p96 = scmp.eq.s32.totalorder %s79, 1
      %p97 = por %p95, %p96
      %p98 = scmp.ne.s32.totalorder %s87, %s88
      %p99 = scmp.eq.s32.totalorder %s79, 0
      %p100 = por %p98, %p99
      %p101 = scmp.ne.s32.totalorder %s87, %s88
      %p102 = scmp.eq.s32.totalorder %s80, 1
      %p103 = por %p101, %p102
      %p105 = scmp.ne.s32.totalorder %s88, %s104
      %p106 = scmp.eq.s32.totalorder %s80, 0
      %p107 = por %p105, %p106
      %s108 = ssub.s32 %s74, %s81
      %p109 = scmp.eq.s32.totalorder %s108, 0
      %s111 = sadd.s32 %s110, 1
      %s112 = scalar_select %p109, %s110, %s111
      %p115 = pneg %p109
      %p116 = scmp.eq.s32.totalorder %s74, 1
      %p117 = por %p115, %p116
      %p118 = scmp.ne.s32.totalorder %s110, %s113
      %p119 = scmp.eq.s32.totalorder %s74, 0
      %p120 = por %p118, %p119
      %p121 = scmp.ne.s32.totalorder %s110, %s113
      %p122 = scmp.eq.s32.totalorder %s79, 1
      %p123 = por %p121, %p122
      %p124 = scmp.ne.s32.totalorder %s113, %s114
      %p125 = scmp.eq.s32.totalorder %s79, 0
      %p126 = por %p124, %p125
      %p127 = scmp.ne.s32.totalorder %s113, %s114
      %p128 = scmp.eq.s32.totalorder %s80, 1
      %p129 = por %p127, %p128
      %p131 = scmp.ne.s32.totalorder %s114, %s130
      %p132 = scmp.eq.s32.totalorder %s80, 0
      %p133 = por %p131, %p132
      %s135 = sadd.s32 %s134, 1
      %p138 = scmp.eq.s32.totalorder %s74, 1
      %p139 = scmp.ne.s32.totalorder %s134, %s136
      %p140 = scmp.eq.s32.totalorder %s74, 0
      %p141 = por %p139, %p140
      %p142 = scmp.ne.s32.totalorder %s134, %s136
      %p143 = scmp.eq.s32.totalorder %s79, 1
      %p144 = por %p142, %p143
      %p145 = scmp.ne.s32.totalorder %s136, %s137
      %p146 = scmp.eq.s32.totalorder %s79, 0
      %p147 = por %p145, %p146
      %p148 = scmp.ne.s32.totalorder %s136, %s137
      %p149 = scmp.eq.s32.totalorder %s80, 1
      %p150 = por %p148, %p149
      %p152 = scmp.ne.s32.totalorder %s137, %s151
      %p153 = scmp.eq.s32.totalorder %s80, 0
      %p154 = por %p152, %p153
      %s156 = sadd.s32 %s155, 1
      %p159 = scmp.eq.s32.totalorder %s74, 1
      %p160 = scmp.ne.s32.totalorder %s155, %s157
      %p161 = scmp.eq.s32.totalorder %s74, 0
      %p162 = por %p160, %p161
      %p163 = scmp.ne.s32.totalorder %s155, %s157
      %p164 = scmp.eq.s32.totalorder %s79, 1
      %p165 = por %p163, %p164
      %p166 = scmp.ne.s32.totalorder %s157, %s158
      %p167 = scmp.eq.s32.totalorder %s79, 0
      %p168 = por %p166, %p167
      %p169 = scmp.ne.s32.totalorder %s157, %s158
      %p170 = scmp.eq.s32.totalorder %s80, 1
      %p171 = por %p169, %p170
      %p173 = scmp.ne.s32.totalorder %s158, %s172
      %p174 = scmp.eq.s32.totalorder %s80, 0
      %p175 = por %p173, %p174
      %s177 = sadd.s32 %s176, 1
      %p180 = scmp.eq.s32.totalorder %s74, 1
      %p181 = scmp.ne.s32.totalorder %s176, %s178
      %p182 = scmp.eq.s32.totalorder %s74, 0
      %p183 = por %p181, %p182
      %p184 = scmp.ne.s32.totalorder %s176, %s178
      %p185 = scmp.eq.s32.totalorder %s79, 1
      %p186 = por %p184, %p185
      %p187 = scmp.ne.s32.totalorder %s178, %s179
      %p188 = scmp.eq.s32.totalorder %s79, 0
      %p189 = por %p187, %p188
      %p190 = scmp.ne.s32.totalorder %s178, %s179
      %p191 = scmp.eq.s32.totalorder %s80, 1
      %p192 = por %p190, %p191
      %p194 = scmp.ne.s32.totalorder %s179, %s193
      %p195 = scmp.eq.s32.totalorder %s80, 0
      %p196 = por %p194, %p195
      %s198 = sadd.s32 %s197, 1
      %p201 = scmp.eq.s32.totalorder %s74, 1
      %p202 = scmp.ne.s32.totalorder %s197, %s199
      %p203 = scmp.eq.s32.totalorder %s74, 0
      %p204 = por %p202, %p203
      %p205 = scmp.ne.s32.totalorder %s197, %s199
      %p206 = scmp.eq.s32.totalorder %s79, 1
      %p207 = por %p205, %p206
      %p208 = scmp.ne.s32.totalorder %s199, %s200
      %p209 = scmp.eq.s32.totalorder %s79, 0
      %p210 = por %p208, %p209
      %p211 = scmp.ne.s32.totalorder %s199, %s200
      %p212 = scmp.eq.s32.totalorder %s80, 1
      %p213 = por %p211, %p212
      %p215 = scmp.ne.s32.totalorder %s200, %s214
      %p216 = scmp.eq.s32.totalorder %s80, 0
      %p217 = por %p215, %p216
      %s219 = sadd.s32 %s218, 1
      %p222 = scmp.eq.s32.totalorder %s74, 1
      %p223 = scmp.ne.s32.totalorder %s218, %s220
      %p224 = scmp.eq.s32.totalorder %s74, 0
      %p225 = por %p223, %p224
      %p226 = scmp.ne.s32.totalorder %s218, %s220
      %p227 = scmp.eq.s32.totalorder %s79, 1
      %p228 = por %p226, %p227
      %p229 = scmp.ne.s32.totalorder %s220, %s221
      %p230 = scmp.eq.s32.totalorder %s79, 0
      %p231 = por %p229, %p230
      %p232 = scmp.ne.s32.totalorder %s220, %s221
      %p233 = scmp.eq.s32.totalorder %s80, 1
      %p234 = por %p232, %p233
      %p236 = scmp.ne.s32.totalorder %s221, %s235
      %p237 = scmp.eq.s32.totalorder %s80, 0
      %p238 = por %p236, %p237
      %s240 = sadd.s32 %s239, 1
      %p243 = scmp.eq.s32.totalorder %s74, 1
      %p244 = scmp.ne.s32.totalorder %s239, %s241
      %p245 = scmp.eq.s32.totalorder %s74, 0
      %p246 = por %p244, %p245
      %p247 = scmp.ne.s32.totalorder %s239, %s241
      %p248 = scmp.eq.s32.totalorder %s79, 1
      %p249 = por %p247, %p248
      %p250 = scmp.ne.s32.totalorder %s241, %s242
      %p251 = scmp.eq.s32.totalorder %s79, 0
      %p252 = por %p250, %p251
      %p253 = scmp.ne.s32.totalorder %s241, %s242
      %p254 = scmp.eq.s32.totalorder %s80, 1
      %p255 = por %p253, %p254
      %p257 = scmp.ne.s32.totalorder %s242, %s256
      %p258 = scmp.eq.s32.totalorder %s80, 0
      %p259 = por %p257, %p258
      %s261 = sadd.s32 %s260, 1
      %p264 = scmp.eq.s32.totalorder %s74, 1
      %p265 = scmp.ne.s32.totalorder %s260, %s262
      %p266 = scmp.eq.s32.totalorder %s74, 0
      %p267 = por %p265, %p266
      %p268 = scmp.ne.s32.totalorder %s260, %s262
      %p269 = scmp.eq.s32.totalorder %s79, 1
      %p270 = por %p268, %p269
      %p271 = scmp.ne.s32.totalorder %s262, %s263
      %p272 = scmp.eq.s32.totalorder %s79, 0
      %p273 = por %p271, %p272
      %p274 = scmp.ne.s32.totalorder %s262, %s263
      %p275 = scmp.eq.s32.totalorder %s80, 1
      %p276 = por %p274, %p275
      %p278 = scmp.ne.s32.totalorder %s263, %s277
      %p279 = scmp.eq.s32.totalorder %s80, 0
      %p280 = por %p278, %p279
      %s282 = sadd.s32 %s281, 1
      %p285 = scmp.eq.s32.totalorder %s74, 1
      %p286 = scmp.ne.s32.totalorder %s281, %s283
      %p287 = scmp.eq.s32.totalorder %s74, 0
      %p288 = por %p286, %p287
      %p289 = scmp.ne.s32.totalorder %s281, %s283
      %p290 = scmp.eq.s32.totalorder %s79, 1
      %p291 = por %p289, %p290
      %p292 = scmp.ne.s32.totalorder %s283, %s284
      %p293 = scmp.eq.s32.totalorder %s79, 0
      %p294 = por %p292, %p293
      %p295 = scmp.ne.s32.totalorder %s283, %s284
      %p296 = scmp.eq.s32.totalorder %s80, 1
      %p297 = por %p295, %p296
      %p299 = scmp.ne.s32.totalorder %s284, %s298
      %p300 = scmp.eq.s32.totalorder %s80, 0
      %p301 = por %p299, %p300
      %s303 = sadd.s32 %s302, 1
      %p306 = scmp.eq.s32.totalorder %s74, 1
      %p307 = scmp.ne.s32.totalorder %s302, %s304
      %p308 = scmp.eq.s32.totalorder %s74, 0
      %p309 = por %p307, %p308
      %p310 = scmp.ne.s32.totalorder %s302, %s304
      %p311 = scmp.eq.s32.totalorder %s79, 1
      %p312 = por %p310, %p311
      %p313 = scmp.ne.s32.totalorder %s304, %s305
      %p314 = scmp.eq.s32.totalorder %s79, 0
      %p315 = por %p313, %p314
      %p316 = scmp.ne.s32.totalorder %s304, %s305
      %p317 = scmp.eq.s32.totalorder %s80, 1
      %p318 = por %p316, %p317
      %p320 = scmp.ne.s32.totalorder %s305, %s319
      %p321 = scmp.eq.s32.totalorder %s80, 0
      %p322 = por %p320, %p321
      %s324 = sadd.s32 %s323, 1
      %p327 = scmp.eq.s32.totalorder %s74, 1
      %p328 = scmp.ne.s32.totalorder %s323, %s325
      %p329 = scmp.eq.s32.totalorder %s74, 0
      %p330 = por %p328, %p329
      %p331 = scmp.ne.s32.totalorder %s323, %s325
      %p332 = scmp.eq.s32.totalorder %s79, 1
      %p333 = por %p331, %p332
      %p334 = scmp.ne.s32.totalorder %s325, %s326
      %p335 = scmp.eq.s32.totalorder %s79, 0
      %p336 = por %p334, %p335
      %p337 = scmp.ne.s32.totalorder %s325, %s326
      %p338 = scmp.eq.s32.totalorder %s80, 1
      %p339 = por %p337, %p338
      %p341 = scmp.ne.s32.totalorder %s326, %s340
      %p342 = scmp.eq.s32.totalorder %s80, 0
      %p343 = por %p341, %p342
      %s345 = sadd.s32 %s344, 1
      %p348 = scmp.eq.s32.totalorder %s74, 1
      %p349 = scmp.ne.s32.totalorder %s344, %s346
      %p350 = scmp.eq.s32.totalorder %s74, 0
      %p351 = por %p349, %p350
      %p352 = scmp.ne.s32.totalorder %s344, %s346
      %p353 = scmp.eq.s32.totalorder %s79, 1
      %p354 = por %p352, %p353
      %p355 = scmp.ne.s32.totalorder %s346, %s347
      %p356 = scmp.eq.s32.totalorder %s79, 0
      %p357 = por %p355, %p356
      %p358 = scmp.ne.s32.totalorder %s346, %s347
      %p359 = scmp.eq.s32.totalorder %s80, 1
      %p360 = por %p358, %p359
      %p362 = scmp.ne.s32.totalorder %s347, %s361
      %p363 = scmp.eq.s32.totalorder %s80, 0
      %p364 = por %p362, %p363
      %s366 = sadd.s32 %s365, 1
      %p369 = scmp.eq.s32.totalorder %s74, 1
      %p370 = scmp.ne.s32.totalorder %s365, %s367
      %p371 = scmp.eq.s32.totalorder %s74, 0
      %p372 = por %p370, %p371
      %p373 = scmp.ne.s32.totalorder %s365, %s367
      %p374 = scmp.eq.s32.totalorder %s79, 1
      %p375 = por %p373, %p374
      %p376 = scmp.ne.s32.totalorder %s367, %s368
      %p377 = scmp.eq.s32.totalorder %s79, 0
      %p378 = por %p376, %p377
      %p379 = scmp.ne.s32.totalorder %s367, %s368
      %p380 = scmp.eq.s32.totalorder %s80, 1
      %p381 = por %p379, %p380
      %p383 = scmp.ne.s32.totalorder %s368, %s382
      %p384 = scmp.eq.s32.totalorder %s80, 0
      %p385 = por %p383, %p384
      %s387 = sadd.s32 %s386, 1
      %p390 = scmp.eq.s32.totalorder %s74, 1
      %p391 = scmp.ne.s32.totalorder %s386, %s388
      %p392 = scmp.eq.s32.totalorder %s74, 0
      %p393 = por %p391, %p392
      %p394 = scmp.ne.s32.totalorder %s386, %s388
      %p395 = scmp.eq.s32.totalorder %s79, 1
      %p396 = por %p394, %p395
      %p397 = scmp.ne.s32.totalorder %s388, %s389
      %p398 = scmp.eq.s32.totalorder %s79, 0
      %p399 = por %p397, %p398
      %p400 = scmp.ne.s32.totalorder %s388, %s389
      %p401 = scmp.eq.s32.totalorder %s80, 1
      %p402 = por %p400, %p401
      %p404 = scmp.ne.s32.totalorder %s389, %s403
      %p405 = scmp.eq.s32.totalorder %s80, 0
      %p406 = por %p404, %p405
      %s408 = sadd.s32 %s407, 1
      %p411 = scmp.eq.s32.totalorder %s74, 1
      %p412 = scmp.ne.s32.totalorder %s407, %s409
      %p413 = scmp.eq.s32.totalorder %s74, 0
      %p414 = por %p412, %p413
      %p415 = scmp.ne.s32.totalorder %s407, %s409
      %p416 = scmp.eq.s32.totalorder %s79, 1
      %p417 = por %p415, %p416
      %p418 = scmp.ne.s32.totalorder %s409, %s410
      %p419 = scmp.eq.s32.totalorder %s79, 0
      %p420 = por %p418, %p419
      %p421 = scmp.ne.s32.totalorder %s409, %s410
      %p422 = scmp.eq.s32.totalorder %s80, 1
      %p423 = por %p421, %p422
      %p425 = scmp.ne.s32.totalorder %s410, %s424
      %p426 = scmp.eq.s32.totalorder %s80, 0
      %p427 = por %p425, %p426
      %s429 = sadd.s32 %s428, 1
      %p432 = scmp.eq.s32.totalorder %s74, 1
      %p433 = scmp.ne.s32.totalorder %s428, %s430
      %p434 = scmp.eq.s32.totalorder %s74, 0
      %p435 = por %p433, %p434
      %p436 = scmp.ne.s32.totalorder %s428, %s430
      %p437 = scmp.eq.s32.totalorder %s79, 1
      %p438 = por %p436, %p437
      %p439 = scmp.ne.s32.totalorder %s430, %s431
      %p440 = scmp.eq.s32.totalorder %s79, 0
      %p441 = por %p439, %p440
      %p442 = scmp.ne.s32.totalorder %s430, %s431
      %p443 = scmp.eq.s32.totalorder %s80, 1
      %p444 = por %p442, %p443
      %p446 = scmp.ne.s32.totalorder %s431, %s445
      %p447 = scmp.eq.s32.totalorder %s80, 0
      %p448 = por %p446, %p447
      %s450 = sadd.s32 %s449, 1
      %p453 = scmp.eq.s32.totalorder %s74, 1
      %p454 = scmp.ne.s32.totalorder %s449, %s451
      %p455 = scmp.eq.s32.totalorder %s74, 0
      %p456 = por %p454, %p455
      %p457 = scmp.ne.s32.totalorder %s449, %s451
      %p458 = scmp.eq.s32.totalorder %s79, 1
      %p459 = por %p457, %p458
      %p460 = scmp.ne.s32.totalorder %s451, %s452
      %p461 = scmp.eq.s32.totalorder %s79, 0
      %p462 = por %p460, %p461
      %p463 = scmp.ne.s32.totalorder %s451, %s452
      %p464 = scmp.eq.s32.totalorder %s80, 1
      %p465 = por %p463, %p464
      %p467 = scmp.ne.s32.totalorder %s452, %s466
      %p468 = scmp.eq.s32.totalorder %s80, 0
      %p469 = por %p467, %p468
      %s471 = sadd.s32 %s470, 1
      %p474 = scmp.eq.s32.totalorder %s74, 1
      %p475 = scmp.ne.s32.totalorder %s470, %s472
      %p476 = scmp.eq.s32.totalorder %s74, 0
      %p477 = por %p475, %p476
      %p478 = scmp.ne.s32.totalorder %s470, %s472
      %p479 = scmp.eq.s32.totalorder %s79, 1
      %p480 = por %p478, %p479
      %p481 = scmp.ne.s32.totalorder %s472, %s473
      %p482 = scmp.eq.s32.totalorder %s79, 0
      %p483 = por %p481, %p482
      %p484 = scmp.ne.s32.totalorder %s472, %s473
      %p485 = scmp.eq.s32.totalorder %s80, 1
      %p486 = por %p484, %p485
      %p488 = scmp.ne.s32.totalorder %s473, %s487
      %p489 = scmp.eq.s32.totalorder %s80, 0
      %p490 = por %p488, %p489
      %s492 = sadd.s32 %s491, 1
      %p495 = scmp.eq.s32.totalorder %s74, 1
      %p496 = scmp.ne.s32.totalorder %s491, %s493
      %p497 = scmp.eq.s32.totalorder %s74, 0
      %p498 = por %p496, %p497
      %p499 = scmp.ne.s32.totalorder %s491, %s493
      %p500 = scmp.eq.s32.totalorder %s79, 1
      %p501 = por %p499, %p500
      %p502 = scmp.ne.s32.totalorder %s493, %s494
      %p503 = scmp.eq.s32.totalorder %s79, 0
      %p504 = por %p502, %p503
      %p505 = scmp.ne.s32.totalorder %s493, %s494
      %p506 = scmp.eq.s32.totalorder %s80, 1
      %p507 = por %p505, %p506
      %p509 = scmp.ne.s32.totalorder %s494, %s508
      %p510 = scmp.eq.s32.totalorder %s80, 0
      %p511 = por %p509, %p510
      %s513 = sadd.s32 %s512, 1
      %p516 = scmp.eq.s32.totalorder %s74, 1
      %p517 = scmp.ne.s32.totalorder %s512, %s514
      %p518 = scmp.eq.s32.totalorder %s74, 0
      %p519 = por %p517, %p518
      %p520 = scmp.ne.s32.totalorder %s512, %s514
      %p521 = scmp.eq.s32.totalorder %s79, 1
      %p522 = por %p520, %p521
      %p523 = scmp.ne.s32.totalorder %s514, %s515
      %p524 = scmp.eq.s32.totalorder %s79, 0
      %p525 = por %p523, %p524
      %p526 = scmp.ne.s32.totalorder %s514, %s515
      %p527 = scmp.eq.s32.totalorder %s80, 1
      %p528 = por %p526, %p527
      %p530 = scmp.ne.s32.totalorder %s515, %s529
      %p531 = scmp.eq.s32.totalorder %s80, 0
      %p532 = por %p530, %p531
      %s534 = sadd.s32 %s533, 1
      %p537 = scmp.eq.s32.totalorder %s74, 1
      %p538 = scmp.ne.s32.totalorder %s533, %s535
      %p539 = scmp.eq.s32.totalorder %s74, 0
      %p540 = por %p538, %p539
      %p541 = scmp.ne.s32.totalorder %s533, %s535
      %p542 = scmp.eq.s32.totalorder %s79, 1
      %p543 = por %p541, %p542
      %p544 = scmp.ne.s32.totalorder %s535, %s536
      %p545 = scmp.eq.s32.totalorder %s79, 0
      %p546 = por %p544, %p545
      %p547 = scmp.ne.s32.totalorder %s535, %s536
      %p548 = scmp.eq.s32.totalorder %s80, 1
      %p549 = por %p547, %p548
      %p551 = scmp.ne.s32.totalorder %s536, %s550
      %p552 = scmp.eq.s32.totalorder %s80, 0
      %p553 = por %p551, %p552
      %s555 = sadd.s32 %s554, 1
      %p558 = scmp.eq.s32.totalorder %s74, 1
      %p559 = scmp.ne.s32.totalorder %s554, %s556
      %p560 = scmp.eq.s32.totalorder %s74, 0
      %p561 = por %p559, %p560
      %p562 = scmp.ne.s32.totalorder %s554, %s556
      %p563 = scmp.eq.s32.totalorder %s79, 1
      %p564 = por %p562, %p563
      %p565 = scmp.ne.s32.totalorder %s556, %s557
      %p566 = scmp.eq.s32.totalorder %s79, 0
      %p567 = por %p565, %p566
      %p568 = scmp.ne.s32.totalorder %s556, %s557
      %p569 = scmp.eq.s32.totalorder %s80, 1
      %p570 = por %p568, %p569
      %p572 = scmp.ne.s32.totalorder %s557, %s571
      %p573 = scmp.eq.s32.totalorder %s80, 0
      %p574 = por %p572, %p573
      %s576 = sadd.s32 %s575, 1
      %p579 = scmp.eq.s32.totalorder %s74, 1
      %p580 = scmp.ne.s32.totalorder %s575, %s577
      %p581 = scmp.eq.s32.totalorder %s74, 0
      %p582 = por %p580, %p581
      %p583 = scmp.ne.s32.totalorder %s575, %s577
      %p584 = scmp.eq.s32.totalorder %s79, 1
      %p585 = por %p583, %p584
      %p586 = scmp.ne.s32.totalorder %s577, %s578
      %p587 = scmp.eq.s32.totalorder %s79, 0
      %p588 = por %p586, %p587
      %p589 = scmp.ne.s32.totalorder %s577, %s578
      %p590 = scmp.eq.s32.totalorder %s80, 1
      %p591 = por %p589, %p590
      %p593 = scmp.ne.s32.totalorder %s578, %s592
      %p594 = scmp.eq.s32.totalorder %s80, 0
      %p595 = por %p593, %p594
      %s597 = sadd.s32 %s596, 1
      %p600 = scmp.eq.s32.totalorder %s74, 1
      %p601 = scmp.ne.s32.totalorder %s596, %s598
      %p602 = scmp.eq.s32.totalorder %s74, 0
      %p603 = por %p601, %p602
      %p604 = scmp.ne.s32.totalorder %s596, %s598
      %p605 = scmp.eq.s32.totalorder %s79, 1
      %p606 = por %p604, %p605
      %p607 = scmp.ne.s32.totalorder %s598, %s599
      %p608 = scmp.eq.s32.totalorder %s79, 0
      %p609 = por %p607, %p608
      %p610 = scmp.ne.s32.totalorder %s598, %s599
      %p611 = scmp.eq.s32.totalorder %s80, 1
      %p612 = por %p610, %p611
      %p614 = scmp.ne.s32.totalorder %s599, %s613
      %p615 = scmp.eq.s32.totalorder %s80, 0
      %p616 = por %p614, %p615
      %s618 = sadd.s32 %s617, 1
      %p621 = scmp.eq.s32.totalorder %s74, 1
      %p622 = scmp.ne.s32.totalorder %s617, %s619
      %p623 = scmp.eq.s32.totalorder %s74, 0
      %p624 = por %p622, %p623
      %p625 = scmp.ne.s32.totalorder %s617, %s619
      %p626 = scmp.eq.s32.totalorder %s79, 1
      %p627 = por %p625, %p626
      %p628 = scmp.ne.s32.totalorder %s619, %s620
      %p629 = scmp.eq.s32.totalorder %s79, 0
      %p630 = por %p628, %p629
      %p631 = scmp.ne.s32.totalorder %s619, %s620
      %p632 = scmp.eq.s32.totalorder %s80, 1
      %p633 = por %p631, %p632
      %p635 = scmp.ne.s32.totalorder %s620, %s634
      %p636 = scmp.eq.s32.totalorder %s80, 0
      %p637 = por %p635, %p636
      %s639 = sadd.s32 %s638, 1
      %p642 = scmp.eq.s32.totalorder %s74, 1
      %p643 = scmp.ne.s32.totalorder %s638, %s640
      %p644 = scmp.eq.s32.totalorder %s74, 0
      %p645 = por %p643, %p644
      %p646 = scmp.ne.s32.totalorder %s638, %s640
      %p647 = scmp.eq.s32.totalorder %s79, 1
      %p648 = por %p646, %p647
      %p649 = scmp.ne.s32.totalorder %s640, %s641
      %p650 = scmp.eq.s32.totalorder %s79, 0
      %p651 = por %p649, %p650
      %p652 = scmp.ne.s32.totalorder %s640, %s641
      %p653 = scmp.eq.s32.totalorder %s80, 1
      %p654 = por %p652, %p653
      %p656 = scmp.ne.s32.totalorder %s641, %s655
      %p657 = scmp.eq.s32.totalorder %s80, 0
      %p658 = por %p656, %p657
      %s660 = sadd.s32 %s659, 1
      %p663 = scmp.eq.s32.totalorder %s74, 1
      %p664 = scmp.ne.s32.totalorder %s659, %s661
      %p665 = scmp.eq.s32.totalorder %s74, 0
      %p666 = por %p664, %p665
      %p667 = scmp.ne.s32.totalorder %s659, %s661
      %p668 = scmp.eq.s32.totalorder %s79, 1
      %p669 = por %p667, %p668
      %p670 = scmp.ne.s32.totalorder %s661, %s662
      %p671 = scmp.eq.s32.totalorder %s79, 0
      %p672 = por %p670, %p671
      %p673 = scmp.ne.s32.totalorder %s661, %s662
      %p674 = scmp.eq.s32.totalorder %s80, 1
      %p675 = por %p673, %p674
      %p677 = scmp.ne.s32.totalorder %s662, %s676
      %p678 = scmp.eq.s32.totalorder %s80, 0
      %p679 = por %p677, %p678
      %s680 = ssub.s32 %s74, %s81
      %p681 = scmp.eq.s32.totalorder %s680, 0
      %s683 = sadd.s32 %s682, 1
      %s684 = scalar_select %p681, %s682, %s683
      %p687 = pneg %p681
      %p688 = scmp.eq.s32.totalorder %s74, 1
      %p689 = por %p687, %p688
      %p690 = scmp.ne.s32.totalorder %s682, %s685
      %p691 = scmp.eq.s32.totalorder %s74, 0
      %p692 = por %p690, %p691
      %p693 = scmp.ne.s32.totalorder %s682, %s685
      %p694 = scmp.eq.s32.totalorder %s79, 1
      %p695 = por %p693, %p694
      %p696 = scmp.ne.s32.totalorder %s685, %s686
      %p697 = scmp.eq.s32.totalorder %s79, 0
      %p698 = por %p696, %p697
      %p699 = scmp.ne.s32.totalorder %s685, %s686
      %p700 = scmp.eq.s32.totalorder %s80, 1
      %p701 = por %p699, %p700
      %p703 = scmp.ne.s32.totalorder %s686, %s702
      %p704 = scmp.eq.s32.totalorder %s80, 0
      %p705 = por %p703, %p704
      %s706 = ssub.s32 %s74, %s81
      %p707 = scmp.eq.s32.totalorder %s706, 0
      %s709 = sadd.s32 %s708, 1
      %s710 = scalar_select %p707, %s708, %s709
      %p713 = pneg %p707
      %p714 = scmp.eq.s32.totalorder %s74, 1
      %p715 = por %p713, %p714
      %p716 = scmp.ne.s32.totalorder %s708, %s711
      %p717 = scmp.eq.s32.totalorder %s74, 0
      %p718 = por %p716, %p717
      %p719 = scmp.ne.s32.totalorder %s708, %s711
      %p720 = scmp.eq.s32.totalorder %s79, 1
      %p721 = por %p719, %p720
      %p722 = scmp.ne.s32.totalorder %s711, %s712
      %p723 = scmp.eq.s32.totalorder %s79, 0
      %p724 = por %p722, %p723
      %p725 = scmp.ne.s32.totalorder %s711, %s712
      %p726 = scmp.eq.s32.totalorder %s80, 1
      %p727 = por %p725, %p726
      %p729 = scmp.ne.s32.totalorder %s712, %s728
      %p730 = scmp.eq.s32.totalorder %s80, 0
      %p731 = por %p729, %p730
      %s732 = ssub.s32 %s74, %s81
      %p733 = scmp.eq.s32.totalorder %s732, 0
      %s735 = sadd.s32 %s734, 1
      %s736 = scalar_select %p733, %s734, %s735
      %p739 = pneg %p733
      %p740 = scmp.eq.s32.totalorder %s74, 1
      %p741 = por %p739, %p740
      %p742 = scmp.ne.s32.totalorder %s734, %s737
      %p743 = scmp.eq.s32.totalorder %s74, 0
      %p744 = por %p742, %p743
      %p745 = scmp.ne.s32.totalorder %s734, %s737
      %p746 = scmp.eq.s32.totalorder %s79, 1
      %p747 = por %p745, %p746
      %p748 = scmp.ne.s32.totalorder %s737, %s738
      %p749 = scmp.eq.s32.totalorder %s79, 0
      %p750 = por %p748, %p749
      %p751 = scmp.ne.s32.totalorder %s737, %s738
      %p752 = scmp.eq.s32.totalorder %s80, 1
      %p753 = por %p751, %p752
      %p755 = scmp.ne.s32.totalorder %s738, %s754
      %p756 = scmp.eq.s32.totalorder %s80, 0
      %p757 = por %p755, %p756
      %p758 = scmp.le.s32.totalorder 1, %s74
      %p759 = scmp.lt.s32.totalorder %s74, 3
      %p760 = pnand %p758, %p759
      %p761 = pneg %p760
      // Predicated region
      $region9: #{tpu_custom_call.1} parent=5 // pred_check
        _
      $region10: #{tpu_custom_call.1} parent=5 // pred_check_branch
        %763 = sbr.rel (%p760) target = $region12
      $region11: #{tpu_custom_call.1} parent=5 // pred_region
        %s764 = ssub.s32 %s74, 1
        // Predicated region
        $region13: #{tpu_custom_call.1} parent=11 // pred_check
          %p765 = pneg %p147
        $region14: #{tpu_custom_call.1} parent=11 // pred_check_branch
          %767 = sbr.rel (%p765) target = $region16
        $region15: #{tpu_custom_call.1} parent=11 // pred_region
          _
        $region16: #{tpu_custom_call.1} parent=11 // pred_fallthru
          _
        // Predicated region
        $region17: #{tpu_custom_call.1} parent=11 // pred_check
          %p768 = pneg %p168
        $region18: #{tpu_custom_call.1} parent=11 // pred_check_branch
          %770 = sbr.rel (%p768) target = $region20
        $region19: #{tpu_custom_call.1} parent=11 // pred_region
          _
        $region20: #{tpu_custom_call.1} parent=11 // pred_fallthru
          _
        // Predicated region
        $region21: #{tpu_custom_call.1} parent=11 // pred_check
          %p771 = pneg %p189
        $region22: #{tpu_custom_call.1} parent=11 // pred_check_branch
          %773 = sbr.rel (%p771) target = $region24
        $region23: #{tpu_custom_call.1} parent=11 // pred_region
          _
        $region24: #{tpu_custom_call.1} parent=11 // pred_fallthru
          _
        // Predicated region
        $region25: #{tpu_custom_call.1} parent=11 // pred_check
          %p774 = pneg %p210
        $region26: #{tpu_custom_call.1} parent=11 // pred_check_branch
          %776 = sbr.rel (%p774) target = $region28
        $region27: #{tpu_custom_call.1} parent=11 // pred_region
          _
        $region28: #{tpu_custom_call.1} parent=11 // pred_fallthru
          _
        // Predicated region
        $region29: #{tpu_custom_call.1} parent=11 // pred_check
          %p777 = pneg %p231
        $region30: #{tpu_custom_call.1} parent=11 // pred_check_branch
          %779 = sbr.rel (%p777) target = $region32
        $region31: #{tpu_custom_call.1} parent=11 // pred_region
          _
        $region32: #{tpu_custom_call.1} parent=11 // pred_fallthru
          _
        // Predicated region
        $region33: #{tpu_custom_call.1} parent=11 // pred_check
          %p780 = pneg %p252
        $region34: #{tpu_custom_call.1} parent=11 // pred_check_branch
          %782 = sbr.rel (%p780) target = $region36
        $region35: #{tpu_custom_call.1} parent=11 // pred_region
          _
        $region36: #{tpu_custom_call.1} parent=11 // pred_fallthru
          _
        // Predicated region
        $region37: #{tpu_custom_call.1} parent=11 // pred_check
          %p783 = pneg %p273
        $region38: #{tpu_custom_call.1} parent=11 // pred_check_branch
          %785 = sbr.rel (%p783) target = $region40
        $region39: #{tpu_custom_call.1} parent=11 // pred_region
          _
        $region40: #{tpu_custom_call.1} parent=11 // pred_fallthru
          _
        // Predicated region
        $region41: #{tpu_custom_call.1} parent=11 // pred_check
          %p786 = pneg %p294
        $region42: #{tpu_custom_call.1} parent=11 // pred_check_branch
          %788 = sbr.rel (%p786) target = $region44
        $region43: #{tpu_custom_call.1} parent=11 // pred_region
          _
        $region44: #{tpu_custom_call.1} parent=11 // pred_fallthru
          _
        // Predicated region
        $region45: #{tpu_custom_call.1} parent=11 // pred_check
          %p789 = pneg %p315
        $region46: #{tpu_custom_call.1} parent=11 // pred_check_branch
          %791 = sbr.rel (%p789) target = $region48
        $region47: #{tpu_custom_call.1} parent=11 // pred_region
          _
        $region48: #{tpu_custom_call.1} parent=11 // pred_fallthru
          _
        // Predicated region
        $region49: #{tpu_custom_call.1} parent=11 // pred_check
          %p792 = pneg %p336
        $region50: #{tpu_custom_call.1} parent=11 // pred_check_branch
          %794 = sbr.rel (%p792) target = $region52
        $region51: #{tpu_custom_call.1} parent=11 // pred_region
          _
        $region52: #{tpu_custom_call.1} parent=11 // pred_fallthru
          _
        // Predicated region
        $region53: #{tpu_custom_call.1} parent=11 // pred_check
          %p795 = pneg %p357
        $region54: #{tpu_custom_call.1} parent=11 // pred_check_branch
          %797 = sbr.rel (%p795) target = $region56
        $region55: #{tpu_custom_call.1} parent=11 // pred_region
          _
        $region56: #{tpu_custom_call.1} parent=11 // pred_fallthru
          _
        // Predicated region
        $region57: #{tpu_custom_call.1} parent=11 // pred_check
          %p798 = pneg %p378
        $region58: #{tpu_custom_call.1} parent=11 // pred_check_branch
          %800 = sbr.rel (%p798) target = $region60
        $region59: #{tpu_custom_call.1} parent=11 // pred_region
          _
        $region60: #{tpu_custom_call.1} parent=11 // pred_fallthru
          _
        // Predicated region
        $region61: #{tpu_custom_call.1} parent=11 // pred_check
          %p801 = pneg %p399
        $region62: #{tpu_custom_call.1} parent=11 // pred_check_branch
          %803 = sbr.rel (%p801) target = $region64
        $region63: #{tpu_custom_call.1} parent=11 // pred_region
          _
        $region64: #{tpu_custom_call.1} parent=11 // pred_fallthru
          _
        // Predicated region
        $region65: #{tpu_custom_call.1} parent=11 // pred_check
          %p804 = pneg %p420
        $region66: #{tpu_custom_call.1} parent=11 // pred_check_branch
          %806 = sbr.rel (%p804) target = $region68
        $region67: #{tpu_custom_call.1} parent=11 // pred_region
          _
        $region68: #{tpu_custom_call.1} parent=11 // pred_fallthru
          _
        // Predicated region
        $region69: #{tpu_custom_call.1} parent=11 // pred_check
          %p807 = pneg %p441
        $region70: #{tpu_custom_call.1} parent=11 // pred_check_branch
          %809 = sbr.rel (%p807) target = $region72
        $region71: #{tpu_custom_call.1} parent=11 // pred_region
          _
        $region72: #{tpu_custom_call.1} parent=11 // pred_fallthru
          _
        // Predicated region
        $region73: #{tpu_custom_call.1} parent=11 // pred_check
          %p810 = pneg %p462
        $region74: #{tpu_custom_call.1} parent=11 // pred_check_branch
          %812 = sbr.rel (%p810) target = $region76
        $region75: #{tpu_custom_call.1} parent=11 // pred_region
          _
        $region76: #{tpu_custom_call.1} parent=11 // pred_fallthru
          _
        // Predicated region
        $region77: #{tpu_custom_call.1} parent=11 // pred_check
          %p813 = pneg %p483
        $region78: #{tpu_custom_call.1} parent=11 // pred_check_branch
          %815 = sbr.rel (%p813) target = $region80
        $region79: #{tpu_custom_call.1} parent=11 // pred_region
          _
        $region80: #{tpu_custom_call.1} parent=11 // pred_fallthru
          _
        // Predicated region
        $region81: #{tpu_custom_call.1} parent=11 // pred_check
          %p816 = pneg %p504
        $region82: #{tpu_custom_call.1} parent=11 // pred_check_branch
          %818 = sbr.rel (%p816) target = $region84
        $region83: #{tpu_custom_call.1} parent=11 // pred_region
          _
        $region84: #{tpu_custom_call.1} parent=11 // pred_fallthru
          _
        // Predicated region
        $region85: #{tpu_custom_call.1} parent=11 // pred_check
          %p819 = pneg %p525
        $region86: #{tpu_custom_call.1} parent=11 // pred_check_branch
          %821 = sbr.rel (%p819) target = $region88
        $region87: #{tpu_custom_call.1} parent=11 // pred_region
          _
        $region88: #{tpu_custom_call.1} parent=11 // pred_fallthru
          _
        // Predicated region
        $region89: #{tpu_custom_call.1} parent=11 // pred_check
          %p822 = pneg %p546
        $region90: #{tpu_custom_call.1} parent=11 // pred_check_branch
          %824 = sbr.rel (%p822) target = $region92
        $region91: #{tpu_custom_call.1} parent=11 // pred_region
          _
        $region92: #{tpu_custom_call.1} parent=11 // pred_fallthru
          _
        // Predicated region
        $region93: #{tpu_custom_call.1} parent=11 // pred_check
          %p825 = pneg %p567
        $region94: #{tpu_custom_call.1} parent=11 // pred_check_branch
          %827 = sbr.rel (%p825) target = $region96
        $region95: #{tpu_custom_call.1} parent=11 // pred_region
          _
        $region96: #{tpu_custom_call.1} parent=11 // pred_fallthru
          _
        // Predicated region
        $region97: #{tpu_custom_call.1} parent=11 // pred_check
          %p828 = pneg %p588
        $region98: #{tpu_custom_call.1} parent=11 // pred_check_branch
          %830 = sbr.rel (%p828) target = $region100
        $region99: #{tpu_custom_call.1} parent=11 // pred_region
          _
        $region100: #{tpu_custom_call.1} parent=11 // pred_fallthru
          _
        // Predicated region
        $region101: #{tpu_custom_call.1} parent=11 // pred_check
          %p831 = pneg %p609
        $region102: #{tpu_custom_call.1} parent=11 // pred_check_branch
          %833 = sbr.rel (%p831) target = $region104
        $region103: #{tpu_custom_call.1} parent=11 // pred_region
          _
        $region104: #{tpu_custom_call.1} parent=11 // pred_fallthru
          _
        // Predicated region
        $region105: #{tpu_custom_call.1} parent=11 // pred_check
          %p834 = pneg %p630
        $region106: #{tpu_custom_call.1} parent=11 // pred_check_branch
          %836 = sbr.rel (%p834) target = $region108
        $region107: #{tpu_custom_call.1} parent=11 // pred_region
          _
        $region108: #{tpu_custom_call.1} parent=11 // pred_fallthru
          _
        // Predicated region
        $region109: #{tpu_custom_call.1} parent=11 // pred_check
          %p837 = pneg %p651
        $region110: #{tpu_custom_call.1} parent=11 // pred_check_branch
          %839 = sbr.rel (%p837) target = $region112
        $region111: #{tpu_custom_call.1} parent=11 // pred_region
          _
        $region112: #{tpu_custom_call.1} parent=11 // pred_fallthru
          _
        // Predicated region
        $region113: #{tpu_custom_call.1} parent=11 // pred_check
          %p840 = pneg %p672
        $region114: #{tpu_custom_call.1} parent=11 // pred_check_branch
          %842 = sbr.rel (%p840) target = $region116
        $region115: #{tpu_custom_call.1} parent=11 // pred_region
          _
        $region116: #{tpu_custom_call.1} parent=11 // pred_fallthru
          _
      $region12: #{tpu_custom_call.1} parent=5 // pred_fallthru
        _
      %p843 = scmp.lt.s32.totalorder %s74, 2
      // Predicated region
      $region117: #{tpu_custom_call.1} parent=5 // pred_check
        %p844 = pneg %p843
      $region118: #{tpu_custom_call.1} parent=5 // pred_check_branch
        %846 = sbr.rel (%p844) target = $region120
      $region119: #{tpu_custom_call.1} parent=5 // pred_region
        // Predicated region
        $region121: #{tpu_custom_call.1} parent=119 // pred_check
          %p847 = pneg %p94
        $region122: #{tpu_custom_call.1} parent=119 // pred_check_branch
          %849 = sbr.rel (%p847) target = $region124
        $region123: #{tpu_custom_call.1} parent=119 // pred_region
          %p850 = scmp.lt.s32.totalorder %s74, 1
          %s851 = scalar_select %p850, %s74, 1
          %s852 = smul.addr %s851, 8
          %s853 = scalar_lea.vmem %s1, %s852
        $region124: #{tpu_custom_call.1} parent=119 // pred_fallthru
          _
        // Predicated region
        $region125: #{tpu_custom_call.1} parent=119 // pred_check
          %p854 = pneg %p120
        $region126: #{tpu_custom_call.1} parent=119 // pred_check_branch
          %856 = sbr.rel (%p854) target = $region128
        $region127: #{tpu_custom_call.1} parent=119 // pred_region
          %p857 = scmp.lt.s32.totalorder %s74, 1
          %s858 = scalar_select %p857, %s74, 1
          %s859 = smul.addr %s858, 8
          %s860 = scalar_lea.vmem %s3, %s859
        $region128: #{tpu_custom_call.1} parent=119 // pred_fallthru
          _
      $region120: #{tpu_custom_call.1} parent=5 // pred_fallthru
        _
      %p861 = scmp.le.s32.totalorder 1, %s74
      %p862 = scmp.lt.s32.totalorder %s74, 3
      %p863 = pnand %p861, %p862
      %p864 = pneg %p863
      // Predicated region
      $region129: #{tpu_custom_call.1} parent=5 // pred_check
        _
      $region130: #{tpu_custom_call.1} parent=5 // pred_check_branch
        %866 = sbr.rel (%p863) target = $region132
      $region131: #{tpu_custom_call.1} parent=5 // pred_region
        %s867 = ssub.s32 %s74, 1
        %p868 = scmp.lt.s32.totalorder %s79, 1
        %s869 = scalar_select %p868, %s79, 1
        %s870 = smul.addr %s869, 8
        %s871 = scalar_lea.vmem %s1, %s870
        %p872 = pneg %p100
        %p873 = pneg %p97
        %p874 = scmp.lt.s32.totalorder %s79, 1
        %s875 = scalar_select %p874, %s79, 1
        %s876 = smul.addr %s875, 8
        %s877 = scalar_lea.vmem %s3, %s876
        %p878 = pneg %p126
        %p879 = pneg %p123
        %p880 = pneg %p147
        %p881 = pneg %p144
        %p882 = pneg %p168
        %p883 = pneg %p165
        %p884 = pneg %p189
        %p885 = pneg %p186
        %p886 = pneg %p210
        %p887 = pneg %p207
        %p888 = pneg %p231
        %p889 = pneg %p228
        %p890 = pneg %p252
        %p891 = pneg %p249
        %p892 = pneg %p273
        %p893 = pneg %p270
        %p894 = pneg %p294
        %p895 = pneg %p291
        %p896 = pneg %p315
        %p897 = pneg %p312
        %p898 = pneg %p336
        %p899 = pneg %p333
        %p900 = pneg %p357
        %p901 = pneg %p354
        %p902 = pneg %p378
        %p903 = pneg %p375
        %p904 = pneg %p399
        %p905 = pneg %p396
        %p906 = pneg %p420
        %p907 = pneg %p417
        %p908 = pneg %p441
        %p909 = pneg %p438
        %p910 = pneg %p462
        %p911 = pneg %p459
        %p912 = pneg %p483
        %p913 = pneg %p480
        %p914 = pneg %p504
        %p915 = pneg %p501
        %p916 = pneg %p525
        %p917 = pneg %p522
        %p918 = pneg %p546
        %p919 = pneg %p543
        %p920 = pneg %p567
        %p921 = pneg %p564
        %p922 = pneg %p588
        %p923 = pneg %p585
        %p924 = pneg %p609
        %p925 = pneg %p606
        %p926 = pneg %p630
        %p927 = pneg %p627
        %p928 = pneg %p651
        %p929 = pneg %p648
        %p930 = pneg %p672
        %p931 = pneg %p669
        %p932 = pneg %p698
        %p933 = pneg %p695
        %s934 = sand.u32 %s685, 1
        %s935 = scalar_lea.sflag [#allocation3], %s934
        %s936 = sand.u32 %s685, 1
        %s937 = smul.addr %s936, 8
        %s938 = scalar_lea.vmem [#allocation2], %s937
        %p939 = pneg %p724
        %p940 = pneg %p721
        %s941 = sand.u32 %s79, 1
        %s942 = scalar_lea.sflag [#allocation5], %s941
        %s943 = sand.u32 %s711, 1
        %s944 = smul.addr %s943, 32
        %s945 = scalar_lea.vmem [#allocation4], %s944
        %p946 = pneg %p750
        %p947 = pneg %p747
        %s948 = sand.u32 %s79, 1
        %s949 = scalar_lea.sflag [#allocation5], %s948
        %s950 = sand.u32 %s737, 1
        %s951 = smul.addr %s950, 32
        %s952 = scalar_lea.vmem [#allocation6], %s951
        %p953 = scmp.lt.s32.totalorder %s79, 1
        %s954 = scalar_select %p953, %s79, 1
        %s955 = smul.addr %s954, 8
        %s956 = scalar_lea.vmem %s1, %s955
        %p957 = scmp.lt.s32.totalorder %s79, 1
        %s958 = scalar_select %p957, %s79, 1
        %s959 = smul.addr %s958, 8
        %s960 = scalar_lea.vmem %s3, %s959
        %v961 = vld [vmem:[%s956] sm:$0xff]
        %v962 = vld [vmem:[%s960] sm:$0xff]
        %v963 = vld [vmem:[%s5] sm:$0xff]
        %v964 = vld [vmem:[%s5 + $0x8] sm:$0xff]
        %v965 = vld [vmem:[%s5 + $0x10] sm:$0xff]
        %v966 = vld [vmem:[%s5 + $0x18] sm:$0xff]
        %v967 = vld [vmem:[%s5 + $0x20] sm:$0xff]
        %v968 = vld [vmem:[%s5 + $0x28] sm:$0xff]
        %v969 = vld [vmem:[%s5 + $0x30] sm:$0xff]
        %v970 = vld [vmem:[%s5 + $0x38] sm:$0xff]
        %v971 = vld [vmem:[%s5 + $0x40] sm:$0xff]
        %v972 = vld [vmem:[%s5 + $0x48] sm:$0xff]
        %v973 = vld [vmem:[%s5 + $0x50] sm:$0xff]
        %v974 = vld [vmem:[%s5 + $0x58] sm:$0xff]
        %v975 = vld [vmem:[%s5 + $0x60] sm:$0xff]
        %v976 = vld [vmem:[%s5 + $0x68] sm:$0xff]
        %v977 = vld [vmem:[%s5 + $0x70] sm:$0xff]
        %v978 = vld [vmem:[%s5 + $0x78] sm:$0xff]
        %v979 = vld [vmem:[%s7] sm:$0x1]
        %v980 = vld [vmem:[%s7 + $0x1] sm:$0x1]
        %v981 = vld [vmem:[%s7 + $0x2] sm:$0x1]
        %v982 = vld [vmem:[%s7 + $0x3] sm:$0x1]
        %v983 = vld [vmem:[%s9] sm:$0xff]
        %v984 = vld [vmem:[%s9 + $0x8] sm:$0xff]
        %v985 = vld [vmem:[%s9 + $0x10] sm:$0xff]
        %v986 = vld [vmem:[%s9 + $0x18] sm:$0xff]
        %v987 = vld [vmem:[%s9 + $0x20] sm:$0xff]
        %v988 = vld [vmem:[%s9 + $0x28] sm:$0xff]
        %v989 = vld [vmem:[%s9 + $0x30] sm:$0xff]
        %v990 = vld [vmem:[%s9 + $0x38] sm:$0xff]
        %v991 = vld [vmem:[%s9 + $0x40] sm:$0xff]
        %v992 = vld [vmem:[%s9 + $0x48] sm:$0xff]
        %v993 = vld [vmem:[%s9 + $0x50] sm:$0xff]
        %v994 = vld [vmem:[%s9 + $0x58] sm:$0xff]
        %v995 = vld [vmem:[%s9 + $0x60] sm:$0xff]
        %v996 = vld [vmem:[%s9 + $0x68] sm:$0xff]
        %v997 = vld [vmem:[%s9 + $0x70] sm:$0xff]
        %v998 = vld [vmem:[%s9 + $0x78] sm:$0xff]
        %v999 = vld [vmem:[%s11] sm:$0x1]
        %v1000 = vld [vmem:[%s11 + $0x1] sm:$0x1]
        %v1001 = vld [vmem:[%s11 + $0x2] sm:$0x1]
        %v1002 = vld [vmem:[%s11 + $0x3] sm:$0x1]
        %v1003 = vld [vmem:[%s13] sm:$0xff]
        %v1004 = vld [vmem:[%s13 + $0x8] sm:$0xff]
        %v1005 = vld [vmem:[%s13 + $0x10] sm:$0xff]
        %v1006 = vld [vmem:[%s13 + $0x18] sm:$0xff]
        %v1007 = vld [vmem:[%s13 + $0x20] sm:$0xff]
        %v1008 = vld [vmem:[%s13 + $0x28] sm:$0xff]
        %v1009 = vld [vmem:[%s13 + $0x30] sm:$0xff]
        %v1010 = vld [vmem:[%s13 + $0x38] sm:$0xff]
        %v1011 = vld [vmem:[%s13 + $0x40] sm:$0xff]
        %v1012 = vld [vmem:[%s13 + $0x48] sm:$0xff]
        %v1013 = vld [vmem:[%s13 + $0x50] sm:$0xff]
        %v1014 = vld [vmem:[%s13 + $0x58] sm:$0xff]
        %v1015 = vld [vmem:[%s13 + $0x60] sm:$0xff]
        %v1016 = vld [vmem:[%s13 + $0x68] sm:$0xff]
        %v1017 = vld [vmem:[%s13 + $0x70] sm:$0xff]
        %v1018 = vld [vmem:[%s13 + $0x78] sm:$0xff]
        %v1019 = vld [vmem:[%s15] sm:$0x1]
        %v1020 = vld [vmem:[%s15 + $0x1] sm:$0x1]
        %v1021 = vld [vmem:[%s15 + $0x2] sm:$0x1]
        %v1022 = vld [vmem:[%s15 + $0x3] sm:$0x1]
        %v1023 = vld [vmem:[%s17] sm:$0xff]
        %v1024 = vld [vmem:[%s17 + $0x8] sm:$0xff]
        %v1025 = vld [vmem:[%s17 + $0x10] sm:$0xff]
        %v1026 = vld [vmem:[%s17 + $0x18] sm:$0xff]
        %v1027 = vld [vmem:[%s19] sm:$0x1]
        %v1032 = vlaneseq
        %v1033 = vshrl.u32 %v1032, 7
        %v1034 = vsub.s32 0, %v1033
        %v1035 = vrot.slane %v979, %v1034
        %v1036 = vlaneseq
        %v1037 = vshrl.u32 %v1036, 7
        %v1038 = vsub.s32 0, %v1037
        %v1039 = vrot.slane %v980, %v1038
        %v1040 = vlaneseq
        %v1041 = vshrl.u32 %v1040, 7
        %v1042 = vsub.s32 0, %v1041
        %v1043 = vrot.slane %v981, %v1042
        %v1044 = vlaneseq
        %v1045 = vshrl.u32 %v1044, 7
        %v1046 = vsub.s32 0, %v1045
        %v1047 = vrot.slane %v982, %v1046
        %vm1052 = vcmask 261120
        %v1054 = vsel %vm1052, %v961, 0
        %1056 = vmatprep.subr.mxu0 0.0
        %1057 = vmatpush1.msra.mxu0 %v963
        %1058 = vmatprep.subr.mxu0 0.0
        %1059 = vmatpush1.msra.mxu0 %v964
        %1060 = vmatprep.subr.mxu0 0.0
        %1061 = vmatpush1.msra.mxu0 %v965
        %1062 = vmatprep.subr.mxu0 0.0
        %1063 = vmatpush1.msra.mxu0 %v966
        %1064 = vmatprep.subr.mxu0 0.0
        %1065 = vmatpush1.msra.mxu0 0.0
        %1066 = vmatprep.subr.mxu0 0.0
        %1067 = vmatpush1.msra.mxu0 0.0
        %1068 = vmatprep.subr.mxu0 0.0
        %1069 = vmatpush1.msra.mxu0 0.0
        %1070 = vmatprep.subr.mxu0 0.0
        %1071 = vmatpush1.msra.mxu0 0.0
        %1072 = vmatprep.subr.mxu0 0.0
        %1073 = vmatpush1.msra.mxu0 0.0
        %1074 = vmatprep.subr.mxu0 0.0
        %1075 = vmatpush1.msra.mxu0 0.0
        %1076 = vmatprep.subr.mxu0 0.0
        %1077 = vmatpush1.msra.mxu0 0.0
        %1078 = vmatprep.subr.mxu0 0.0
        %1079 = vmatpush1.msra.mxu0 0.0
        %1080 = vmatprep.subr.mxu0 0.0
        %1081 = vmatpush1.msra.mxu0 0.0
        %1082 = vmatprep.subr.mxu0 0.0
        %1083 = vmatpush1.msra.mxu0 0.0
        %1084 = vmatprep.subr.mxu0 0.0
        %1085 = vmatpush1.msra.mxu0 0.0
        %1086 = vmatprep.subr.mxu0 0.0
        %1087 = vmatpush1.msra.mxu0 0.0
        %1088 = vmatprep.subr.mxu0 0.0
        %1089 = vmatpush1.msra.mxu0 0.0
        %1090 = vmatprep.subr.mxu0 0.0
        %1091 = vmatpush1.msra.mxu0 0.0
        %1092 = vmatprep.subr.mxu0 0.0
        %1093 = vmatpush1.msra.mxu0 0.0
        %1094 = vmatprep.subr.mxu0 0.0
        %1095 = vmatpush1.msra.mxu0 0.0
        %1096 = vmatprep.subr.mxu0 0.0
        %1097 = vmatpush1.msra.mxu0 0.0
        %1098 = vmatprep.subr.mxu0 0.0
        %1099 = vmatpush1.msra.mxu0 0.0
        %1100 = vmatprep.subr.mxu0 0.0
        %1101 = vmatpush1.msra.mxu0 0.0
        %1102 = vmatprep.subr.mxu0 0.0
        %1103 = vmatpush1.msra.mxu0 0.0
        %1104 = vmatprep.subr.mxu0 0.0
        %1105 = vmatpush1.msra.mxu0 0.0
        %1106 = vmatprep.subr.mxu0 0.0
        %1107 = vmatpush1.msra.mxu0 0.0
        %1108 = vmatprep.subr.mxu0 0.0
        %1109 = vmatpush1.msra.mxu0 0.0
        %1110 = vmatprep.subr.mxu0 0.0
        %1111 = vmatpush1.msra.mxu0 0.0
        %1112 = vmatprep.subr.mxu0 0.0
        %1113 = vmatpush1.msra.mxu0 0.0
        %1114 = vmatprep.subr.mxu0 0.0
        %1115 = vmatpush1.msra.mxu0 0.0
        %1116 = vmatprep.subr.mxu0 0.0
        %1117 = vmatpush1.msra.mxu0 0.0
        %1118 = vmatprep.subr.mxu0 0.0
        %1119 = vmatpush1.msra.mxu0 0.0
        %1120 = vmatprep.mubr.f32.mxu0 0.0
        %1121 = vmatmul.mubr.f32.gmra.mrb[0].mxu0 %v1054
        %v1122 = vpop.f32.mrb[0].mxu0
        %v1123 = vadd.f32 %v1035, %v1122
        %v1124 = vpop.f32.mrb[0].mxu0
        %1125 = vdwg.mxu0
        %1126 = vmatprep.subr.mxu0 0.0
        %1127 = vmatpush1.msra.mxu0 %v967
        %1128 = vmatprep.subr.mxu0 0.0
        %1129 = vmatpush1.msra.mxu0 %v968
        %1130 = vmatprep.subr.mxu0 0.0
        %1131 = vmatpush1.msra.mxu0 %v969
        %1132 = vmatprep.subr.mxu0 0.0
        %1133 = vmatpush1.msra.mxu0 %v970
        %1134 = vmatprep.subr.mxu0 0.0
        %1135 = vmatpush1.msra.mxu0 0.0
        %1136 = vmatprep.subr.mxu0 0.0
        %1137 = vmatpush1.msra.mxu0 0.0
        %1138 = vmatprep.subr.mxu0 0.0
        %1139 = vmatpush1.msra.mxu0 0.0
        %1140 = vmatprep.subr.mxu0 0.0
        %1141 = vmatpush1.msra.mxu0 0.0
        %1142 = vmatprep.subr.mxu0 0.0
        %1143 = vmatpush1.msra.mxu0 0.0
        %1144 = vmatprep.subr.mxu0 0.0
        %1145 = vmatpush1.msra.mxu0 0.0
        %1146 = vmatprep.subr.mxu0 0.0
        %1147 = vmatpush1.msra.mxu0 0.0
        %1148 = vmatprep.subr.mxu0 0.0
        %1149 = vmatpush1.msra.mxu0 0.0
        %1150 = vmatprep.subr.mxu0 0.0
        %1151 = vmatpush1.msra.mxu0 0.0
        %1152 = vmatprep.subr.mxu0 0.0
        %1153 = vmatpush1.msra.mxu0 0.0
        %1154 = vmatprep.subr.mxu0 0.0
        %1155 = vmatpush1.msra.mxu0 0.0
        %1156 = vmatprep.subr.mxu0 0.0
        %1157 = vmatpush1.msra.mxu0 0.0
        %1158 = vmatprep.subr.mxu0 0.0
        %1159 = vmatpush1.msra.mxu0 0.0
        %1160 = vmatprep.subr.mxu0 0.0
        %1161 = vmatpush1.msra.mxu0 0.0
        %1162 = vmatprep.subr.mxu0 0.0
        %1163 = vmatpush1.msra.mxu0 0.0
        %1164 = vmatprep.subr.mxu0 0.0
        %1165 = vmatpush1.msra.mxu0 0.0
        %1166 = vmatprep.subr.mxu0 0.0
        %1167 = vmatpush1.msra.mxu0 0.0
        %1168 = vmatprep.subr.mxu0 0.0
        %1169 = vmatpush1.msra.mxu0 0.0
        %1170 = vmatprep.subr.mxu0 0.0
        %1171 = vmatpush1.msra.mxu0 0.0
        %1172 = vmatprep.subr.mxu0 0.0
        %1173 = vmatpush1.msra.mxu0 0.0
        %1174 = vmatprep.subr.mxu0 0.0
        %1175 = vmatpush1.msra.mxu0 0.0
        %1176 = vmatprep.subr.mxu0 0.0
        %1177 = vmatpush1.msra.mxu0 0.0
        %1178 = vmatprep.subr.mxu0 0.0
        %1179 = vmatpush1.msra.mxu0 0.0
        %1180 = vmatprep.subr.mxu0 0.0
        %1181 = vmatpush1.msra.mxu0 0.0
        %1182 = vmatprep.subr.mxu0 0.0
        %1183 = vmatpush1.msra.mxu0 0.0
        %1184 = vmatprep.subr.mxu0 0.0
        %1185 = vmatpush1.msra.mxu0 0.0
        %1186 = vmatprep.subr.mxu0 0.0
        %1187 = vmatpush1.msra.mxu0 0.0
        %1188 = vmatprep.subr.mxu0 0.0
        %1189 = vmatpush1.msra.mxu0 0.0
        %1190 = vmatprep.mubr.f32.mxu0 0.0
        %1191 = vmatmul.mubr.f32.gmra.mrb[0].mxu0 %v1054
        %v1192 = vpop.f32.mrb[0].mxu0
        %v1193 = vadd.f32 %v1039, %v1192
        %v1194 = vpop.f32.mrb[0].mxu0
        %1195 = vdwg.mxu0
        %1196 = vmatprep.subr.mxu0 0.0
        %1197 = vmatpush1.msra.mxu0 %v971
        %1198 = vmatprep.subr.mxu0 0.0
        %1199 = vmatpush1.msra.mxu0 %v972
        %1200 = vmatprep.subr.mxu0 0.0
        %1201 = vmatpush1.msra.mxu0 %v973
        %1202 = vmatprep.subr.mxu0 0.0
        %1203 = vmatpush1.msra.mxu0 %v974
        %1204 = vmatprep.subr.mxu0 0.0
        %1205 = vmatpush1.msra.mxu0 0.0
        %1206 = vmatprep.subr.mxu0 0.0
        %1207 = vmatpush1.msra.mxu0 0.0
        %1208 = vmatprep.subr.mxu0 0.0
        %1209 = vmatpush1.msra.mxu0 0.0
        %1210 = vmatprep.subr.mxu0 0.0
        %1211 = vmatpush1.msra.mxu0 0.0
        %1212 = vmatprep.subr.mxu0 0.0
        %1213 = vmatpush1.msra.mxu0 0.0
        %1214 = vmatprep.subr.mxu0 0.0
        %1215 = vmatpush1.msra.mxu0 0.0
        %1216 = vmatprep.subr.mxu0 0.0
        %1217 = vmatpush1.msra.mxu0 0.0
        %1218 = vmatprep.subr.mxu0 0.0
        %1219 = vmatpush1.msra.mxu0 0.0
        %1220 = vmatprep.subr.mxu0 0.0
        %1221 = vmatpush1.msra.mxu0 0.0
        %1222 = vmatprep.subr.mxu0 0.0
        %1223 = vmatpush1.msra.mxu0 0.0
        %1224 = vmatprep.subr.mxu0 0.0
        %1225 = vmatpush1.msra.mxu0 0.0
        %1226 = vmatprep.subr.mxu0 0.0
        %1227 = vmatpush1.msra.mxu0 0.0
        %1228 = vmatprep.subr.mxu0 0.0
        %1229 = vmatpush1.msra.mxu0 0.0
        %1230 = vmatprep.subr.mxu0 0.0
        %1231 = vmatpush1.msra.mxu0 0.0
        %1232 = vmatprep.subr.mxu0 0.0
        %1233 = vmatpush1.msra.mxu0 0.0
        %1234 = vmatprep.subr.mxu0 0.0
        %1235 = vmatpush1.msra.mxu0 0.0
        %1236 = vmatprep.subr.mxu0 0.0
        %1237 = vmatpush1.msra.mxu0 0.0
        %1238 = vmatprep.subr.mxu0 0.0
        %1239 = vmatpush1.msra.mxu0 0.0
        %1240 = vmatprep.subr.mxu0 0.0
        %1241 = vmatpush1.msra.mxu0 0.0
        %1242 = vmatprep.subr.mxu0 0.0
        %1243 = vmatpush1.msra.mxu0 0.0
        %1244 = vmatprep.subr.mxu0 0.0
        %1245 = vmatpush1.msra.mxu0 0.0
        %1246 = vmatprep.subr.mxu0 0.0
        %1247 = vmatpush1.msra.mxu0 0.0
        %1248 = vmatprep.subr.mxu0 0.0
        %1249 = vmatpush1.msra.mxu0 0.0
        %1250 = vmatprep.subr.mxu0 0.0
        %1251 = vmatpush1.msra.mxu0 0.0
        %1252 = vmatprep.subr.mxu0 0.0
        %1253 = vmatpush1.msra.mxu0 0.0
        %1254 = vmatprep.subr.mxu0 0.0
        %1255 = vmatpush1.msra.mxu0 0.0
        %1256 = vmatprep.subr.mxu0 0.0
        %1257 = vmatpush1.msra.mxu0 0.0
        %1258 = vmatprep.subr.mxu0 0.0
        %1259 = vmatpush1.msra.mxu0 0.0
        %1260 = vmatprep.mubr.f32.mxu0 0.0
        %1261 = vmatmul.mubr.f32.gmra.mrb[0].mxu0 %v1054
        %v1262 = vpop.f32.mrb[0].mxu0
        %v1263 = vadd.f32 %v1043, %v1262
        %v1264 = vpop.f32.mrb[0].mxu0
        %1265 = vdwg.mxu0
        %1266 = vmatprep.subr.mxu0 0.0
        %1267 = vmatpush1.msra.mxu0 %v975
        %1268 = vmatprep.subr.mxu0 0.0
        %1269 = vmatpush1.msra.mxu0 %v976
        %1270 = vmatprep.subr.mxu0 0.0
        %1271 = vmatpush1.msra.mxu0 %v977
        %1272 = vmatprep.subr.mxu0 0.0
        %1273 = vmatpush1.msra.mxu0 %v978
        %1274 = vmatprep.subr.mxu0 0.0
        %1275 = vmatpush1.msra.mxu0 0.0
        %1276 = vmatprep.subr.mxu0 0.0
        %1277 = vmatpush1.msra.mxu0 0.0
        %1278 = vmatprep.subr.mxu0 0.0
        %1279 = vmatpush1.msra.mxu0 0.0
        %1280 = vmatprep.subr.mxu0 0.0
        %1281 = vmatpush1.msra.mxu0 0.0
        %1282 = vmatprep.subr.mxu0 0.0
        %1283 = vmatpush1.msra.mxu0 0.0
        %1284 = vmatprep.subr.mxu0 0.0
        %1285 = vmatpush1.msra.mxu0 0.0
        %1286 = vmatprep.subr.mxu0 0.0
        %1287 = vmatpush1.msra.mxu0 0.0
        %1288 = vmatprep.subr.mxu0 0.0
        %1289 = vmatpush1.msra.mxu0 0.0
        %1290 = vmatprep.subr.mxu0 0.0
        %1291 = vmatpush1.msra.mxu0 0.0
        %1292 = vmatprep.subr.mxu0 0.0
        %1293 = vmatpush1.msra.mxu0 0.0
        %1294 = vmatprep.subr.mxu0 0.0
        %1295 = vmatpush1.msra.mxu0 0.0
        %1296 = vmatprep.subr.mxu0 0.0
        %1297 = vmatpush1.msra.mxu0 0.0
        %1298 = vmatprep.subr.mxu0 0.0
        %1299 = vmatpush1.msra.mxu0 0.0
        %1300 = vmatprep.subr.mxu0 0.0
        %1301 = vmatpush1.msra.mxu0 0.0
        %1302 = vmatprep.subr.mxu0 0.0
        %1303 = vmatpush1.msra.mxu0 0.0
        %1304 = vmatprep.subr.mxu0 0.0
        %1305 = vmatpush1.msra.mxu0 0.0
        %1306 = vmatprep.subr.mxu0 0.0
        %1307 = vmatpush1.msra.mxu0 0.0
        %1308 = vmatprep.subr.mxu0 0.0
        %1309 = vmatpush1.msra.mxu0 0.0
        %1310 = vmatprep.subr.mxu0 0.0
        %1311 = vmatpush1.msra.mxu0 0.0
        %1312 = vmatprep.subr.mxu0 0.0
        %1313 = vmatpush1.msra.mxu0 0.0
        %1314 = vmatprep.subr.mxu0 0.0
        %1315 = vmatpush1.msra.mxu0 0.0
        %1316 = vmatprep.subr.mxu0 0.0
        %1317 = vmatpush1.msra.mxu0 0.0
        %1318 = vmatprep.subr.mxu0 0.0
        %1319 = vmatpush1.msra.mxu0 0.0
        %1320 = vmatprep.subr.mxu0 0.0
        %1321 = vmatpush1.msra.mxu0 0.0
        %1322 = vmatprep.subr.mxu0 0.0
        %1323 = vmatpush1.msra.mxu0 0.0
        %1324 = vmatprep.subr.mxu0 0.0
        %1325 = vmatpush1.msra.mxu0 0.0
        %1326 = vmatprep.subr.mxu0 0.0
        %1327 = vmatpush1.msra.mxu0 0.0
        %1328 = vmatprep.subr.mxu0 0.0
        %1329 = vmatpush1.msra.mxu0 0.0
        %1330 = vmatprep.mubr.f32.mxu0 0.0
        %1331 = vmatmul.mubr.f32.gmra.mrb[0].mxu0 %v1054
        %v1332 = vpop.f32.mrb[0].mxu0
        %v1333 = vadd.f32 %v1047, %v1332
        %v1334 = vpop.f32.mrb[0].mxu0
        %1335 = vdwg.mxu0
        %v1340 = vlaneseq
        %v1341 = vshrl.u32 %v1340, 7
        %v1342 = vsub.s32 0, %v1341
        %v1343 = vrot.slane %v999, %v1342
        %v1344 = vlaneseq
        %v1345 = vshrl.u32 %v1344, 7
        %v1346 = vsub.s32 0, %v1345
        %v1347 = vrot.slane %v1000, %v1346
        %v1348 = vlaneseq
        %v1349 = vshrl.u32 %v1348, 7
        %v1350 = vsub.s32 0, %v1349
        %v1351 = vrot.slane %v1001, %v1350
        %v1352 = vlaneseq
        %v1353 = vshrl.u32 %v1352, 7
        %v1354 = vsub.s32 0, %v1353
        %v1355 = vrot.slane %v1002, %v1354
        %1360 = vmatprep.subr.mxu0 0.0
        %1361 = vmatpush1.msra.mxu0 %v983
        %1362 = vmatprep.subr.mxu0 0.0
        %1363 = vmatpush1.msra.mxu0 %v984
        %1364 = vmatprep.subr.mxu0 0.0
        %1365 = vmatpush1.msra.mxu0 %v985
        %1366 = vmatprep.subr.mxu0 0.0
        %1367 = vmatpush1.msra.mxu0 %v986
        %1368 = vmatprep.subr.mxu0 0.0
        %1369 = vmatpush1.msra.mxu0 0.0
        %1370 = vmatprep.subr.mxu0 0.0
        %1371 = vmatpush1.msra.mxu0 0.0
        %1372 = vmatprep.subr.mxu0 0.0
        %1373 = vmatpush1.msra.mxu0 0.0
        %1374 = vmatprep.subr.mxu0 0.0
        %1375 = vmatpush1.msra.mxu0 0.0
        %1376 = vmatprep.subr.mxu0 0.0
        %1377 = vmatpush1.msra.mxu0 0.0
        %1378 = vmatprep.subr.mxu0 0.0
        %1379 = vmatpush1.msra.mxu0 0.0
        %1380 = vmatprep.subr.mxu0 0.0
        %1381 = vmatpush1.msra.mxu0 0.0
        %1382 = vmatprep.subr.mxu0 0.0
        %1383 = vmatpush1.msra.mxu0 0.0
        %1384 = vmatprep.subr.mxu0 0.0
        %1385 = vmatpush1.msra.mxu0 0.0
        %1386 = vmatprep.subr.mxu0 0.0
        %1387 = vmatpush1.msra.mxu0 0.0
        %1388 = vmatprep.subr.mxu0 0.0
        %1389 = vmatpush1.msra.mxu0 0.0
        %1390 = vmatprep.subr.mxu0 0.0
        %1391 = vmatpush1.msra.mxu0 0.0
        %1392 = vmatprep.subr.mxu0 0.0
        %1393 = vmatpush1.msra.mxu0 0.0
        %1394 = vmatprep.subr.mxu0 0.0
        %1395 = vmatpush1.msra.mxu0 0.0
        %1396 = vmatprep.subr.mxu0 0.0
        %1397 = vmatpush1.msra.mxu0 0.0
        %1398 = vmatprep.subr.mxu0 0.0
        %1399 = vmatpush1.msra.mxu0 0.0
        %1400 = vmatprep.subr.mxu0 0.0
        %1401 = vmatpush1.msra.mxu0 0.0
        %1402 = vmatprep.subr.mxu0 0.0
        %1403 = vmatpush1.msra.mxu0 0.0
        %1404 = vmatprep.subr.mxu0 0.0
        %1405 = vmatpush1.msra.mxu0 0.0
        %1406 = vmatprep.subr.mxu0 0.0
        %1407 = vmatpush1.msra.mxu0 0.0
        %1408 = vmatprep.subr.mxu0 0.0
        %1409 = vmatpush1.msra.mxu0 0.0
        %1410 = vmatprep.subr.mxu0 0.0
        %1411 = vmatpush1.msra.mxu0 0.0
        %1412 = vmatprep.subr.mxu0 0.0
        %1413 = vmatpush1.msra.mxu0 0.0
        %1414 = vmatprep.subr.mxu0 0.0
        %1415 = vmatpush1.msra.mxu0 0.0
        %1416 = vmatprep.subr.mxu0 0.0
        %1417 = vmatpush1.msra.mxu0 0.0
        %1418 = vmatprep.subr.mxu0 0.0
        %1419 = vmatpush1.msra.mxu0 0.0
        %1420 = vmatprep.subr.mxu0 0.0
        %1421 = vmatpush1.msra.mxu0 0.0
        %1422 = vmatprep.subr.mxu0 0.0
        %1423 = vmatpush1.msra.mxu0 0.0
        %1424 = vmatprep.mubr.f32.mxu0 0.0
        %1425 = vmatmul.mubr.f32.gmra.mrb[0].mxu0 %v1054
        %v1426 = vpop.f32.mrb[0].mxu0
        %v1427 = vadd.f32 %v1343, %v1426
        %v1428 = vpop.f32.mrb[0].mxu0
        %1429 = vdwg.mxu0
        %1430 = vmatprep.subr.mxu0 0.0
        %1431 = vmatpush1.msra.mxu0 %v987
        %1432 = vmatprep.subr.mxu0 0.0
        %1433 = vmatpush1.msra.mxu0 %v988
        %1434 = vmatprep.subr.mxu0 0.0
        %1435 = vmatpush1.msra.mxu0 %v989
        %1436 = vmatprep.subr.mxu0 0.0
        %1437 = vmatpush1.msra.mxu0 %v990
        %1438 = vmatprep.subr.mxu0 0.0
        %1439 = vmatpush1.msra.mxu0 0.0
        %1440 = vmatprep.subr.mxu0 0.0
        %1441 = vmatpush1.msra.mxu0 0.0
        %1442 = vmatprep.subr.mxu0 0.0
        %1443 = vmatpush1.msra.mxu0 0.0
        %1444 = vmatprep.subr.mxu0 0.0
        %1445 = vmatpush1.msra.mxu0 0.0
        %1446 = vmatprep.subr.mxu0 0.0
        %1447 = vmatpush1.msra.mxu0 0.0
        %1448 = vmatprep.subr.mxu0 0.0
        %1449 = vmatpush1.msra.mxu0 0.0
        %1450 = vmatprep.subr.mxu0 0.0
        %1451 = vmatpush1.msra.mxu0 0.0
        %1452 = vmatprep.subr.mxu0 0.0
        %1453 = vmatpush1.msra.mxu0 0.0
        %1454 = vmatprep.subr.mxu0 0.0
        %1455 = vmatpush1.msra.mxu0 0.0
        %1456 = vmatprep.subr.mxu0 0.0
        %1457 = vmatpush1.msra.mxu0 0.0
        %1458 = vmatprep.subr.mxu0 0.0
        %1459 = vmatpush1.msra.mxu0 0.0
        %1460 = vmatprep.subr.mxu0 0.0
        %1461 = vmatpush1.msra.mxu0 0.0
        %1462 = vmatprep.subr.mxu0 0.0
        %1463 = vmatpush1.msra.mxu0 0.0
        %1464 = vmatprep.subr.mxu0 0.0
        %1465 = vmatpush1.msra.mxu0 0.0
        %1466 = vmatprep.subr.mxu0 0.0
        %1467 = vmatpush1.msra.mxu0 0.0
        %1468 = vmatprep.subr.mxu0 0.0
        %1469 = vmatpush1.msra.mxu0 0.0
        %1470 = vmatprep.subr.mxu0 0.0
        %1471 = vmatpush1.msra.mxu0 0.0
        %1472 = vmatprep.subr.mxu0 0.0
        %1473 = vmatpush1.msra.mxu0 0.0
        %1474 = vmatprep.subr.mxu0 0.0
        %1475 = vmatpush1.msra.mxu0 0.0
        %1476 = vmatprep.subr.mxu0 0.0
        %1477 = vmatpush1.msra.mxu0 0.0
        %1478 = vmatprep.subr.mxu0 0.0
        %1479 = vmatpush1.msra.mxu0 0.0
        %1480 = vmatprep.subr.mxu0 0.0
        %1481 = vmatpush1.msra.mxu0 0.0
        %1482 = vmatprep.subr.mxu0 0.0
        %1483 = vmatpush1.msra.mxu0 0.0
        %1484 = vmatprep.subr.mxu0 0.0
        %1485 = vmatpush1.msra.mxu0 0.0
        %1486 = vmatprep.subr.mxu0 0.0
        %1487 = vmatpush1.msra.mxu0 0.0
        %1488 = vmatprep.subr.mxu0 0.0
        %1489 = vmatpush1.msra.mxu0 0.0
        %1490 = vmatprep.subr.mxu0 0.0
        %1491 = vmatpush1.msra.mxu0 0.0
        %1492 = vmatprep.subr.mxu0 0.0
        %1493 = vmatpush1.msra.mxu0 0.0
        %1494 = vmatprep.mubr.f32.mxu0 0.0
        %1495 = vmatmul.mubr.f32.gmra.mrb[0].mxu0 %v1054
        %v1496 = vpop.f32.mrb[0].mxu0
        %v1497 = vadd.f32 %v1347, %v1496
        %v1498 = vpop.f32.mrb[0].mxu0
        %1499 = vdwg.mxu0
        %1500 = vmatprep.subr.mxu0 0.0
        %1501 = vmatpush1.msra.mxu0 %v991
        %1502 = vmatprep.subr.mxu0 0.0
        %1503 = vmatpush1.msra.mxu0 %v992
        %1504 = vmatprep.subr.mxu0 0.0
        %1505 = vmatpush1.msra.mxu0 %v993
        %1506 = vmatprep.subr.mxu0 0.0
        %1507 = vmatpush1.msra.mxu0 %v994
        %1508 = vmatprep.subr.mxu0 0.0
        %1509 = vmatpush1.msra.mxu0 0.0
        %1510 = vmatprep.subr.mxu0 0.0
        %1511 = vmatpush1.msra.mxu0 0.0
        %1512 = vmatprep.subr.mxu0 0.0
        %1513 = vmatpush1.msra.mxu0 0.0
        %1514 = vmatprep.subr.mxu0 0.0
        %1515 = vmatpush1.msra.mxu0 0.0
        %1516 = vmatprep.subr.mxu0 0.0
        %1517 = vmatpush1.msra.mxu0 0.0
        %1518 = vmatprep.subr.mxu0 0.0
        %1519 = vmatpush1.msra.mxu0 0.0
        %1520 = vmatprep.subr.mxu0 0.0
        %1521 = vmatpush1.msra.mxu0 0.0
        %1522 = vmatprep.subr.mxu0 0.0
        %1523 = vmatpush1.msra.mxu0 0.0
        %1524 = vmatprep.subr.mxu0 0.0
        %1525 = vmatpush1.msra.mxu0 0.0
        %1526 = vmatprep.subr.mxu0 0.0
        %1527 = vmatpush1.msra.mxu0 0.0
        %1528 = vmatprep.subr.mxu0 0.0
        %1529 = vmatpush1.msra.mxu0 0.0
        %1530 = vmatprep.subr.mxu0 0.0
        %1531 = vmatpush1.msra.mxu0 0.0
        %1532 = vmatprep.subr.mxu0 0.0
        %1533 = vmatpush1.msra.mxu0 0.0
        %1534 = vmatprep.subr.mxu0 0.0
        %1535 = vmatpush1.msra.mxu0 0.0
        %1536 = vmatprep.subr.mxu0 0.0
        %1537 = vmatpush1.msra.mxu0 0.0
        %1538 = vmatprep.subr.mxu0 0.0
        %1539 = vmatpush1.msra.mxu0 0.0
        %1540 = vmatprep.subr.mxu0 0.0
        %1541 = vmatpush1.msra.mxu0 0.0
        %1542 = vmatprep.subr.mxu0 0.0
        %1543 = vmatpush1.msra.mxu0 0.0
        %1544 = vmatprep.subr.mxu0 0.0
        %1545 = vmatpush1.msra.mxu0 0.0
        %1546 = vmatprep.subr.mxu0 0.0
        %1547 = vmatpush1.msra.mxu0 0.0
        %1548 = vmatprep.subr.mxu0 0.0
        %1549 = vmatpush1.msra.mxu0 0.0
        %1550 = vmatprep.subr.mxu0 0.0
        %1551 = vmatpush1.msra.mxu0 0.0
        %1552 = vmatprep.subr.mxu0 0.0
        %1553 = vmatpush1.msra.mxu0 0.0
        %1554 = vmatprep.subr.mxu0 0.0
        %1555 = vmatpush1.msra.mxu0 0.0
        %1556 = vmatprep.subr.mxu0 0.0
        %1557 = vmatpush1.msra.mxu0 0.0
        %1558 = vmatprep.subr.mxu0 0.0
        %1559 = vmatpush1.msra.mxu0 0.0
        %1560 = vmatprep.subr.mxu0 0.0
        %1561 = vmatpush1.msra.mxu0 0.0
        %1562 = vmatprep.subr.mxu0 0.0
        %1563 = vmatpush1.msra.mxu0 0.0
        %1564 = vmatprep.mubr.f32.mxu0 0.0
        %1565 = vmatmul.mubr.f32.gmra.mrb[0].mxu0 %v1054
        %v1566 = vpop.f32.mrb[0].mxu0
        %v1567 = vadd.f32 %v1351, %v1566
        %v1568 = vpop.f32.mrb[0].mxu0
        %1569 = vdwg.mxu0
        %1570 = vmatprep.subr.mxu0 0.0
        %1571 = vmatpush1.msra.mxu0 %v995
        %1572 = vmatprep.subr.mxu0 0.0
        %1573 = vmatpush1.msra.mxu0 %v996
        %1574 = vmatprep.subr.mxu0 0.0
        %1575 = vmatpush1.msra.mxu0 %v997
        %1576 = vmatprep.subr.mxu0 0.0
        %1577 = vmatpush1.msra.mxu0 %v998
        %1578 = vmatprep.subr.mxu0 0.0
        %1579 = vmatpush1.msra.mxu0 0.0
        %1580 = vmatprep.subr.mxu0 0.0
        %1581 = vmatpush1.msra.mxu0 0.0
        %1582 = vmatprep.subr.mxu0 0.0
        %1583 = vmatpush1.msra.mxu0 0.0
        %1584 = vmatprep.subr.mxu0 0.0
        %1585 = vmatpush1.msra.mxu0 0.0
        %1586 = vmatprep.subr.mxu0 0.0
        %1587 = vmatpush1.msra.mxu0 0.0
        %1588 = vmatprep.subr.mxu0 0.0
        %1589 = vmatpush1.msra.mxu0 0.0
        %1590 = vmatprep.subr.mxu0 0.0
        %1591 = vmatpush1.msra.mxu0 0.0
        %1592 = vmatprep.subr.mxu0 0.0
        %1593 = vmatpush1.msra.mxu0 0.0
        %1594 = vmatprep.subr.mxu0 0.0
        %1595 = vmatpush1.msra.mxu0 0.0
        %1596 = vmatprep.subr.mxu0 0.0
        %1597 = vmatpush1.msra.mxu0 0.0
        %1598 = vmatprep.subr.mxu0 0.0
        %1599 = vmatpush1.msra.mxu0 0.0
        %1600 = vmatprep.subr.mxu0 0.0
        %1601 = vmatpush1.msra.mxu0 0.0
        %1602 = vmatprep.subr.mxu0 0.0
        %1603 = vmatpush1.msra.mxu0 0.0
        %1604 = vmatprep.subr.mxu0 0.0
        %1605 = vmatpush1.msra.mxu0 0.0
        %1606 = vmatprep.subr.mxu0 0.0
        %1607 = vmatpush1.msra.mxu0 0.0
        %1608 = vmatprep.subr.mxu0 0.0
        %1609 = vmatpush1.msra.mxu0 0.0
        %1610 = vmatprep.subr.mxu0 0.0
        %1611 = vmatpush1.msra.mxu0 0.0
        %1612 = vmatprep.subr.mxu0 0.0
        %1613 = vmatpush1.msra.mxu0 0.0
        %1614 = vmatprep.subr.mxu0 0.0
        %1615 = vmatpush1.msra.mxu0 0.0
        %1616 = vmatprep.subr.mxu0 0.0
        %1617 = vmatpush1.msra.mxu0 0.0
        %1618 = vmatprep.subr.mxu0 0.0
        %1619 = vmatpush1.msra.mxu0 0.0
        %1620 = vmatprep.subr.mxu0 0.0
        %1621 = vmatpush1.msra.mxu0 0.0
        %1622 = vmatprep.subr.mxu0 0.0
        %1623 = vmatpush1.msra.mxu0 0.0
        %1624 = vmatprep.subr.mxu0 0.0
        %1625 = vmatpush1.msra.mxu0 0.0
        %1626 = vmatprep.subr.mxu0 0.0
        %1627 = vmatpush1.msra.mxu0 0.0
        %1628 = vmatprep.subr.mxu0 0.0
        %1629 = vmatpush1.msra.mxu0 0.0
        %1630 = vmatprep.subr.mxu0 0.0
        %1631 = vmatpush1.msra.mxu0 0.0
        %1632 = vmatprep.subr.mxu0 0.0
        %1633 = vmatpush1.msra.mxu0 0.0
        %1634 = vmatprep.mubr.f32.mxu0 0.0
        %1635 = vmatmul.mubr.f32.gmra.mrb[0].mxu0 %v1054
        %v1636 = vpop.f32.mrb[0].mxu0
        %v1637 = vadd.f32 %v1355, %v1636
        %v1638 = vpop.f32.mrb[0].mxu0
        %1639 = vdwg.mxu0
        %v1644 = vlaneseq
        %v1645 = vshrl.u32 %v1644, 7
        %v1646 = vsub.s32 0, %v1645
        %v1647 = vrot.slane %v1019, %v1646
        %v1648 = vlaneseq
        %v1649 = vshrl.u32 %v1648, 7
        %v1650 = vsub.s32 0, %v1649
        %v1651 = vrot.slane %v1020, %v1650
        %v1652 = vlaneseq
        %v1653 = vshrl.u32 %v1652, 7
        %v1654 = vsub.s32 0, %v1653
        %v1655 = vrot.slane %v1021, %v1654
        %v1656 = vlaneseq
        %v1657 = vshrl.u32 %v1656, 7
        %v1658 = vsub.s32 0, %v1657
        %v1659 = vrot.slane %v1022, %v1658
        %1664 = vmatprep.subr.mxu0 0.0
        %1665 = vmatpush1.msra.mxu0 %v1003
        %1666 = vmatprep.subr.mxu0 0.0
        %1667 = vmatpush1.msra.mxu0 %v1004
        %1668 = vmatprep.subr.mxu0 0.0
        %1669 = vmatpush1.msra.mxu0 %v1005
        %1670 = vmatprep.subr.mxu0 0.0
        %1671 = vmatpush1.msra.mxu0 %v1006
        %1672 = vmatprep.subr.mxu0 0.0
        %1673 = vmatpush1.msra.mxu0 0.0
        %1674 = vmatprep.subr.mxu0 0.0
        %1675 = vmatpush1.msra.mxu0 0.0
        %1676 = vmatprep.subr.mxu0 0.0
        %1677 = vmatpush1.msra.mxu0 0.0
        %1678 = vmatprep.subr.mxu0 0.0
        %1679 = vmatpush1.msra.mxu0 0.0
        %1680 = vmatprep.subr.mxu0 0.0
        %1681 = vmatpush1.msra.mxu0 0.0
        %1682 = vmatprep.subr.mxu0 0.0
        %1683 = vmatpush1.msra.mxu0 0.0
        %1684 = vmatprep.subr.mxu0 0.0
        %1685 = vmatpush1.msra.mxu0 0.0
        %1686 = vmatprep.subr.mxu0 0.0
        %1687 = vmatpush1.msra.mxu0 0.0
        %1688 = vmatprep.subr.mxu0 0.0
        %1689 = vmatpush1.msra.mxu0 0.0
        %1690 = vmatprep.subr.mxu0 0.0
        %1691 = vmatpush1.msra.mxu0 0.0
        %1692 = vmatprep.subr.mxu0 0.0
        %1693 = vmatpush1.msra.mxu0 0.0
        %1694 = vmatprep.subr.mxu0 0.0
        %1695 = vmatpush1.msra.mxu0 0.0
        %1696 = vmatprep.subr.mxu0 0.0
        %1697 = vmatpush1.msra.mxu0 0.0
        %1698 = vmatprep.subr.mxu0 0.0
        %1699 = vmatpush1.msra.mxu0 0.0
        %1700 = vmatprep.subr.mxu0 0.0
        %1701 = vmatpush1.msra.mxu0 0.0
        %1702 = vmatprep.subr.mxu0 0.0
        %1703 = vmatpush1.msra.mxu0 0.0
        %1704 = vmatprep.subr.mxu0 0.0
        %1705 = vmatpush1.msra.mxu0 0.0
        %1706 = vmatprep.subr.mxu0 0.0
        %1707 = vmatpush1.msra.mxu0 0.0
        %1708 = vmatprep.subr.mxu0 0.0
        %1709 = vmatpush1.msra.mxu0 0.0
        %1710 = vmatprep.subr.mxu0 0.0
        %1711 = vmatpush1.msra.mxu0 0.0
        %1712 = vmatprep.subr.mxu0 0.0
        %1713 = vmatpush1.msra.mxu0 0.0
        %1714 = vmatprep.subr.mxu0 0.0
        %1715 = vmatpush1.msra.mxu0 0.0
        %1716 = vmatprep.subr.mxu0 0.0
        %1717 = vmatpush1.msra.mxu0 0.0
        %1718 = vmatprep.subr.mxu0 0.0
        %1719 = vmatpush1.msra.mxu0 0.0
        %1720 = vmatprep.subr.mxu0 0.0
        %1721 = vmatpush1.msra.mxu0 0.0
        %1722 = vmatprep.subr.mxu0 0.0
        %1723 = vmatpush1.msra.mxu0 0.0
        %1724 = vmatprep.subr.mxu0 0.0
        %1725 = vmatpush1.msra.mxu0 0.0
        %1726 = vmatprep.subr.mxu0 0.0
        %1727 = vmatpush1.msra.mxu0 0.0
        %1728 = vmatprep.mubr.f32.mxu0 0.0
        %1729 = vmatmul.mubr.f32.gmra.mrb[0].mxu0 %v1054
        %v1730 = vpop.f32.mrb[0].mxu0
        %v1731 = vadd.f32 %v1647, %v1730
        %v1732 = vpop.f32.mrb[0].mxu0
        %1733 = vdwg.mxu0
        %1734 = vmatprep.subr.mxu0 0.0
        %1735 = vmatpush1.msra.mxu0 %v1007
        %1736 = vmatprep.subr.mxu0 0.0
        %1737 = vmatpush1.msra.mxu0 %v1008
        %1738 = vmatprep.subr.mxu0 0.0
        %1739 = vmatpush1.msra.mxu0 %v1009
        %1740 = vmatprep.subr.mxu0 0.0
        %1741 = vmatpush1.msra.mxu0 %v1010
        %1742 = vmatprep.subr.mxu0 0.0
        %1743 = vmatpush1.msra.mxu0 0.0
        %1744 = vmatprep.subr.mxu0 0.0
        %1745 = vmatpush1.msra.mxu0 0.0
        %1746 = vmatprep.subr.mxu0 0.0
        %1747 = vmatpush1.msra.mxu0 0.0
        %1748 = vmatprep.subr.mxu0 0.0
        %1749 = vmatpush1.msra.mxu0 0.0
        %1750 = vmatprep.subr.mxu0 0.0
        %1751 = vmatpush1.msra.mxu0 0.0
        %1752 = vmatprep.subr.mxu0 0.0
        %1753 = vmatpush1.msra.mxu0 0.0
        %1754 = vmatprep.subr.mxu0 0.0
        %1755 = vmatpush1.msra.mxu0 0.0
        %1756 = vmatprep.subr.mxu0 0.0
        %1757 = vmatpush1.msra.mxu0 0.0
        %1758 = vmatprep.subr.mxu0 0.0
        %1759 = vmatpush1.msra.mxu0 0.0
        %1760 = vmatprep.subr.mxu0 0.0
        %1761 = vmatpush1.msra.mxu0 0.0
        %1762 = vmatprep.subr.mxu0 0.0
        %1763 = vmatpush1.msra.mxu0 0.0
        %1764 = vmatprep.subr.mxu0 0.0
        %1765 = vmatpush1.msra.mxu0 0.0
        %1766 = vmatprep.subr.mxu0 0.0
        %1767 = vmatpush1.msra.mxu0 0.0
        %1768 = vmatprep.subr.mxu0 0.0
        %1769 = vmatpush1.msra.mxu0 0.0
        %1770 = vmatprep.subr.mxu0 0.0
        %1771 = vmatpush1.msra.mxu0 0.0
        %1772 = vmatprep.subr.mxu0 0.0
        %1773 = vmatpush1.msra.mxu0 0.0
        %1774 = vmatprep.subr.mxu0 0.0
        %1775 = vmatpush1.msra.mxu0 0.0
        %1776 = vmatprep.subr.mxu0 0.0
        %1777 = vmatpush1.msra.mxu0 0.0
        %1778 = vmatprep.subr.mxu0 0.0
        %1779 = vmatpush1.msra.mxu0 0.0
        %1780 = vmatprep.subr.mxu0 0.0
        %1781 = vmatpush1.msra.mxu0 0.0
        %1782 = vmatprep.subr.mxu0 0.0
        %1783 = vmatpush1.msra.mxu0 0.0
        %1784 = vmatprep.subr.mxu0 0.0
        %1785 = vmatpush1.msra.mxu0 0.0
        %1786 = vmatprep.subr.mxu0 0.0
        %1787 = vmatpush1.msra.mxu0 0.0
        %1788 = vmatprep.subr.mxu0 0.0
        %1789 = vmatpush1.msra.mxu0 0.0
        %1790 = vmatprep.subr.mxu0 0.0
        %1791 = vmatpush1.msra.mxu0 0.0
        %1792 = vmatprep.subr.mxu0 0.0
        %1793 = vmatpush1.msra.mxu0 0.0
        %1794 = vmatprep.subr.mxu0 0.0
        %1795 = vmatpush1.msra.mxu0 0.0
        %1796 = vmatprep.subr.mxu0 0.0
        %1797 = vmatpush1.msra.mxu0 0.0
        %1798 = vmatprep.mubr.f32.mxu0 0.0
        %1799 = vmatmul.mubr.f32.gmra.mrb[0].mxu0 %v1054
        %v1800 = vpop.f32.mrb[0].mxu0
        %v1801 = vadd.f32 %v1651, %v1800
        %v1802 = vpop.f32.mrb[0].mxu0
        %1803 = vdwg.mxu0
        %1804 = vmatprep.subr.mxu0 0.0
        %1805 = vmatpush1.msra.mxu0 %v1011
        %1806 = vmatprep.subr.mxu0 0.0
        %1807 = vmatpush1.msra.mxu0 %v1012
        %1808 = vmatprep.subr.mxu0 0.0
        %1809 = vmatpush1.msra.mxu0 %v1013
        %1810 = vmatprep.subr.mxu0 0.0
        %1811 = vmatpush1.msra.mxu0 %v1014
        %1812 = vmatprep.subr.mxu0 0.0
        %1813 = vmatpush1.msra.mxu0 0.0
        %1814 = vmatprep.subr.mxu0 0.0
        %1815 = vmatpush1.msra.mxu0 0.0
        %1816 = vmatprep.subr.mxu0 0.0
        %1817 = vmatpush1.msra.mxu0 0.0
        %1818 = vmatprep.subr.mxu0 0.0
        %1819 = vmatpush1.msra.mxu0 0.0
        %1820 = vmatprep.subr.mxu0 0.0
        %1821 = vmatpush1.msra.mxu0 0.0
        %1822 = vmatprep.subr.mxu0 0.0
        %1823 = vmatpush1.msra.mxu0 0.0
        %1824 = vmatprep.subr.mxu0 0.0
        %1825 = vmatpush1.msra.mxu0 0.0
        %1826 = vmatprep.subr.mxu0 0.0
        %1827 = vmatpush1.msra.mxu0 0.0
        %1828 = vmatprep.subr.mxu0 0.0
        %1829 = vmatpush1.msra.mxu0 0.0
        %1830 = vmatprep.subr.mxu0 0.0
        %1831 = vmatpush1.msra.mxu0 0.0
        %1832 = vmatprep.subr.mxu0 0.0
        %1833 = vmatpush1.msra.mxu0 0.0
        %1834 = vmatprep.subr.mxu0 0.0
        %1835 = vmatpush1.msra.mxu0 0.0
        %1836 = vmatprep.subr.mxu0 0.0
        %1837 = vmatpush1.msra.mxu0 0.0
        %1838 = vmatprep.subr.mxu0 0.0
        %1839 = vmatpush1.msra.mxu0 0.0
        %1840 = vmatprep.subr.mxu0 0.0
        %1841 = vmatpush1.msra.mxu0 0.0
        %1842 = vmatprep.subr.mxu0 0.0
        %1843 = vmatpush1.msra.mxu0 0.0
        %1844 = vmatprep.subr.mxu0 0.0
        %1845 = vmatpush1.msra.mxu0 0.0
        %1846 = vmatprep.subr.mxu0 0.0
        %1847 = vmatpush1.msra.mxu0 0.0
        %1848 = vmatprep.subr.mxu0 0.0
        %1849 = vmatpush1.msra.mxu0 0.0
        %1850 = vmatprep.subr.mxu0 0.0
        %1851 = vmatpush1.msra.mxu0 0.0
        %1852 = vmatprep.subr.mxu0 0.0
        %1853 = vmatpush1.msra.mxu0 0.0
        %1854 = vmatprep.subr.mxu0 0.0
        %1855 = vmatpush1.msra.mxu0 0.0
        %1856 = vmatprep.subr.mxu0 0.0
        %1857 = vmatpush1.msra.mxu0 0.0
        %1858 = vmatprep.subr.mxu0 0.0
        %1859 = vmatpush1.msra.mxu0 0.0
        %1860 = vmatprep.subr.mxu0 0.0
        %1861 = vmatpush1.msra.mxu0 0.0
        %1862 = vmatprep.subr.mxu0 0.0
        %1863 = vmatpush1.msra.mxu0 0.0
        %1864 = vmatprep.subr.mxu0 0.0
        %1865 = vmatpush1.msra.mxu0 0.0
        %1866 = vmatprep.subr.mxu0 0.0
        %1867 = vmatpush1.msra.mxu0 0.0
        %1868 = vmatprep.mubr.f32.mxu0 0.0
        %1869 = vmatmul.mubr.f32.gmra.mrb[0].mxu0 %v1054
        %v1870 = vpop.f32.mrb[0].mxu0
        %v1871 = vadd.f32 %v1655, %v1870
        %v1872 = vpop.f32.mrb[0].mxu0
        %1873 = vdwg.mxu0
        %1874 = vmatprep.subr.mxu0 0.0
        %1875 = vmatpush1.msra.mxu0 %v1015
        %1876 = vmatprep.subr.mxu0 0.0
        %1877 = vmatpush1.msra.mxu0 %v1016
        %1878 = vmatprep.subr.mxu0 0.0
        %1879 = vmatpush1.msra.mxu0 %v1017
        %1880 = vmatprep.subr.mxu0 0.0
        %1881 = vmatpush1.msra.mxu0 %v1018
        %1882 = vmatprep.subr.mxu0 0.0
        %1883 = vmatpush1.msra.mxu0 0.0
        %1884 = vmatprep.subr.mxu0 0.0
        %1885 = vmatpush1.msra.mxu0 0.0
        %1886 = vmatprep.subr.mxu0 0.0
        %1887 = vmatpush1.msra.mxu0 0.0
        %1888 = vmatprep.subr.mxu0 0.0
        %1889 = vmatpush1.msra.mxu0 0.0
        %1890 = vmatprep.subr.mxu0 0.0
        %1891 = vmatpush1.msra.mxu0 0.0
        %1892 = vmatprep.subr.mxu0 0.0
        %1893 = vmatpush1.msra.mxu0 0.0
        %1894 = vmatprep.subr.mxu0 0.0
        %1895 = vmatpush1.msra.mxu0 0.0
        %1896 = vmatprep.subr.mxu0 0.0
        %1897 = vmatpush1.msra.mxu0 0.0
        %1898 = vmatprep.subr.mxu0 0.0
        %1899 = vmatpush1.msra.mxu0 0.0
        %1900 = vmatprep.subr.mxu0 0.0
        %1901 = vmatpush1.msra.mxu0 0.0
        %1902 = vmatprep.subr.mxu0 0.0
        %1903 = vmatpush1.msra.mxu0 0.0
        %1904 = vmatprep.subr.mxu0 0.0
        %1905 = vmatpush1.msra.mxu0 0.0
        %1906 = vmatprep.subr.mxu0 0.0
        %1907 = vmatpush1.msra.mxu0 0.0
        %1908 = vmatprep.subr.mxu0 0.0
        %1909 = vmatpush1.msra.mxu0 0.0
        %1910 = vmatprep.subr.mxu0 0.0
        %1911 = vmatpush1.msra.mxu0 0.0
        %1912 = vmatprep.subr.mxu0 0.0
        %1913 = vmatpush1.msra.mxu0 0.0
        %1914 = vmatprep.subr.mxu0 0.0
        %1915 = vmatpush1.msra.mxu0 0.0
        %1916 = vmatprep.subr.mxu0 0.0
        %1917 = vmatpush1.msra.mxu0 0.0
        %1918 = vmatprep.subr.mxu0 0.0
        %1919 = vmatpush1.msra.mxu0 0.0
        %1920 = vmatprep.subr.mxu0 0.0
        %1921 = vmatpush1.msra.mxu0 0.0
        %1922 = vmatprep.subr.mxu0 0.0
        %1923 = vmatpush1.msra.mxu0 0.0
        %1924 = vmatprep.subr.mxu0 0.0
        %1925 = vmatpush1.msra.mxu0 0.0
        %1926 = vmatprep.subr.mxu0 0.0
        %1927 = vmatpush1.msra.mxu0 0.0
        %1928 = vmatprep.subr.mxu0 0.0
        %1929 = vmatpush1.msra.mxu0 0.0
        %1930 = vmatprep.subr.mxu0 0.0
        %1931 = vmatpush1.msra.mxu0 0.0
        %1932 = vmatprep.subr.mxu0 0.0
        %1933 = vmatpush1.msra.mxu0 0.0
        %1934 = vmatprep.subr.mxu0 0.0
        %1935 = vmatpush1.msra.mxu0 0.0
        %1936 = vmatprep.subr.mxu0 0.0
        %1937 = vmatpush1.msra.mxu0 0.0
        %1938 = vmatprep.mubr.f32.mxu0 0.0
        %1939 = vmatmul.mubr.f32.gmra.mrb[0].mxu0 %v1054
        %v1940 = vpop.f32.mrb[0].mxu0
        %v1941 = vadd.f32 %v1659, %v1940
        %v1942 = vpop.f32.mrb[0].mxu0
        %1943 = vdwg.mxu0
        %vm1944 = vcmask 64512
        %v1946 = vsel %vm1944, %v1123, 0
        %v1949 = vsel %vm1944, %v1427, 0
        %1951 = vmatprep.subr.mxu0 0.0
        %1952 = vmatpush1.xpose.msra.mxu0 %v1949
        %1953 = vmatprep.subr.mxu0 0.0
        %1954 = vmatpush1.xpose.msra.mxu0 0.0
        %1955 = vmatprep.subr.mxu0 0.0
        %1956 = vmatpush1.xpose.msra.mxu0 0.0
        %1957 = vmatprep.subr.mxu0 0.0
        %1958 = vmatpush1.xpose.msra.mxu0 0.0
        %1959 = vmatprep.subr.mxu0 0.0
        %1960 = vmatpush1.xpose.msra.mxu0 0.0
        %1961 = vmatprep.subr.mxu0 0.0
        %1962 = vmatpush1.xpose.msra.mxu0 0.0
        %1963 = vmatprep.subr.mxu0 0.0
        %1964 = vmatpush1.xpose.msra.mxu0 0.0
        %1965 = vmatprep.subr.mxu0 0.0
        %1966 = vmatpush1.xpose.msra.mxu0 0.0
        %1967 = vmatprep.subr.mxu0 0.0
        %1968 = vmatpush1.xpose.msra.mxu0 0.0
        %1969 = vmatprep.subr.mxu0 0.0
        %1970 = vmatpush1.xpose.msra.mxu0 0.0
        %1971 = vmatprep.subr.mxu0 0.0
        %1972 = vmatpush1.xpose.msra.mxu0 0.0
        %1973 = vmatprep.subr.mxu0 0.0
        %1974 = vmatpush1.xpose.msra.mxu0 0.0
        %1975 = vmatprep.subr.mxu0 0.0
        %1976 = vmatpush1.xpose.msra.mxu0 0.0
        %1977 = vmatprep.subr.mxu0 0.0
        %1978 = vmatpush1.xpose.msra.mxu0 0.0
        %1979 = vmatprep.subr.mxu0 0.0
        %1980 = vmatpush1.xpose.msra.mxu0 0.0
        %1981 = vmatprep.subr.mxu0 0.0
        %1982 = vmatpush1.xpose.msra.mxu0 0.0
        %1983 = vmatprep.subr.mxu0 0.0
        %1984 = vmatpush1.xpose.msra.mxu0 0.0
        %1985 = vmatprep.subr.mxu0 0.0
        %1986 = vmatpush1.xpose.msra.mxu0 0.0
        %1987 = vmatprep.subr.mxu0 0.0
        %1988 = vmatpush1.xpose.msra.mxu0 0.0
        %1989 = vmatprep.subr.mxu0 0.0
        %1990 = vmatpush1.xpose.msra.mxu0 0.0
        %1991 = vmatprep.subr.mxu0 0.0
        %1992 = vmatpush1.xpose.msra.mxu0 0.0
        %1993 = vmatprep.subr.mxu0 0.0
        %1994 = vmatpush1.xpose.msra.mxu0 0.0
        %1995 = vmatprep.subr.mxu0 0.0
        %1996 = vmatpush1.xpose.msra.mxu0 0.0
        %1997 = vmatprep.subr.mxu0 0.0
        %1998 = vmatpush1.xpose.msra.mxu0 0.0
        %1999 = vmatprep.subr.mxu0 0.0
        %2000 = vmatpush1.xpose.msra.mxu0 0.0
        %2001 = vmatprep.subr.mxu0 0.0
        %2002 = vmatpush1.xpose.msra.mxu0 0.0
        %2003 = vmatprep.subr.mxu0 0.0
        %2004 = vmatpush1.xpose.msra.mxu0 0.0
        %2005 = vmatprep.subr.mxu0 0.0
        %2006 = vmatpush1.xpose.msra.mxu0 0.0
        %2007 = vmatprep.subr.mxu0 0.0
        %2008 = vmatpush1.xpose.msra.mxu0 0.0
        %2009 = vmatprep.subr.mxu0 0.0
        %2010 = vmatpush1.xpose.msra.mxu0 0.0
        %2011 = vmatprep.subr.mxu0 0.0
        %2012 = vmatpush1.xpose.msra.mxu0 0.0
        %2013 = vmatprep.subr.mxu0 0.0
        %2014 = vmatpush1.xpose.msra.mxu0 0.0
        %2015 = vmatprep.mubr.f32.mxu0 0.0
        %2016 = vmatmul.mubr.f32.gmra.mrb[0].mxu0 %v1946
        %v2017 = vpop.f32.mrb[0].mxu0
        %v2018 = vadd.f32 0.0, %v2017
        %v2019 = vpop.f32.mrb[0].mxu0
        %2020 = vdwg.mxu0
        %v2022 = vsel %vm1944, %v1193, 0
        %v2025 = vsel %vm1944, %v1497, 0
        %2027 = vmatprep.subr.mxu0 0.0
        %2028 = vmatpush1.xpose.msra.mxu0 %v2025
        %2029 = vmatprep.subr.mxu0 0.0
        %2030 = vmatpush1.xpose.msra.mxu0 0.0
        %2031 = vmatprep.subr.mxu0 0.0
        %2032 = vmatpush1.xpose.msra.mxu0 0.0
        %2033 = vmatprep.subr.mxu0 0.0
        %2034 = vmatpush1.xpose.msra.mxu0 0.0
        %2035 = vmatprep.subr.mxu0 0.0
        %2036 = vmatpush1.xpose.msra.mxu0 0.0
        %2037 = vmatprep.subr.mxu0 0.0
        %2038 = vmatpush1.xpose.msra.mxu0 0.0
        %2039 = vmatprep.subr.mxu0 0.0
        %2040 = vmatpush1.xpose.msra.mxu0 0.0
        %2041 = vmatprep.subr.mxu0 0.0
        %2042 = vmatpush1.xpose.msra.mxu0 0.0
        %2043 = vmatprep.subr.mxu0 0.0
        %2044 = vmatpush1.xpose.msra.mxu0 0.0
        %2045 = vmatprep.subr.mxu0 0.0
        %2046 = vmatpush1.xpose.msra.mxu0 0.0
        %2047 = vmatprep.subr.mxu0 0.0
        %2048 = vmatpush1.xpose.msra.mxu0 0.0
        %2049 = vmatprep.subr.mxu0 0.0
        %2050 = vmatpush1.xpose.msra.mxu0 0.0
        %2051 = vmatprep.subr.mxu0 0.0
        %2052 = vmatpush1.xpose.msra.mxu0 0.0
        %2053 = vmatprep.subr.mxu0 0.0
        %2054 = vmatpush1.xpose.msra.mxu0 0.0
        %2055 = vmatprep.subr.mxu0 0.0
        %2056 = vmatpush1.xpose.msra.mxu0 0.0
        %2057 = vmatprep.subr.mxu0 0.0
        %2058 = vmatpush1.xpose.msra.mxu0 0.0
        %2059 = vmatprep.subr.mxu0 0.0
        %2060 = vmatpush1.xpose.msra.mxu0 0.0
        %2061 = vmatprep.subr.mxu0 0.0
        %2062 = vmatpush1.xpose.msra.mxu0 0.0
        %2063 = vmatprep.subr.mxu0 0.0
        %2064 = vmatpush1.xpose.msra.mxu0 0.0
        %2065 = vmatprep.subr.mxu0 0.0
        %2066 = vmatpush1.xpose.msra.mxu0 0.0
        %2067 = vmatprep.subr.mxu0 0.0
        %2068 = vmatpush1.xpose.msra.mxu0 0.0
        %2069 = vmatprep.subr.mxu0 0.0
        %2070 = vmatpush1.xpose.msra.mxu0 0.0
        %2071 = vmatprep.subr.mxu0 0.0
        %2072 = vmatpush1.xpose.msra.mxu0 0.0
        %2073 = vmatprep.subr.mxu0 0.0
        %2074 = vmatpush1.xpose.msra.mxu0 0.0
        %2075 = vmatprep.subr.mxu0 0.0
        %2076 = vmatpush1.xpose.msra.mxu0 0.0
        %2077 = vmatprep.subr.mxu0 0.0
        %2078 = vmatpush1.xpose.msra.mxu0 0.0
        %2079 = vmatprep.subr.mxu0 0.0
        %2080 = vmatpush1.xpose.msra.mxu0 0.0
        %2081 = vmatprep.subr.mxu0 0.0
        %2082 = vmatpush1.xpose.msra.mxu0 0.0
        %2083 = vmatprep.subr.mxu0 0.0
        %2084 = vmatpush1.xpose.msra.mxu0 0.0
        %2085 = vmatprep.subr.mxu0 0.0
        %2086 = vmatpush1.xpose.msra.mxu0 0.0
        %2087 = vmatprep.subr.mxu0 0.0
        %2088 = vmatpush1.xpose.msra.mxu0 0.0
        %2089 = vmatprep.subr.mxu0 0.0
        %2090 = vmatpush1.xpose.msra.mxu0 0.0
        %2091 = vmatprep.mubr.f32.mxu0 0.0
        %2092 = vmatmul.mubr.f32.gmra.mrb[0].mxu0 %v2022
        %v2093 = vpop.f32.mrb[0].mxu0
        %v2094 = vadd.f32 0.0, %v2093
        %v2095 = vpop.f32.mrb[0].mxu0
        %2096 = vdwg.mxu0
        %v2098 = vsel %vm1944, %v1263, 0
        %v2101 = vsel %vm1944, %v1567, 0
        %2103 = vmatprep.subr.mxu0 0.0
        %2104 = vmatpush1.xpose.msra.mxu0 %v2101
        %2105 = vmatprep.subr.mxu0 0.0
        %2106 = vmatpush1.xpose.msra.mxu0 0.0
        %2107 = vmatprep.subr.mxu0 0.0
        %2108 = vmatpush1.xpose.msra.mxu0 0.0
        %2109 = vmatprep.subr.mxu0 0.0
        %2110 = vmatpush1.xpose.msra.mxu0 0.0
        %2111 = vmatprep.subr.mxu0 0.0
        %2112 = vmatpush1.xpose.msra.mxu0 0.0
        %2113 = vmatprep.subr.mxu0 0.0
        %2114 = vmatpush1.xpose.msra.mxu0 0.0
        %2115 = vmatprep.subr.mxu0 0.0
        %2116 = vmatpush1.xpose.msra.mxu0 0.0
        %2117 = vmatprep.subr.mxu0 0.0
        %2118 = vmatpush1.xpose.msra.mxu0 0.0
        %2119 = vmatprep.subr.mxu0 0.0
        %2120 = vmatpush1.xpose.msra.mxu0 0.0
        %2121 = vmatprep.subr.mxu0 0.0
        %2122 = vmatpush1.xpose.msra.mxu0 0.0
        %2123 = vmatprep.subr.mxu0 0.0
        %2124 = vmatpush1.xpose.msra.mxu0 0.0
        %2125 = vmatprep.subr.mxu0 0.0
        %2126 = vmatpush1.xpose.msra.mxu0 0.0
        %2127 = vmatprep.subr.mxu0 0.0
        %2128 = vmatpush1.xpose.msra.mxu0 0.0
        %2129 = vmatprep.subr.mxu0 0.0
        %2130 = vmatpush1.xpose.msra.mxu0 0.0
        %2131 = vmatprep.subr.mxu0 0.0
        %2132 = vmatpush1.xpose.msra.mxu0 0.0
        %2133 = vmatprep.subr.mxu0 0.0
        %2134 = vmatpush1.xpose.msra.mxu0 0.0
        %2135 = vmatprep.subr.mxu0 0.0
        %2136 = vmatpush1.xpose.msra.mxu0 0.0
        %2137 = vmatprep.subr.mxu0 0.0
        %2138 = vmatpush1.xpose.msra.mxu0 0.0
        %2139 = vmatprep.subr.mxu0 0.0
        %2140 = vmatpush1.xpose.msra.mxu0 0.0
        %2141 = vmatprep.subr.mxu0 0.0
        %2142 = vmatpush1.xpose.msra.mxu0 0.0
        %2143 = vmatprep.subr.mxu0 0.0
        %2144 = vmatpush1.xpose.msra.mxu0 0.0
        %2145 = vmatprep.subr.mxu0 0.0
        %2146 = vmatpush1.xpose.msra.mxu0 0.0
        %2147 = vmatprep.subr.mxu0 0.0
        %2148 = vmatpush1.xpose.msra.mxu0 0.0
        %2149 = vmatprep.subr.mxu0 0.0
        %2150 = vmatpush1.xpose.msra.mxu0 0.0
        %2151 = vmatprep.subr.mxu0 0.0
        %2152 = vmatpush1.xpose.msra.mxu0 0.0
        %2153 = vmatprep.subr.mxu0 0.0
        %2154 = vmatpush1.xpose.msra.mxu0 0.0
        %2155 = vmatprep.subr.mxu0 0.0
        %2156 = vmatpush1.xpose.msra.mxu0 0.0
        %2157 = vmatprep.subr.mxu0 0.0
        %2158 = vmatpush1.xpose.msra.mxu0 0.0
        %2159 = vmatprep.subr.mxu0 0.0
        %2160 = vmatpush1.xpose.msra.mxu0 0.0
        %2161 = vmatprep.subr.mxu0 0.0
        %2162 = vmatpush1.xpose.msra.mxu0 0.0
        %2163 = vmatprep.subr.mxu0 0.0
        %2164 = vmatpush1.xpose.msra.mxu0 0.0
        %2165 = vmatprep.subr.mxu0 0.0
        %2166 = vmatpush1.xpose.msra.mxu0 0.0
        %2167 = vmatprep.mubr.f32.mxu0 0.0
        %2168 = vmatmul.mubr.f32.gmra.mrb[0].mxu0 %v2098
        %v2169 = vpop.f32.mrb[0].mxu0
        %v2170 = vadd.f32 0.0, %v2169
        %v2171 = vpop.f32.mrb[0].mxu0
        %2172 = vdwg.mxu0
        %v2174 = vsel %vm1944, %v1333, 0
        %v2177 = vsel %vm1944, %v1637, 0
        %2179 = vmatprep.subr.mxu0 0.0
        %2180 = vmatpush1.xpose.msra.mxu0 %v2177
        %2181 = vmatprep.subr.mxu0 0.0
        %2182 = vmatpush1.xpose.msra.mxu0 0.0
        %2183 = vmatprep.subr.mxu0 0.0
        %2184 = vmatpush1.xpose.msra.mxu0 0.0
        %2185 = vmatprep.subr.mxu0 0.0
        %2186 = vmatpush1.xpose.msra.mxu0 0.0
        %2187 = vmatprep.subr.mxu0 0.0
        %2188 = vmatpush1.xpose.msra.mxu0 0.0
        %2189 = vmatprep.subr.mxu0 0.0
        %2190 = vmatpush1.xpose.msra.mxu0 0.0
        %2191 = vmatprep.subr.mxu0 0.0
        %2192 = vmatpush1.xpose.msra.mxu0 0.0
        %2193 = vmatprep.subr.mxu0 0.0
        %2194 = vmatpush1.xpose.msra.mxu0 0.0
        %2195 = vmatprep.subr.mxu0 0.0
        %2196 = vmatpush1.xpose.msra.mxu0 0.0
        %2197 = vmatprep.subr.mxu0 0.0
        %2198 = vmatpush1.xpose.msra.mxu0 0.0
        %2199 = vmatprep.subr.mxu0 0.0
        %2200 = vmatpush1.xpose.msra.mxu0 0.0
        %2201 = vmatprep.subr.mxu0 0.0
        %2202 = vmatpush1.xpose.msra.mxu0 0.0
        %2203 = vmatprep.subr.mxu0 0.0
        %2204 = vmatpush1.xpose.msra.mxu0 0.0
        %2205 = vmatprep.subr.mxu0 0.0
        %2206 = vmatpush1.xpose.msra.mxu0 0.0
        %2207 = vmatprep.subr.mxu0 0.0
        %2208 = vmatpush1.xpose.msra.mxu0 0.0
        %2209 = vmatprep.subr.mxu0 0.0
        %2210 = vmatpush1.xpose.msra.mxu0 0.0
        %2211 = vmatprep.subr.mxu0 0.0
        %2212 = vmatpush1.xpose.msra.mxu0 0.0
        %2213 = vmatprep.subr.mxu0 0.0
        %2214 = vmatpush1.xpose.msra.mxu0 0.0
        %2215 = vmatprep.subr.mxu0 0.0
        %2216 = vmatpush1.xpose.msra.mxu0 0.0
        %2217 = vmatprep.subr.mxu0 0.0
        %2218 = vmatpush1.xpose.msra.mxu0 0.0
        %2219 = vmatprep.subr.mxu0 0.0
        %2220 = vmatpush1.xpose.msra.mxu0 0.0
        %2221 = vmatprep.subr.mxu0 0.0
        %2222 = vmatpush1.xpose.msra.mxu0 0.0
        %2223 = vmatprep.subr.mxu0 0.0
        %2224 = vmatpush1.xpose.msra.mxu0 0.0
        %2225 = vmatprep.subr.mxu0 0.0
        %2226 = vmatpush1.xpose.msra.mxu0 0.0
        %2227 = vmatprep.subr.mxu0 0.0
        %2228 = vmatpush1.xpose.msra.mxu0 0.0
        %2229 = vmatprep.subr.mxu0 0.0
        %2230 = vmatpush1.xpose.msra.mxu0 0.0
        %2231 = vmatprep.subr.mxu0 0.0
        %2232 = vmatpush1.xpose.msra.mxu0 0.0
        %2233 = vmatprep.subr.mxu0 0.0
        %2234 = vmatpush1.xpose.msra.mxu0 0.0
        %2235 = vmatprep.subr.mxu0 0.0
        %2236 = vmatpush1.xpose.msra.mxu0 0.0
        %2237 = vmatprep.subr.mxu0 0.0
        %2238 = vmatpush1.xpose.msra.mxu0 0.0
        %2239 = vmatprep.subr.mxu0 0.0
        %2240 = vmatpush1.xpose.msra.mxu0 0.0
        %2241 = vmatprep.subr.mxu0 0.0
        %2242 = vmatpush1.xpose.msra.mxu0 0.0
        %2243 = vmatprep.mubr.f32.mxu0 0.0
        %2244 = vmatmul.mubr.f32.gmra.mrb[0].mxu0 %v2174
        %v2245 = vpop.f32.mrb[0].mxu0
        %v2246 = vadd.f32 0.0, %v2245
        %v2247 = vpop.f32.mrb[0].mxu0
        %2248 = vdwg.mxu0
        %v2249 = vmul.f32 %v2018, 0.35355338
        %v2250 = vmul.f32 %v2094, 0.35355338
        %v2251 = vmul.f32 %v2170, 0.35355338
        %v2252 = vmul.f32 %v2246, 0.35355338
        %v2253 = vsel %vm1944, %v2249, -inf
        %2254 = vmax.xlane.f32.xlu0 %v2253
        %v2255 = vpop.xlane.xlu0 %2254
        %v2256 = vsel %vm1944, %v2250, -inf
        %2257 = vmax.xlane.f32.xlu0 %v2256
        %v2258 = vpop.xlane.xlu0 %2257
        %v2259 = vsel %vm1944, %v2251, -inf
        %2260 = vmax.xlane.f32.xlu0 %v2259
        %v2261 = vpop.xlane.xlu0 %2260
        %v2262 = vsel %vm1944, %v2252, -inf
        %2263 = vmax.xlane.f32.xlu0 %v2262
        %v2264 = vpop.xlane.xlu0 %2263
        %v2265 = vsub.f32 %v2249, %v2255
        %v2266 = vsub.f32 %v2250, %v2258
        %v2267 = vsub.f32 %v2251, %v2261
        %v2268 = vsub.f32 %v2252, %v2264
        %v2269 = vmul.f32 %v2265, 1.442695
        %v2270 = vpow.pop %v2269
        %v2271 = vmul.f32 %v2266, 1.442695
        %v2272 = vpow.pop %v2271
        %v2273 = vmul.f32 %v2267, 1.442695
        %v2274 = vpow.pop %v2273
        %v2275 = vmul.f32 %v2268, 1.442695
        %v2276 = vpow.pop %v2275
        %v2277 = vsel %vm1944, %v2270, 0.0
        %2278 = vadd.xlane.f32.xlu0 %v2277
        %v2279 = vpop.xlane.xlu0 %2278
        %v2280 = vsel %vm1944, %v2272, 0.0
        %2281 = vadd.xlane.f32.xlu0 %v2280
        %v2282 = vpop.xlane.xlu0 %2281
        %v2283 = vsel %vm1944, %v2274, 0.0
        %2284 = vadd.xlane.f32.xlu0 %v2283
        %v2285 = vpop.xlane.xlu0 %2284
        %v2286 = vsel %vm1944, %v2276, 0.0
        %2287 = vadd.xlane.f32.xlu0 %v2286
        %v2288 = vpop.xlane.xlu0 %2287
        %v2289 = vrcp.pop %v2279
        %v2290 = vrcp.pop %v2282
        %v2291 = vrcp.pop %v2285
        %v2292 = vrcp.pop %v2288
        %v2293 = vmul.f32 %v2270, %v2289
        %v2294 = vmul.f32 %v2272, %v2290
        %v2295 = vmul.f32 %v2274, %v2291
        %v2296 = vmul.f32 %v2276, %v2292
        %v2298 = vsel %vm1944, %v2293, 0
        %2300 = vmatprep.subr.mxu0 0.0
        %2301 = vmatpush1.msra.mxu0 %v1731
        %2302 = vmatprep.subr.mxu0 0.0
        %2303 = vmatpush1.msra.mxu0 0.0
        %2304 = vmatprep.subr.mxu0 0.0
        %2305 = vmatpush1.msra.mxu0 0.0
        %2306 = vmatprep.subr.mxu0 0.0
        %2307 = vmatpush1.msra.mxu0 0.0
        %2308 = vmatprep.subr.mxu0 0.0
        %2309 = vmatpush1.msra.mxu0 0.0
        %2310 = vmatprep.subr.mxu0 0.0
        %2311 = vmatpush1.msra.mxu0 0.0
        %2312 = vmatprep.subr.mxu0 0.0
        %2313 = vmatpush1.msra.mxu0 0.0
        %2314 = vmatprep.subr.mxu0 0.0
        %2315 = vmatpush1.msra.mxu0 0.0
        %2316 = vmatprep.subr.mxu0 0.0
        %2317 = vmatpush1.msra.mxu0 0.0
        %2318 = vmatprep.subr.mxu0 0.0
        %2319 = vmatpush1.msra.mxu0 0.0
        %2320 = vmatprep.subr.mxu0 0.0
        %2321 = vmatpush1.msra.mxu0 0.0
        %2322 = vmatprep.subr.mxu0 0.0
        %2323 = vmatpush1.msra.mxu0 0.0
        %2324 = vmatprep.subr.mxu0 0.0
        %2325 = vmatpush1.msra.mxu0 0.0
        %2326 = vmatprep.subr.mxu0 0.0
        %2327 = vmatpush1.msra.mxu0 0.0
        %2328 = vmatprep.subr.mxu0 0.0
        %2329 = vmatpush1.msra.mxu0 0.0
        %2330 = vmatprep.subr.mxu0 0.0
        %2331 = vmatpush1.msra.mxu0 0.0
        %2332 = vmatprep.subr.mxu0 0.0
        %2333 = vmatpush1.msra.mxu0 0.0
        %2334 = vmatprep.subr.mxu0 0.0
        %2335 = vmatpush1.msra.mxu0 0.0
        %2336 = vmatprep.subr.mxu0 0.0
        %2337 = vmatpush1.msra.mxu0 0.0
        %2338 = vmatprep.subr.mxu0 0.0
        %2339 = vmatpush1.msra.mxu0 0.0
        %2340 = vmatprep.subr.mxu0 0.0
        %2341 = vmatpush1.msra.mxu0 0.0
        %2342 = vmatprep.subr.mxu0 0.0
        %2343 = vmatpush1.msra.mxu0 0.0
        %2344 = vmatprep.subr.mxu0 0.0
        %2345 = vmatpush1.msra.mxu0 0.0
        %2346 = vmatprep.subr.mxu0 0.0
        %2347 = vmatpush1.msra.mxu0 0.0
        %2348 = vmatprep.subr.mxu0 0.0
        %2349 = vmatpush1.msra.mxu0 0.0
        %2350 = vmatprep.subr.mxu0 0.0
        %2351 = vmatpush1.msra.mxu0 0.0
        %2352 = vmatprep.subr.mxu0 0.0
        %2353 = vmatpush1.msra.mxu0 0.0
        %2354 = vmatprep.subr.mxu0 0.0
        %2355 = vmatpush1.msra.mxu0 0.0
        %2356 = vmatprep.subr.mxu0 0.0
        %2357 = vmatpush1.msra.mxu0 0.0
        %2358 = vmatprep.subr.mxu0 0.0
        %2359 = vmatpush1.msra.mxu0 0.0
        %2360 = vmatprep.subr.mxu0 0.0
        %2361 = vmatpush1.msra.mxu0 0.0
        %2362 = vmatprep.subr.mxu0 0.0
        %2363 = vmatpush1.msra.mxu0 0.0
        %2364 = vmatprep.mubr.f32.mxu0 0.0
        %2365 = vmatmul.mubr.f32.gmra.mrb[0].mxu0 %v2298
        %v2366 = vpop.f32.mrb[0].mxu0
        %v2367 = vadd.f32 0.0, %v2366
        %v2368 = vpop.f32.mrb[0].mxu0
        %2369 = vdwg.mxu0
        %v2371 = vsel %vm1944, %v2294, 0
        %2373 = vmatprep.subr.mxu0 0.0
        %2374 = vmatpush1.msra.mxu0 %v1801
        %2375 = vmatprep.subr.mxu0 0.0
        %2376 = vmatpush1.msra.mxu0 0.0
        %2377 = vmatprep.subr.mxu0 0.0
        %2378 = vmatpush1.msra.mxu0 0.0
        %2379 = vmatprep.subr.mxu0 0.0
        %2380 = vmatpush1.msra.mxu0 0.0
        %2381 = vmatprep.subr.mxu0 0.0
        %2382 = vmatpush1.msra.mxu0 0.0
        %2383 = vmatprep.subr.mxu0 0.0
        %2384 = vmatpush1.msra.mxu0 0.0
        %2385 = vmatprep.subr.mxu0 0.0
        %2386 = vmatpush1.msra.mxu0 0.0
        %2387 = vmatprep.subr.mxu0 0.0
        %2388 = vmatpush1.msra.mxu0 0.0
        %2389 = vmatprep.subr.mxu0 0.0
        %2390 = vmatpush1.msra.mxu0 0.0
        %2391 = vmatprep.subr.mxu0 0.0
        %2392 = vmatpush1.msra.mxu0 0.0
        %2393 = vmatprep.subr.mxu0 0.0
        %2394 = vmatpush1.msra.mxu0 0.0
        %2395 = vmatprep.subr.mxu0 0.0
        %2396 = vmatpush1.msra.mxu0 0.0
        %2397 = vmatprep.subr.mxu0 0.0
        %2398 = vmatpush1.msra.mxu0 0.0
        %2399 = vmatprep.subr.mxu0 0.0
        %2400 = vmatpush1.msra.mxu0 0.0
        %2401 = vmatprep.subr.mxu0 0.0
        %2402 = vmatpush1.msra.mxu0 0.0
        %2403 = vmatprep.subr.mxu0 0.0
        %2404 = vmatpush1.msra.mxu0 0.0
        %2405 = vmatprep.subr.mxu0 0.0
        %2406 = vmatpush1.msra.mxu0 0.0
        %2407 = vmatprep.subr.mxu0 0.0
        %2408 = vmatpush1.msra.mxu0 0.0
        %2409 = vmatprep.subr.mxu0 0.0
        %2410 = vmatpush1.msra.mxu0 0.0
        %2411 = vmatprep.subr.mxu0 0.0
        %2412 = vmatpush1.msra.mxu0 0.0
        %2413 = vmatprep.subr.mxu0 0.0
        %2414 = vmatpush1.msra.mxu0 0.0
        %2415 = vmatprep.subr.mxu0 0.0
        %2416 = vmatpush1.msra.mxu0 0.0
        %2417 = vmatprep.subr.mxu0 0.0
        %2418 = vmatpush1.msra.mxu0 0.0
        %2419 = vmatprep.subr.mxu0 0.0
        %2420 = vmatpush1.msra.mxu0 0.0
        %2421 = vmatprep.subr.mxu0 0.0
        %2422 = vmatpush1.msra.mxu0 0.0
        %2423 = vmatprep.subr.mxu0 0.0
        %2424 = vmatpush1.msra.mxu0 0.0
        %2425 = vmatprep.subr.mxu0 0.0
        %2426 = vmatpush1.msra.mxu0 0.0
        %2427 = vmatprep.subr.mxu0 0.0
        %2428 = vmatpush1.msra.mxu0 0.0
        %2429 = vmatprep.subr.mxu0 0.0
        %2430 = vmatpush1.msra.mxu0 0.0
        %2431 = vmatprep.subr.mxu0 0.0
        %2432 = vmatpush1.msra.mxu0 0.0
        %2433 = vmatprep.subr.mxu0 0.0
        %2434 = vmatpush1.msra.mxu0 0.0
        %2435 = vmatprep.subr.mxu0 0.0
        %2436 = vmatpush1.msra.mxu0 0.0
        %2437 = vmatprep.mubr.f32.mxu0 0.0
        %2438 = vmatmul.mubr.f32.gmra.mrb[0].mxu0 %v2371
        %v2439 = vpop.f32.mrb[0].mxu0
        %v2440 = vadd.f32 0.0, %v2439
        %v2441 = vpop.f32.mrb[0].mxu0
        %2442 = vdwg.mxu0
        %v2444 = vsel %vm1944, %v2295, 0
        %2446 = vmatprep.subr.mxu0 0.0
        %2447 = vmatpush1.msra.mxu0 %v1871
        %2448 = vmatprep.subr.mxu0 0.0
        %2449 = vmatpush1.msra.mxu0 0.0
        %2450 = vmatprep.subr.mxu0 0.0
        %2451 = vmatpush1.msra.mxu0 0.0
        %2452 = vmatprep.subr.mxu0 0.0
        %2453 = vmatpush1.msra.mxu0 0.0
        %2454 = vmatprep.subr.mxu0 0.0
        %2455 = vmatpush1.msra.mxu0 0.0
        %2456 = vmatprep.subr.mxu0 0.0
        %2457 = vmatpush1.msra.mxu0 0.0
        %2458 = vmatprep.subr.mxu0 0.0
        %2459 = vmatpush1.msra.mxu0 0.0
        %2460 = vmatprep.subr.mxu0 0.0
        %2461 = vmatpush1.msra.mxu0 0.0
        %2462 = vmatprep.subr.mxu0 0.0
        %2463 = vmatpush1.msra.mxu0 0.0
        %2464 = vmatprep.subr.mxu0 0.0
        %2465 = vmatpush1.msra.mxu0 0.0
        %2466 = vmatprep.subr.mxu0 0.0
        %2467 = vmatpush1.msra.mxu0 0.0
        %2468 = vmatprep.subr.mxu0 0.0
        %2469 = vmatpush1.msra.mxu0 0.0
        %2470 = vmatprep.subr.mxu0 0.0
        %2471 = vmatpush1.msra.mxu0 0.0
        %2472 = vmatprep.subr.mxu0 0.0
        %2473 = vmatpush1.msra.mxu0 0.0
        %2474 = vmatprep.subr.mxu0 0.0
        %2475 = vmatpush1.msra.mxu0 0.0
        %2476 = vmatprep.subr.mxu0 0.0
        %2477 = vmatpush1.msra.mxu0 0.0
        %2478 = vmatprep.subr.mxu0 0.0
        %2479 = vmatpush1.msra.mxu0 0.0
        %2480 = vmatprep.subr.mxu0 0.0
        %2481 = vmatpush1.msra.mxu0 0.0
        %2482 = vmatprep.subr.mxu0 0.0
        %2483 = vmatpush1.msra.mxu0 0.0
        %2484 = vmatprep.subr.mxu0 0.0
        %2485 = vmatpush1.msra.mxu0 0.0
        %2486 = vmatprep.subr.mxu0 0.0
        %2487 = vmatpush1.msra.mxu0 0.0
        %2488 = vmatprep.subr.mxu0 0.0
        %2489 = vmatpush1.msra.mxu0 0.0
        %2490 = vmatprep.subr.mxu0 0.0
        %2491 = vmatpush1.msra.mxu0 0.0
        %2492 = vmatprep.subr.mxu0 0.0
        %2493 = vmatpush1.msra.mxu0 0.0
        %2494 = vmatprep.subr.mxu0 0.0
        %2495 = vmatpush1.msra.mxu0 0.0
        %2496 = vmatprep.subr.mxu0 0.0
        %2497 = vmatpush1.msra.mxu0 0.0
        %2498 = vmatprep.subr.mxu0 0.0
        %2499 = vmatpush1.msra.mxu0 0.0
        %2500 = vmatprep.subr.mxu0 0.0
        %2501 = vmatpush1.msra.mxu0 0.0
        %2502 = vmatprep.subr.mxu0 0.0
        %2503 = vmatpush1.msra.mxu0 0.0
        %2504 = vmatprep.subr.mxu0 0.0
        %2505 = vmatpush1.msra.mxu0 0.0
        %2506 = vmatprep.subr.mxu0 0.0
        %2507 = vmatpush1.msra.mxu0 0.0
        %2508 = vmatprep.subr.mxu0 0.0
        %2509 = vmatpush1.msra.mxu0 0.0
        %2510 = vmatprep.mubr.f32.mxu0 0.0
        %2511 = vmatmul.mubr.f32.gmra.mrb[0].mxu0 %v2444
        %v2512 = vpop.f32.mrb[0].mxu0
        %v2513 = vadd.f32 0.0, %v2512
        %v2514 = vpop.f32.mrb[0].mxu0
        %2515 = vdwg.mxu0
        %v2517 = vsel %vm1944, %v2296, 0
        %2519 = vmatprep.subr.mxu0 0.0
        %2520 = vmatpush1.msra.mxu0 %v1941
        %2521 = vmatprep.subr.mxu0 0.0
        %2522 = vmatpush1.msra.mxu0 0.0
        %2523 = vmatprep.subr.mxu0 0.0
        %2524 = vmatpush1.msra.mxu0 0.0
        %2525 = vmatprep.subr.mxu0 0.0
        %2526 = vmatpush1.msra.mxu0 0.0
        %2527 = vmatprep.subr.mxu0 0.0
        %2528 = vmatpush1.msra.mxu0 0.0
        %2529 = vmatprep.subr.mxu0 0.0
        %2530 = vmatpush1.msra.mxu0 0.0
        %2531 = vmatprep.subr.mxu0 0.0
        %2532 = vmatpush1.msra.mxu0 0.0
        %2533 = vmatprep.subr.mxu0 0.0
        %2534 = vmatpush1.msra.mxu0 0.0
        %2535 = vmatprep.subr.mxu0 0.0
        %2536 = vmatpush1.msra.mxu0 0.0
        %2537 = vmatprep.subr.mxu0 0.0
        %2538 = vmatpush1.msra.mxu0 0.0
        %2539 = vmatprep.subr.mxu0 0.0
        %2540 = vmatpush1.msra.mxu0 0.0
        %2541 = vmatprep.subr.mxu0 0.0
        %2542 = vmatpush1.msra.mxu0 0.0
        %2543 = vmatprep.subr.mxu0 0.0
        %2544 = vmatpush1.msra.mxu0 0.0
        %2545 = vmatprep.subr.mxu0 0.0
        %2546 = vmatpush1.msra.mxu0 0.0
        %2547 = vmatprep.subr.mxu0 0.0
        %2548 = vmatpush1.msra.mxu0 0.0
        %2549 = vmatprep.subr.mxu0 0.0
        %2550 = vmatpush1.msra.mxu0 0.0
        %2551 = vmatprep.subr.mxu0 0.0
        %2552 = vmatpush1.msra.mxu0 0.0
        %2553 = vmatprep.subr.mxu0 0.0
        %2554 = vmatpush1.msra.mxu0 0.0
        %2555 = vmatprep.subr.mxu0 0.0
        %2556 = vmatpush1.msra.mxu0 0.0
        %2557 = vmatprep.subr.mxu0 0.0
        %2558 = vmatpush1.msra.mxu0 0.0
        %2559 = vmatprep.subr.mxu0 0.0
        %2560 = vmatpush1.msra.mxu0 0.0
        %2561 = vmatprep.subr.mxu0 0.0
        %2562 = vmatpush1.msra.mxu0 0.0
        %2563 = vmatprep.subr.mxu0 0.0
        %2564 = vmatpush1.msra.mxu0 0.0
        %2565 = vmatprep.subr.mxu0 0.0
        %2566 = vmatpush1.msra.mxu0 0.0
        %2567 = vmatprep.subr.mxu0 0.0
        %2568 = vmatpush1.msra.mxu0 0.0
        %2569 = vmatprep.subr.mxu0 0.0
        %2570 = vmatpush1.msra.mxu0 0.0
        %2571 = vmatprep.subr.mxu0 0.0
        %2572 = vmatpush1.msra.mxu0 0.0
        %2573 = vmatprep.subr.mxu0 0.0
        %2574 = vmatpush1.msra.mxu0 0.0
        %2575 = vmatprep.subr.mxu0 0.0
        %2576 = vmatpush1.msra.mxu0 0.0
        %2577 = vmatprep.subr.mxu0 0.0
        %2578 = vmatpush1.msra.mxu0 0.0
        %2579 = vmatprep.subr.mxu0 0.0
        %2580 = vmatpush1.msra.mxu0 0.0
        %2581 = vmatprep.subr.mxu0 0.0
        %2582 = vmatpush1.msra.mxu0 0.0
        %2583 = vmatprep.mubr.f32.mxu0 0.0
        %2584 = vmatmul.mubr.f32.gmra.mrb[0].mxu0 %v2517
        %v2585 = vpop.f32.mrb[0].mxu0
        %v2586 = vadd.f32 0.0, %v2585
        %v2587 = vpop.f32.mrb[0].mxu0
        %2588 = vdwg.mxu0
        %v2590 = vsel %vm1944, %v2367, 0
        %2592 = vmatprep.subr.mxu0 0.0
        %2593 = vmatpush1.msra.mxu0 %v1023
        %2594 = vmatprep.subr.mxu0 0.0
        %2595 = vmatpush1.msra.mxu0 0.0
        %2596 = vmatprep.subr.mxu0 0.0
        %2597 = vmatpush1.msra.mxu0 0.0
        %2598 = vmatprep.subr.mxu0 0.0
        %2599 = vmatpush1.msra.mxu0 0.0
        %2600 = vmatprep.subr.mxu0 0.0
        %2601 = vmatpush1.msra.mxu0 0.0
        %2602 = vmatprep.subr.mxu0 0.0
        %2603 = vmatpush1.msra.mxu0 0.0
        %2604 = vmatprep.subr.mxu0 0.0
        %2605 = vmatpush1.msra.mxu0 0.0
        %2606 = vmatprep.subr.mxu0 0.0
        %2607 = vmatpush1.msra.mxu0 0.0
        %2608 = vmatprep.subr.mxu0 0.0
        %2609 = vmatpush1.msra.mxu0 0.0
        %2610 = vmatprep.subr.mxu0 0.0
        %2611 = vmatpush1.msra.mxu0 0.0
        %2612 = vmatprep.subr.mxu0 0.0
        %2613 = vmatpush1.msra.mxu0 0.0
        %2614 = vmatprep.subr.mxu0 0.0
        %2615 = vmatpush1.msra.mxu0 0.0
        %2616 = vmatprep.subr.mxu0 0.0
        %2617 = vmatpush1.msra.mxu0 0.0
        %2618 = vmatprep.subr.mxu0 0.0
        %2619 = vmatpush1.msra.mxu0 0.0
        %2620 = vmatprep.subr.mxu0 0.0
        %2621 = vmatpush1.msra.mxu0 0.0
        %2622 = vmatprep.subr.mxu0 0.0
        %2623 = vmatpush1.msra.mxu0 0.0
        %2624 = vmatprep.subr.mxu0 0.0
        %2625 = vmatpush1.msra.mxu0 0.0
        %2626 = vmatprep.subr.mxu0 0.0
        %2627 = vmatpush1.msra.mxu0 0.0
        %2628 = vmatprep.subr.mxu0 0.0
        %2629 = vmatpush1.msra.mxu0 0.0
        %2630 = vmatprep.subr.mxu0 0.0
        %2631 = vmatpush1.msra.mxu0 0.0
        %2632 = vmatprep.subr.mxu0 0.0
        %2633 = vmatpush1.msra.mxu0 0.0
        %2634 = vmatprep.subr.mxu0 0.0
        %2635 = vmatpush1.msra.mxu0 0.0
        %2636 = vmatprep.subr.mxu0 0.0
        %2637 = vmatpush1.msra.mxu0 0.0
        %2638 = vmatprep.subr.mxu0 0.0
        %2639 = vmatpush1.msra.mxu0 0.0
        %2640 = vmatprep.subr.mxu0 0.0
        %2641 = vmatpush1.msra.mxu0 0.0
        %2642 = vmatprep.subr.mxu0 0.0
        %2643 = vmatpush1.msra.mxu0 0.0
        %2644 = vmatprep.subr.mxu0 0.0
        %2645 = vmatpush1.msra.mxu0 0.0
        %2646 = vmatprep.subr.mxu0 0.0
        %2647 = vmatpush1.msra.mxu0 0.0
        %2648 = vmatprep.subr.mxu0 0.0
        %2649 = vmatpush1.msra.mxu0 0.0
        %2650 = vmatprep.subr.mxu0 0.0
        %2651 = vmatpush1.msra.mxu0 0.0
        %2652 = vmatprep.subr.mxu0 0.0
        %2653 = vmatpush1.msra.mxu0 0.0
        %2654 = vmatprep.subr.mxu0 0.0
        %2655 = vmatpush1.msra.mxu0 0.0
        %2656 = vmatprep.mubr.f32.mxu0 0.0
        %2657 = vmatmul.mubr.f32.gmra.mrb[0].mxu0 %v2590
        %v2658 = vpop.f32.mrb[0].mxu0
        %v2659 = vadd.f32 0.0, %v2658
        %v2660 = vpop.f32.mrb[0].mxu0
        %2661 = vdwg.mxu0
        %v2663 = vsel %vm1944, %v2440, 0
        %2665 = vmatprep.subr.mxu0 0.0
        %2666 = vmatpush1.msra.mxu0 %v1024
        %2667 = vmatprep.subr.mxu0 0.0
        %2668 = vmatpush1.msra.mxu0 0.0
        %2669 = vmatprep.subr.mxu0 0.0
        %2670 = vmatpush1.msra.mxu0 0.0
        %2671 = vmatprep.subr.mxu0 0.0
        %2672 = vmatpush1.msra.mxu0 0.0
        %2673 = vmatprep.subr.mxu0 0.0
        %2674 = vmatpush1.msra.mxu0 0.0
        %2675 = vmatprep.subr.mxu0 0.0
        %2676 = vmatpush1.msra.mxu0 0.0
        %2677 = vmatprep.subr.mxu0 0.0
        %2678 = vmatpush1.msra.mxu0 0.0
        %2679 = vmatprep.subr.mxu0 0.0
        %2680 = vmatpush1.msra.mxu0 0.0
        %2681 = vmatprep.subr.mxu0 0.0
        %2682 = vmatpush1.msra.mxu0 0.0
        %2683 = vmatprep.subr.mxu0 0.0
        %2684 = vmatpush1.msra.mxu0 0.0
        %2685 = vmatprep.subr.mxu0 0.0
        %2686 = vmatpush1.msra.mxu0 0.0
        %2687 = vmatprep.subr.mxu0 0.0
        %2688 = vmatpush1.msra.mxu0 0.0
        %2689 = vmatprep.subr.mxu0 0.0
        %2690 = vmatpush1.msra.mxu0 0.0
        %2691 = vmatprep.subr.mxu0 0.0
        %2692 = vmatpush1.msra.mxu0 0.0
        %2693 = vmatprep.subr.mxu0 0.0
        %2694 = vmatpush1.msra.mxu0 0.0
        %2695 = vmatprep.subr.mxu0 0.0
        %2696 = vmatpush1.msra.mxu0 0.0
        %2697 = vmatprep.subr.mxu0 0.0
        %2698 = vmatpush1.msra.mxu0 0.0
        %2699 = vmatprep.subr.mxu0 0.0
        %2700 = vmatpush1.msra.mxu0 0.0
        %2701 = vmatprep.subr.mxu0 0.0
        %2702 = vmatpush1.msra.mxu0 0.0
        %2703 = vmatprep.subr.mxu0 0.0
        %2704 = vmatpush1.msra.mxu0 0.0
        %2705 = vmatprep.subr.mxu0 0.0
        %2706 = vmatpush1.msra.mxu0 0.0
        %2707 = vmatprep.subr.mxu0 0.0
        %2708 = vmatpush1.msra.mxu0 0.0
        %2709 = vmatprep.subr.mxu0 0.0
        %2710 = vmatpush1.msra.mxu0 0.0
        %2711 = vmatprep.subr.mxu0 0.0
        %2712 = vmatpush1.msra.mxu0 0.0
        %2713 = vmatprep.subr.mxu0 0.0
        %2714 = vmatpush1.msra.mxu0 0.0
        %2715 = vmatprep.subr.mxu0 0.0
        %2716 = vmatpush1.msra.mxu0 0.0
        %2717 = vmatprep.subr.mxu0 0.0
        %2718 = vmatpush1.msra.mxu0 0.0
        %2719 = vmatprep.subr.mxu0 0.0
        %2720 = vmatpush1.msra.mxu0 0.0
        %2721 = vmatprep.subr.mxu0 0.0
        %2722 = vmatpush1.msra.mxu0 0.0
        %2723 = vmatprep.subr.mxu0 0.0
        %2724 = vmatpush1.msra.mxu0 0.0
        %2725 = vmatprep.subr.mxu0 0.0
        %2726 = vmatpush1.msra.mxu0 0.0
        %2727 = vmatprep.subr.mxu0 0.0
        %2728 = vmatpush1.msra.mxu0 0.0
        %2729 = vmatprep.mubr.f32.mxu0 0.0
        %2730 = vmatmul.mubr.f32.gmra.mrb[0].mxu0 %v2663
        %v2731 = vpop.f32.mrb[0].mxu0
        %v2732 = vadd.f32 0.0, %v2731
        %v2733 = vpop.f32.mrb[0].mxu0
        %2734 = vdwg.mxu0
        %v2736 = vsel %vm1944, %v2513, 0
        %2738 = vmatprep.subr.mxu0 0.0
        %2739 = vmatpush1.msra.mxu0 %v1025
        %2740 = vmatprep.subr.mxu0 0.0
        %2741 = vmatpush1.msra.mxu0 0.0
        %2742 = vmatprep.subr.mxu0 0.0
        %2743 = vmatpush1.msra.mxu0 0.0
        %2744 = vmatprep.subr.mxu0 0.0
        %2745 = vmatpush1.msra.mxu0 0.0
        %2746 = vmatprep.subr.mxu0 0.0
        %2747 = vmatpush1.msra.mxu0 0.0
        %2748 = vmatprep.subr.mxu0 0.0
        %2749 = vmatpush1.msra.mxu0 0.0
        %2750 = vmatprep.subr.mxu0 0.0
        %2751 = vmatpush1.msra.mxu0 0.0
        %2752 = vmatprep.subr.mxu0 0.0
        %2753 = vmatpush1.msra.mxu0 0.0
        %2754 = vmatprep.subr.mxu0 0.0
        %2755 = vmatpush1.msra.mxu0 0.0
        %2756 = vmatprep.subr.mxu0 0.0
        %2757 = vmatpush1.msra.mxu0 0.0
        %2758 = vmatprep.subr.mxu0 0.0
        %2759 = vmatpush1.msra.mxu0 0.0
        %2760 = vmatprep.subr.mxu0 0.0
        %2761 = vmatpush1.msra.mxu0 0.0
        %2762 = vmatprep.subr.mxu0 0.0
        %2763 = vmatpush1.msra.mxu0 0.0
        %2764 = vmatprep.subr.mxu0 0.0
        %2765 = vmatpush1.msra.mxu0 0.0
        %2766 = vmatprep.subr.mxu0 0.0
        %2767 = vmatpush1.msra.mxu0 0.0
        %2768 = vmatprep.subr.mxu0 0.0
        %2769 = vmatpush1.msra.mxu0 0.0
        %2770 = vmatprep.subr.mxu0 0.0
        %2771 = vmatpush1.msra.mxu0 0.0
        %2772 = vmatprep.subr.mxu0 0.0
        %2773 = vmatpush1.msra.mxu0 0.0
        %2774 = vmatprep.subr.mxu0 0.0
        %2775 = vmatpush1.msra.mxu0 0.0
        %2776 = vmatprep.subr.mxu0 0.0
        %2777 = vmatpush1.msra.mxu0 0.0
        %2778 = vmatprep.subr.mxu0 0.0
        %2779 = vmatpush1.msra.mxu0 0.0
        %2780 = vmatprep.subr.mxu0 0.0
        %2781 = vmatpush1.msra.mxu0 0.0
        %2782 = vmatprep.subr.mxu0 0.0
        %2783 = vmatpush1.msra.mxu0 0.0
        %2784 = vmatprep.subr.mxu0 0.0
        %2785 = vmatpush1.msra.mxu0 0.0
        %2786 = vmatprep.subr.mxu0 0.0
        %2787 = vmatpush1.msra.mxu0 0.0
        %2788 = vmatprep.subr.mxu0 0.0
        %2789 = vmatpush1.msra.mxu0 0.0
        %2790 = vmatprep.subr.mxu0 0.0
        %2791 = vmatpush1.msra.mxu0 0.0
        %2792 = vmatprep.subr.mxu0 0.0
        %2793 = vmatpush1.msra.mxu0 0.0
        %2794 = vmatprep.subr.mxu0 0.0
        %2795 = vmatpush1.msra.mxu0 0.0
        %2796 = vmatprep.subr.mxu0 0.0
        %2797 = vmatpush1.msra.mxu0 0.0
        %2798 = vmatprep.subr.mxu0 0.0
        %2799 = vmatpush1.msra.mxu0 0.0
        %2800 = vmatprep.subr.mxu0 0.0
        %2801 = vmatpush1.msra.mxu0 0.0
        %2802 = vmatprep.mubr.f32.mxu0 0.0
        %2803 = vmatmul.mubr.f32.gmra.mrb[0].mxu0 %v2736
        %v2804 = vpop.f32.mrb[0].mxu0
        %v2805 = vadd.f32 0.0, %v2804
        %v2806 = vpop.f32.mrb[0].mxu0
        %2807 = vdwg.mxu0
        %v2809 = vsel %vm1944, %v2586, 0
        %2811 = vmatprep.subr.mxu0 0.0
        %2812 = vmatpush1.msra.mxu0 %v1026
        %2813 = vmatprep.subr.mxu0 0.0
        %2814 = vmatpush1.msra.mxu0 0.0
        %2815 = vmatprep.subr.mxu0 0.0
        %2816 = vmatpush1.msra.mxu0 0.0
        %2817 = vmatprep.subr.mxu0 0.0
        %2818 = vmatpush1.msra.mxu0 0.0
        %2819 = vmatprep.subr.mxu0 0.0
        %2820 = vmatpush1.msra.mxu0 0.0
        %2821 = vmatprep.subr.mxu0 0.0
        %2822 = vmatpush1.msra.mxu0 0.0
        %2823 = vmatprep.subr.mxu0 0.0
        %2824 = vmatpush1.msra.mxu0 0.0
        %2825 = vmatprep.subr.mxu0 0.0
        %2826 = vmatpush1.msra.mxu0 0.0
        %2827 = vmatprep.subr.mxu0 0.0
        %2828 = vmatpush1.msra.mxu0 0.0
        %2829 = vmatprep.subr.mxu0 0.0
        %2830 = vmatpush1.msra.mxu0 0.0
        %2831 = vmatprep.subr.mxu0 0.0
        %2832 = vmatpush1.msra.mxu0 0.0
        %2833 = vmatprep.subr.mxu0 0.0
        %2834 = vmatpush1.msra.mxu0 0.0
        %2835 = vmatprep.subr.mxu0 0.0
        %2836 = vmatpush1.msra.mxu0 0.0
        %2837 = vmatprep.subr.mxu0 0.0
        %2838 = vmatpush1.msra.mxu0 0.0
        %2839 = vmatprep.subr.mxu0 0.0
        %2840 = vmatpush1.msra.mxu0 0.0
        %2841 = vmatprep.subr.mxu0 0.0
        %2842 = vmatpush1.msra.mxu0 0.0
        %2843 = vmatprep.subr.mxu0 0.0
        %2844 = vmatpush1.msra.mxu0 0.0
        %2845 = vmatprep.subr.mxu0 0.0
        %2846 = vmatpush1.msra.mxu0 0.0
        %2847 = vmatprep.subr.mxu0 0.0
        %2848 = vmatpush1.msra.mxu0 0.0
        %2849 = vmatprep.subr.mxu0 0.0
        %2850 = vmatpush1.msra.mxu0 0.0
        %2851 = vmatprep.subr.mxu0 0.0
        %2852 = vmatpush1.msra.mxu0 0.0
        %2853 = vmatprep.subr.mxu0 0.0
        %2854 = vmatpush1.msra.mxu0 0.0
        %2855 = vmatprep.subr.mxu0 0.0
        %2856 = vmatpush1.msra.mxu0 0.0
        %2857 = vmatprep.subr.mxu0 0.0
        %2858 = vmatpush1.msra.mxu0 0.0
        %2859 = vmatprep.subr.mxu0 0.0
        %2860 = vmatpush1.msra.mxu0 0.0
        %2861 = vmatprep.subr.mxu0 0.0
        %2862 = vmatpush1.msra.mxu0 0.0
        %2863 = vmatprep.subr.mxu0 0.0
        %2864 = vmatpush1.msra.mxu0 0.0
        %2865 = vmatprep.subr.mxu0 0.0
        %2866 = vmatpush1.msra.mxu0 0.0
        %2867 = vmatprep.subr.mxu0 0.0
        %2868 = vmatpush1.msra.mxu0 0.0
        %2869 = vmatprep.subr.mxu0 0.0
        %2870 = vmatpush1.msra.mxu0 0.0
        %2871 = vmatprep.subr.mxu0 0.0
        %2872 = vmatpush1.msra.mxu0 0.0
        %2873 = vmatprep.subr.mxu0 0.0
        %2874 = vmatpush1.msra.mxu0 0.0
        %2875 = vmatprep.mubr.f32.mxu0 0.0
        %2876 = vmatmul.mubr.f32.gmra.mrb[0].mxu0 %v2809
        %v2877 = vpop.f32.mrb[0].mxu0
        %v2878 = vadd.f32 0.0, %v2877
        %v2879 = vpop.f32.mrb[0].mxu0
        %2880 = vdwg.mxu0
        %v2881 = vsel %vm1052, %v2659, 0.0
        %v2882 = vsel %vm1052, %v2732, 0.0
        %v2883 = vadd.f32 %v2881, %v2882
        %v2884 = vsel %vm1052, %v2805, 0.0
        %v2885 = vadd.f32 %v2883, %v2884
        %v2886 = vsel %vm1052, %v2878, 0.0
        %v2887 = vadd.f32 %v2885, %v2886
        %v2889 = vlaneseq
        %v2890 = vshrl.u32 %v2889, 7
        %v2891 = vsub.s32 0, %v2890
        %v2892 = vrot.slane %v1027, %v2891
        %v2894 = vadd.f32 %v2887, %v2892
        %2895 = vst.msk [vmem:[%s945] sm:$0xff] %vm1944, %v2293
        %2896 = vst.msk [vmem:[%s945 + $0x8] sm:$0xff] %vm1944, %v2294
        %2897 = vst.msk [vmem:[%s945 + $0x10] sm:$0xff] %vm1944, %v2295
        %2898 = vst.msk [vmem:[%s945 + $0x18] sm:$0xff] %vm1944, %v2296
        %v2899 = vadd.f32 %v961, %v2894
        %v2900 = vld [vmem:[%s45] sm:$0x1]
        %v2901 = vld [vmem:[%s47] sm:$0x1]
        %v2902 = vsel %vm1052, %v2899, 0.0
        %2903 = vadd.xlane.f32.xlu0 %v2902
        %v2904 = vpop.xlane.xlu0 %2903
        %v2905 = vrcp.pop 32.0
        %v2906 = vmul.f32 %v2904, %v2905
        %v2907 = vsub.f32 %v2899, %v2906
        %v2908 = vmul.f32 %v2907, %v2907
        %v2909 = vsel %vm1052, %v2908, 0.0
        %2910 = vadd.xlane.f32.xlu0 %v2909
        %v2911 = vpop.xlane.xlu0 %2910
        %v2912 = vmul.f32 %v2911, %v2905
        %v2913 = vadd.f32 %v2912, 1e-05
        %v2914 = vrsqrt.pop %v2913
        %v2915 = vmul.f32 %v2907, %v2914
        %v2917 = vlaneseq
        %v2918 = vshrl.u32 %v2917, 7
        %v2919 = vsub.s32 0, %v2918
        %v2920 = vrot.slane %v2900, %v2919
        %v2922 = vmul.f32 %v2915, %v2920
        %v2924 = vlaneseq
        %v2925 = vshrl.u32 %v2924, 7
        %v2926 = vsub.s32 0, %v2925
        %v2927 = vrot.slane %v2901, %v2926
        %v2929 = vadd.f32 %v2922, %v2927
        %v2930 = vld [vmem:[%s21] sm:$0xff]
        %v2931 = vld [vmem:[%s21 + $0x8] sm:$0xff]
        %v2932 = vld [vmem:[%s21 + $0x10] sm:$0xff]
        %v2933 = vld [vmem:[%s21 + $0x18] sm:$0xff]
        %v2934 = vld [vmem:[%s21 + $0x20] sm:$0xff]
        %v2935 = vld [vmem:[%s21 + $0x28] sm:$0xff]
        %v2936 = vld [vmem:[%s21 + $0x30] sm:$0xff]
        %v2937 = vld [vmem:[%s21 + $0x38] sm:$0xff]
        %v2938 = vld [vmem:[%s21 + $0x40] sm:$0xff]
        %v2939 = vld [vmem:[%s21 + $0x48] sm:$0xff]
        %v2940 = vld [vmem:[%s21 + $0x50] sm:$0xff]
        %v2941 = vld [vmem:[%s21 + $0x58] sm:$0xff]
        %v2942 = vld [vmem:[%s21 + $0x60] sm:$0xff]
        %v2943 = vld [vmem:[%s21 + $0x68] sm:$0xff]
        %v2944 = vld [vmem:[%s21 + $0x70] sm:$0xff]
        %v2945 = vld [vmem:[%s21 + $0x78] sm:$0xff]
        %v2946 = vld [vmem:[%s23] sm:$0x1]
        %v2947 = vld [vmem:[%s23 + $0x1] sm:$0x1]
        %v2948 = vld [vmem:[%s23 + $0x2] sm:$0x1]
        %v2949 = vld [vmem:[%s23 + $0x3] sm:$0x1]
        %v2950 = vld [vmem:[%s25] sm:$0xff]
        %v2951 = vld [vmem:[%s25 + $0x8] sm:$0xff]
        %v2952 = vld [vmem:[%s25 + $0x10] sm:$0xff]
        %v2953 = vld [vmem:[%s25 + $0x18] sm:$0xff]
        %v2954 = vld [vmem:[%s25 + $0x20] sm:$0xff]
        %v2955 = vld [vmem:[%s25 + $0x28] sm:$0xff]
        %v2956 = vld [vmem:[%s25 + $0x30] sm:$0xff]
        %v2957 = vld [vmem:[%s25 + $0x38] sm:$0xff]
        %v2958 = vld [vmem:[%s25 + $0x40] sm:$0xff]
        %v2959 = vld [vmem:[%s25 + $0x48] sm:$0xff]
        %v2960 = vld [vmem:[%s25 + $0x50] sm:$0xff]
        %v2961 = vld [vmem:[%s25 + $0x58] sm:$0xff]
        %v2962 = vld [vmem:[%s25 + $0x60] sm:$0xff]
        %v2963 = vld [vmem:[%s25 + $0x68] sm:$0xff]
        %v2964 = vld [vmem:[%s25 + $0x70] sm:$0xff]
        %v2965 = vld [vmem:[%s25 + $0x78] sm:$0xff]
        %v2966 = vld [vmem:[%s27] sm:$0x1]
        %v2967 = vld [vmem:[%s27 + $0x1] sm:$0x1]
        %v2968 = vld [vmem:[%s27 + $0x2] sm:$0x1]
        %v2969 = vld [vmem:[%s27 + $0x3] sm:$0x1]
        %v2970 = vld [vmem:[%s29] sm:$0xff]
        %v2971 = vld [vmem:[%s29 + $0x8] sm:$0xff]
        %v2972 = vld [vmem:[%s29 + $0x10] sm:$0xff]
        %v2973 = vld [vmem:[%s29 + $0x18] sm:$0xff]
        %v2974 = vld [vmem:[%s29 + $0x20] sm:$0xff]
        %v2975 = vld [vmem:[%s29 + $0x28] sm:$0xff]
        %v2976 = vld [vmem:[%s29 + $0x30] sm:$0xff]
        %v2977 = vld [vmem:[%s29 + $0x38] sm:$0xff]
        %v2978 = vld [vmem:[%s29 + $0x40] sm:$0xff]
        %v2979 = vld [vmem:[%s29 + $0x48] sm:$0xff]
        %v2980 = vld [vmem:[%s29 + $0x50] sm:$0xff]
        %v2981 = vld [vmem:[%s29 + $0x58] sm:$0xff]
        %v2982 = vld [vmem:[%s29 + $0x60] sm:$0xff]
        %v2983 = vld [vmem:[%s29 + $0x68] sm:$0xff]
        %v2984 = vld [vmem:[%s29 + $0x70] sm:$0xff]
        %v2985 = vld [vmem:[%s29 + $0x78] sm:$0xff]
        %v2986 = vld [vmem:[%s31] sm:$0x1]
        %v2987 = vld [vmem:[%s31 + $0x1] sm:$0x1]
        %v2988 = vld [vmem:[%s31 + $0x2] sm:$0x1]
        %v2989 = vld [vmem:[%s31 + $0x3] sm:$0x1]
        %v2990 = vld [vmem:[%s33] sm:$0xff]
        %v2991 = vld [vmem:[%s33 + $0x8] sm:$0xff]
        %v2992 = vld [vmem:[%s33 + $0x10] sm:$0xff]
        %v2993 = vld [vmem:[%s33 + $0x18] sm:$0xff]
        %v2994 = vld [vmem:[%s35] sm:$0x1]
        %v2999 = vlaneseq
        %v3000 = vshrl.u32 %v2999, 7
        %v3001 = vsub.s32 0, %v3000
        %v3002 = vrot.slane %v2946, %v3001
        %v3003 = vlaneseq
        %v3004 = vshrl.u32 %v3003, 7
        %v3005 = vsub.s32 0, %v3004
        %v3006 = vrot.slane %v2947, %v3005
        %v3007 = vlaneseq
        %v3008 = vshrl.u32 %v3007, 7
        %v3009 = vsub.s32 0, %v3008
        %v3010 = vrot.slane %v2948, %v3009
        %v3011 = vlaneseq
        %v3012 = vshrl.u32 %v3011, 7
        %v3013 = vsub.s32 0, %v3012
        %v3014 = vrot.slane %v2949, %v3013
        %v3020 = vsel %vm1052, %v2929, 0
        %3022 = vmatprep.subr.mxu0 0.0
        %3023 = vmatpush1.msra.mxu0 %v2930
        %3024 = vmatprep.subr.mxu0 0.0
        %3025 = vmatpush1.msra.mxu0 %v2931
        %3026 = vmatprep.subr.mxu0 0.0
        %3027 = vmatpush1.msra.mxu0 %v2932
        %3028 = vmatprep.subr.mxu0 0.0
        %3029 = vmatpush1.msra.mxu0 %v2933
        %3030 = vmatprep.subr.mxu0 0.0
        %3031 = vmatpush1.msra.mxu0 0.0
        %3032 = vmatprep.subr.mxu0 0.0
        %3033 = vmatpush1.msra.mxu0 0.0
        %3034 = vmatprep.subr.mxu0 0.0
        %3035 = vmatpush1.msra.mxu0 0.0
        %3036 = vmatprep.subr.mxu0 0.0
        %3037 = vmatpush1.msra.mxu0 0.0
        %3038 = vmatprep.subr.mxu0 0.0
        %3039 = vmatpush1.msra.mxu0 0.0
        %3040 = vmatprep.subr.mxu0 0.0
        %3041 = vmatpush1.msra.mxu0 0.0
        %3042 = vmatprep.subr.mxu0 0.0
        %3043 = vmatpush1.msra.mxu0 0.0
        %3044 = vmatprep.subr.mxu0 0.0
        %3045 = vmatpush1.msra.mxu0 0.0
        %3046 = vmatprep.subr.mxu0 0.0
        %3047 = vmatpush1.msra.mxu0 0.0
        %3048 = vmatprep.subr.mxu0 0.0
        %3049 = vmatpush1.msra.mxu0 0.0
        %3050 = vmatprep.subr.mxu0 0.0
        %3051 = vmatpush1.msra.mxu0 0.0
        %3052 = vmatprep.subr.mxu0 0.0
        %3053 = vmatpush1.msra.mxu0 0.0
        %3054 = vmatprep.subr.mxu0 0.0
        %3055 = vmatpush1.msra.mxu0 0.0
        %3056 = vmatprep.subr.mxu0 0.0
        %3057 = vmatpush1.msra.mxu0 0.0
        %3058 = vmatprep.subr.mxu0 0.0
        %3059 = vmatpush1.msra.mxu0 0.0
        %3060 = vmatprep.subr.mxu0 0.0
        %3061 = vmatpush1.msra.mxu0 0.0
        %3062 = vmatprep.subr.mxu0 0.0
        %3063 = vmatpush1.msra.mxu0 0.0
        %3064 = vmatprep.subr.mxu0 0.0
        %3065 = vmatpush1.msra.mxu0 0.0
        %3066 = vmatprep.subr.mxu0 0.0
        %3067 = vmatpush1.msra.mxu0 0.0
        %3068 = vmatprep.subr.mxu0 0.0
        %3069 = vmatpush1.msra.mxu0 0.0
        %3070 = vmatprep.subr.mxu0 0.0
        %3071 = vmatpush1.msra.mxu0 0.0
        %3072 = vmatprep.subr.mxu0 0.0
        %3073 = vmatpush1.msra.mxu0 0.0
        %3074 = vmatprep.subr.mxu0 0.0
        %3075 = vmatpush1.msra.mxu0 0.0
        %3076 = vmatprep.subr.mxu0 0.0
        %3077 = vmatpush1.msra.mxu0 0.0
        %3078 = vmatprep.subr.mxu0 0.0
        %3079 = vmatpush1.msra.mxu0 0.0
        %3080 = vmatprep.subr.mxu0 0.0
        %3081 = vmatpush1.msra.mxu0 0.0
        %3082 = vmatprep.subr.mxu0 0.0
        %3083 = vmatpush1.msra.mxu0 0.0
        %3084 = vmatprep.subr.mxu0 0.0
        %3085 = vmatpush1.msra.mxu0 0.0
        %3086 = vmatprep.mubr.f32.mxu0 0.0
        %3087 = vmatmul.mubr.f32.gmra.mrb[0].mxu0 %v3020
        %v3088 = vpop.f32.mrb[0].mxu0
        %v3089 = vadd.f32 %v3002, %v3088
        %v3090 = vpop.f32.mrb[0].mxu0
        %3091 = vdwg.mxu0
        %3092 = vmatprep.subr.mxu0 0.0
        %3093 = vmatpush1.msra.mxu0 %v2934
        %3094 = vmatprep.subr.mxu0 0.0
        %3095 = vmatpush1.msra.mxu0 %v2935
        %3096 = vmatprep.subr.mxu0 0.0
        %3097 = vmatpush1.msra.mxu0 %v2936
        %3098 = vmatprep.subr.mxu0 0.0
        %3099 = vmatpush1.msra.mxu0 %v2937
        %3100 = vmatprep.subr.mxu0 0.0
        %3101 = vmatpush1.msra.mxu0 0.0
        %3102 = vmatprep.subr.mxu0 0.0
        %3103 = vmatpush1.msra.mxu0 0.0
        %3104 = vmatprep.subr.mxu0 0.0
        %3105 = vmatpush1.msra.mxu0 0.0
        %3106 = vmatprep.subr.mxu0 0.0
        %3107 = vmatpush1.msra.mxu0 0.0
        %3108 = vmatprep.subr.mxu0 0.0
        %3109 = vmatpush1.msra.mxu0 0.0
        %3110 = vmatprep.subr.mxu0 0.0
        %3111 = vmatpush1.msra.mxu0 0.0
        %3112 = vmatprep.subr.mxu0 0.0
        %3113 = vmatpush1.msra.mxu0 0.0
        %3114 = vmatprep.subr.mxu0 0.0
        %3115 = vmatpush1.msra.mxu0 0.0
        %3116 = vmatprep.subr.mxu0 0.0
        %3117 = vmatpush1.msra.mxu0 0.0
        %3118 = vmatprep.subr.mxu0 0.0
        %3119 = vmatpush1.msra.mxu0 0.0
        %3120 = vmatprep.subr.mxu0 0.0
        %3121 = vmatpush1.msra.mxu0 0.0
        %3122 = vmatprep.subr.mxu0 0.0
        %3123 = vmatpush1.msra.mxu0 0.0
        %3124 = vmatprep.subr.mxu0 0.0
        %3125 = vmatpush1.msra.mxu0 0.0
        %3126 = vmatprep.subr.mxu0 0.0
        %3127 = vmatpush1.msra.mxu0 0.0
        %3128 = vmatprep.subr.mxu0 0.0
        %3129 = vmatpush1.msra.mxu0 0.0
        %3130 = vmatprep.subr.mxu0 0.0
        %3131 = vmatpush1.msra.mxu0 0.0
        %3132 = vmatprep.subr.mxu0 0.0
        %3133 = vmatpush1.msra.mxu0 0.0
        %3134 = vmatprep.subr.mxu0 0.0
        %3135 = vmatpush1.msra.mxu0 0.0
        %3136 = vmatprep.subr.mxu0 0.0
        %3137 = vmatpush1.msra.mxu0 0.0
        %3138 = vmatprep.subr.mxu0 0.0
        %3139 = vmatpush1.msra.mxu0 0.0
        %3140 = vmatprep.subr.mxu0 0.0
        %3141 = vmatpush1.msra.mxu0 0.0
        %3142 = vmatprep.subr.mxu0 0.0
        %3143 = vmatpush1.msra.mxu0 0.0
        %3144 = vmatprep.subr.mxu0 0.0
        %3145 = vmatpush1.msra.mxu0 0.0
        %3146 = vmatprep.subr.mxu0 0.0
        %3147 = vmatpush1.msra.mxu0 0.0
        %3148 = vmatprep.subr.mxu0 0.0
        %3149 = vmatpush1.msra.mxu0 0.0
        %3150 = vmatprep.subr.mxu0 0.0
        %3151 = vmatpush1.msra.mxu0 0.0
        %3152 = vmatprep.subr.mxu0 0.0
        %3153 = vmatpush1.msra.mxu0 0.0
        %3154 = vmatprep.subr.mxu0 0.0
        %3155 = vmatpush1.msra.mxu0 0.0
        %3156 = vmatprep.mubr.f32.mxu0 0.0
        %3157 = vmatmul.mubr.f32.gmra.mrb[0].mxu0 %v3020
        %v3158 = vpop.f32.mrb[0].mxu0
        %v3159 = vadd.f32 %v3006, %v3158
        %v3160 = vpop.f32.mrb[0].mxu0
        %3161 = vdwg.mxu0
        %3162 = vmatprep.subr.mxu0 0.0
        %3163 = vmatpush1.msra.mxu0 %v2938
        %3164 = vmatprep.subr.mxu0 0.0
        %3165 = vmatpush1.msra.mxu0 %v2939
        %3166 = vmatprep.subr.mxu0 0.0
        %3167 = vmatpush1.msra.mxu0 %v2940
        %3168 = vmatprep.subr.mxu0 0.0
        %3169 = vmatpush1.msra.mxu0 %v2941
        %3170 = vmatprep.subr.mxu0 0.0
        %3171 = vmatpush1.msra.mxu0 0.0
        %3172 = vmatprep.subr.mxu0 0.0
        %3173 = vmatpush1.msra.mxu0 0.0
        %3174 = vmatprep.subr.mxu0 0.0
        %3175 = vmatpush1.msra.mxu0 0.0
        %3176 = vmatprep.subr.mxu0 0.0
        %3177 = vmatpush1.msra.mxu0 0.0
        %3178 = vmatprep.subr.mxu0 0.0
        %3179 = vmatpush1.msra.mxu0 0.0
        %3180 = vmatprep.subr.mxu0 0.0
        %3181 = vmatpush1.msra.mxu0 0.0
        %3182 = vmatprep.subr.mxu0 0.0
        %3183 = vmatpush1.msra.mxu0 0.0
        %3184 = vmatprep.subr.mxu0 0.0
        %3185 = vmatpush1.msra.mxu0 0.0
        %3186 = vmatprep.subr.mxu0 0.0
        %3187 = vmatpush1.msra.mxu0 0.0
        %3188 = vmatprep.subr.mxu0 0.0
        %3189 = vmatpush1.msra.mxu0 0.0
        %3190 = vmatprep.subr.mxu0 0.0
        %3191 = vmatpush1.msra.mxu0 0.0
        %3192 = vmatprep.subr.mxu0 0.0
        %3193 = vmatpush1.msra.mxu0 0.0
        %3194 = vmatprep.subr.mxu0 0.0
        %3195 = vmatpush1.msra.mxu0 0.0
        %3196 = vmatprep.subr.mxu0 0.0
        %3197 = vmatpush1.msra.mxu0 0.0
        %3198 = vmatprep.subr.mxu0 0.0
        %3199 = vmatpush1.msra.mxu0 0.0
        %3200 = vmatprep.subr.mxu0 0.0
        %3201 = vmatpush1.msra.mxu0 0.0
        %3202 = vmatprep.subr.mxu0 0.0
        %3203 = vmatpush1.msra.mxu0 0.0
        %3204 = vmatprep.subr.mxu0 0.0
        %3205 = vmatpush1.msra.mxu0 0.0
        %3206 = vmatprep.subr.mxu0 0.0
        %3207 = vmatpush1.msra.mxu0 0.0
        %3208 = vmatprep.subr.mxu0 0.0
        %3209 = vmatpush1.msra.mxu0 0.0
        %3210 = vmatprep.subr.mxu0 0.0
        %3211 = vmatpush1.msra.mxu0 0.0
        %3212 = vmatprep.subr.mxu0 0.0
        %3213 = vmatpush1.msra.mxu0 0.0
        %3214 = vmatprep.subr.mxu0 0.0
        %3215 = vmatpush1.msra.mxu0 0.0
        %3216 = vmatprep.subr.mxu0 0.0
        %3217 = vmatpush1.msra.mxu0 0.0
        %3218 = vmatprep.subr.mxu0 0.0
        %3219 = vmatpush1.msra.mxu0 0.0
        %3220 = vmatprep.subr.mxu0 0.0
        %3221 = vmatpush1.msra.mxu0 0.0
        %3222 = vmatprep.subr.mxu0 0.0
        %3223 = vmatpush1.msra.mxu0 0.0
        %3224 = vmatprep.subr.mxu0 0.0
        %3225 = vmatpush1.msra.mxu0 0.0
        %3226 = vmatprep.mubr.f32.mxu0 0.0
        %3227 = vmatmul.mubr.f32.gmra.mrb[0].mxu0 %v3020
        %v3228 = vpop.f32.mrb[0].mxu0
        %v3229 = vadd.f32 %v3010, %v3228
        %v3230 = vpop.f32.mrb[0].mxu0
        %3231 = vdwg.mxu0
        %3232 = vmatprep.subr.mxu0 0.0
        %3233 = vmatpush1.msra.mxu0 %v2942
        %3234 = vmatprep.subr.mxu0 0.0
        %3235 = vmatpush1.msra.mxu0 %v2943
        %3236 = vmatprep.subr.mxu0 0.0
        %3237 = vmatpush1.msra.mxu0 %v2944
        %3238 = vmatprep.subr.mxu0 0.0
        %3239 = vmatpush1.msra.mxu0 %v2945
        %3240 = vmatprep.subr.mxu0 0.0
        %3241 = vmatpush1.msra.mxu0 0.0
        %3242 = vmatprep.subr.mxu0 0.0
        %3243 = vmatpush1.msra.mxu0 0.0
        %3244 = vmatprep.subr.mxu0 0.0
        %3245 = vmatpush1.msra.mxu0 0.0
        %3246 = vmatprep.subr.mxu0 0.0
        %3247 = vmatpush1.msra.mxu0 0.0
        %3248 = vmatprep.subr.mxu0 0.0
        %3249 = vmatpush1.msra.mxu0 0.0
        %3250 = vmatprep.subr.mxu0 0.0
        %3251 = vmatpush1.msra.mxu0 0.0
        %3252 = vmatprep.subr.mxu0 0.0
        %3253 = vmatpush1.msra.mxu0 0.0
        %3254 = vmatprep.subr.mxu0 0.0
        %3255 = vmatpush1.msra.mxu0 0.0
        %3256 = vmatprep.subr.mxu0 0.0
        %3257 = vmatpush1.msra.mxu0 0.0
        %3258 = vmatprep.subr.mxu0 0.0
        %3259 = vmatpush1.msra.mxu0 0.0
        %3260 = vmatprep.subr.mxu0 0.0
        %3261 = vmatpush1.msra.mxu0 0.0
        %3262 = vmatprep.subr.mxu0 0.0
        %3263 = vmatpush1.msra.mxu0 0.0
        %3264 = vmatprep.subr.mxu0 0.0
        %3265 = vmatpush1.msra.mxu0 0.0
        %3266 = vmatprep.subr.mxu0 0.0
        %3267 = vmatpush1.msra.mxu0 0.0
        %3268 = vmatprep.subr.mxu0 0.0
        %3269 = vmatpush1.msra.mxu0 0.0
        %3270 = vmatprep.subr.mxu0 0.0
        %3271 = vmatpush1.msra.mxu0 0.0
        %3272 = vmatprep.subr.mxu0 0.0
        %3273 = vmatpush1.msra.mxu0 0.0
        %3274 = vmatprep.subr.mxu0 0.0
        %3275 = vmatpush1.msra.mxu0 0.0
        %3276 = vmatprep.subr.mxu0 0.0
        %3277 = vmatpush1.msra.mxu0 0.0
        %3278 = vmatprep.subr.mxu0 0.0
        %3279 = vmatpush1.msra.mxu0 0.0
        %3280 = vmatprep.subr.mxu0 0.0
        %3281 = vmatpush1.msra.mxu0 0.0
        %3282 = vmatprep.subr.mxu0 0.0
        %3283 = vmatpush1.msra.mxu0 0.0
        %3284 = vmatprep.subr.mxu0 0.0
        %3285 = vmatpush1.msra.mxu0 0.0
        %3286 = vmatprep.subr.mxu0 0.0
        %3287 = vmatpush1.msra.mxu0 0.0
        %3288 = vmatprep.subr.mxu0 0.0
        %3289 = vmatpush1.msra.mxu0 0.0
        %3290 = vmatprep.subr.mxu0 0.0
        %3291 = vmatpush1.msra.mxu0 0.0
        %3292 = vmatprep.subr.mxu0 0.0
        %3293 = vmatpush1.msra.mxu0 0.0
        %3294 = vmatprep.subr.mxu0 0.0
        %3295 = vmatpush1.msra.mxu0 0.0
        %3296 = vmatprep.mubr.f32.mxu0 0.0
        %3297 = vmatmul.mubr.f32.gmra.mrb[0].mxu0 %v3020
        %v3298 = vpop.f32.mrb[0].mxu0
        %v3299 = vadd.f32 %v3014, %v3298
        %v3300 = vpop.f32.mrb[0].mxu0
        %3301 = vdwg.mxu0
        %v3306 = vlaneseq
        %v3307 = vshrl.u32 %v3306, 7
        %v3308 = vsub.s32 0, %v3307
        %v3309 = vrot.slane %v2966, %v3308
        %v3310 = vlaneseq
        %v3311 = vshrl.u32 %v3310, 7
        %v3312 = vsub.s32 0, %v3311
        %v3313 = vrot.slane %v2967, %v3312
        %v3314 = vlaneseq
        %v3315 = vshrl.u32 %v3314, 7
        %v3316 = vsub.s32 0, %v3315
        %v3317 = vrot.slane %v2968, %v3316
        %v3318 = vlaneseq
        %v3319 = vshrl.u32 %v3318, 7
        %v3320 = vsub.s32 0, %v3319
        %v3321 = vrot.slane %v2969, %v3320
        %v3327 = vsel %vm1052, %v962, 0
        %3329 = vmatprep.subr.mxu0 0.0
        %3330 = vmatpush1.msra.mxu0 %v2950
        %3331 = vmatprep.subr.mxu0 0.0
        %3332 = vmatpush1.msra.mxu0 %v2951
        %3333 = vmatprep.subr.mxu0 0.0
        %3334 = vmatpush1.msra.mxu0 %v2952
        %3335 = vmatprep.subr.mxu0 0.0
        %3336 = vmatpush1.msra.mxu0 %v2953
        %3337 = vmatprep.subr.mxu0 0.0
        %3338 = vmatpush1.msra.mxu0 0.0
        %3339 = vmatprep.subr.mxu0 0.0
        %3340 = vmatpush1.msra.mxu0 0.0
        %3341 = vmatprep.subr.mxu0 0.0
        %3342 = vmatpush1.msra.mxu0 0.0
        %3343 = vmatprep.subr.mxu0 0.0
        %3344 = vmatpush1.msra.mxu0 0.0
        %3345 = vmatprep.subr.mxu0 0.0
        %3346 = vmatpush1.msra.mxu0 0.0
        %3347 = vmatprep.subr.mxu0 0.0
        %3348 = vmatpush1.msra.mxu0 0.0
        %3349 = vmatprep.subr.mxu0 0.0
        %3350 = vmatpush1.msra.mxu0 0.0
        %3351 = vmatprep.subr.mxu0 0.0
        %3352 = vmatpush1.msra.mxu0 0.0
        %3353 = vmatprep.subr.mxu0 0.0
        %3354 = vmatpush1.msra.mxu0 0.0
        %3355 = vmatprep.subr.mxu0 0.0
        %3356 = vmatpush1.msra.mxu0 0.0
        %3357 = vmatprep.subr.mxu0 0.0
        %3358 = vmatpush1.msra.mxu0 0.0
        %3359 = vmatprep.subr.mxu0 0.0
        %3360 = vmatpush1.msra.mxu0 0.0
        %3361 = vmatprep.subr.mxu0 0.0
        %3362 = vmatpush1.msra.mxu0 0.0
        %3363 = vmatprep.subr.mxu0 0.0
        %3364 = vmatpush1.msra.mxu0 0.0
        %3365 = vmatprep.subr.mxu0 0.0
        %3366 = vmatpush1.msra.mxu0 0.0
        %3367 = vmatprep.subr.mxu0 0.0
        %3368 = vmatpush1.msra.mxu0 0.0
        %3369 = vmatprep.subr.mxu0 0.0
        %3370 = vmatpush1.msra.mxu0 0.0
        %3371 = vmatprep.subr.mxu0 0.0
        %3372 = vmatpush1.msra.mxu0 0.0
        %3373 = vmatprep.subr.mxu0 0.0
        %3374 = vmatpush1.msra.mxu0 0.0
        %3375 = vmatprep.subr.mxu0 0.0
        %3376 = vmatpush1.msra.mxu0 0.0
        %3377 = vmatprep.subr.mxu0 0.0
        %3378 = vmatpush1.msra.mxu0 0.0
        %3379 = vmatprep.subr.mxu0 0.0
        %3380 = vmatpush1.msra.mxu0 0.0
        %3381 = vmatprep.subr.mxu0 0.0
        %3382 = vmatpush1.msra.mxu0 0.0
        %3383 = vmatprep.subr.mxu0 0.0
        %3384 = vmatpush1.msra.mxu0 0.0
        %3385 = vmatprep.subr.mxu0 0.0
        %3386 = vmatpush1.msra.mxu0 0.0
        %3387 = vmatprep.subr.mxu0 0.0
        %3388 = vmatpush1.msra.mxu0 0.0
        %3389 = vmatprep.subr.mxu0 0.0
        %3390 = vmatpush1.msra.mxu0 0.0
        %3391 = vmatprep.subr.mxu0 0.0
        %3392 = vmatpush1.msra.mxu0 0.0
        %3393 = vmatprep.mubr.f32.mxu0 0.0
        %3394 = vmatmul.mubr.f32.gmra.mrb[0].mxu0 %v3327
        %v3395 = vpop.f32.mrb[0].mxu0
        %v3396 = vadd.f32 %v3309, %v3395
        %v3397 = vpop.f32.mrb[0].mxu0
        %3398 = vdwg.mxu0
        %3399 = vmatprep.subr.mxu0 0.0
        %3400 = vmatpush1.msra.mxu0 %v2954
        %3401 = vmatprep.subr.mxu0 0.0
        %3402 = vmatpush1.msra.mxu0 %v2955
        %3403 = vmatprep.subr.mxu0 0.0
        %3404 = vmatpush1.msra.mxu0 %v2956
        %3405 = vmatprep.subr.mxu0 0.0
        %3406 = vmatpush1.msra.mxu0 %v2957
        %3407 = vmatprep.subr.mxu0 0.0
        %3408 = vmatpush1.msra.mxu0 0.0
        %3409 = vmatprep.subr.mxu0 0.0
        %3410 = vmatpush1.msra.mxu0 0.0
        %3411 = vmatprep.subr.mxu0 0.0
        %3412 = vmatpush1.msra.mxu0 0.0
        %3413 = vmatprep.subr.mxu0 0.0
        %3414 = vmatpush1.msra.mxu0 0.0
        %3415 = vmatprep.subr.mxu0 0.0
        %3416 = vmatpush1.msra.mxu0 0.0
        %3417 = vmatprep.subr.mxu0 0.0
        %3418 = vmatpush1.msra.mxu0 0.0
        %3419 = vmatprep.subr.mxu0 0.0
        %3420 = vmatpush1.msra.mxu0 0.0
        %3421 = vmatprep.subr.mxu0 0.0
        %3422 = vmatpush1.msra.mxu0 0.0
        %3423 = vmatprep.subr.mxu0 0.0
        %3424 = vmatpush1.msra.mxu0 0.0
        %3425 = vmatprep.subr.mxu0 0.0
        %3426 = vmatpush1.msra.mxu0 0.0
        %3427 = vmatprep.subr.mxu0 0.0
        %3428 = vmatpush1.msra.mxu0 0.0
        %3429 = vmatprep.subr.mxu0 0.0
        %3430 = vmatpush1.msra.mxu0 0.0
        %3431 = vmatprep.subr.mxu0 0.0
        %3432 = vmatpush1.msra.mxu0 0.0
        %3433 = vmatprep.subr.mxu0 0.0
        %3434 = vmatpush1.msra.mxu0 0.0
        %3435 = vmatprep.subr.mxu0 0.0
        %3436 = vmatpush1.msra.mxu0 0.0
        %3437 = vmatprep.subr.mxu0 0.0
        %3438 = vmatpush1.msra.mxu0 0.0
        %3439 = vmatprep.subr.mxu0 0.0
        %3440 = vmatpush1.msra.mxu0 0.0
        %3441 = vmatprep.subr.mxu0 0.0
        %3442 = vmatpush1.msra.mxu0 0.0
        %3443 = vmatprep.subr.mxu0 0.0
        %3444 = vmatpush1.msra.mxu0 0.0
        %3445 = vmatprep.subr.mxu0 0.0
        %3446 = vmatpush1.msra.mxu0 0.0
        %3447 = vmatprep.subr.mxu0 0.0
        %3448 = vmatpush1.msra.mxu0 0.0
        %3449 = vmatprep.subr.mxu0 0.0
        %3450 = vmatpush1.msra.mxu0 0.0
        %3451 = vmatprep.subr.mxu0 0.0
        %3452 = vmatpush1.msra.mxu0 0.0
        %3453 = vmatprep.subr.mxu0 0.0
        %3454 = vmatpush1.msra.mxu0 0.0
        %3455 = vmatprep.subr.mxu0 0.0
        %3456 = vmatpush1.msra.mxu0 0.0
        %3457 = vmatprep.subr.mxu0 0.0
        %3458 = vmatpush1.msra.mxu0 0.0
        %3459 = vmatprep.subr.mxu0 0.0
        %3460 = vmatpush1.msra.mxu0 0.0
        %3461 = vmatprep.subr.mxu0 0.0
        %3462 = vmatpush1.msra.mxu0 0.0
        %3463 = vmatprep.mubr.f32.mxu0 0.0
        %3464 = vmatmul.mubr.f32.gmra.mrb[0].mxu0 %v3327
        %v3465 = vpop.f32.mrb[0].mxu0
        %v3466 = vadd.f32 %v3313, %v3465
        %v3467 = vpop.f32.mrb[0].mxu0
        %3468 = vdwg.mxu0
        %3469 = vmatprep.subr.mxu0 0.0
        %3470 = vmatpush1.msra.mxu0 %v2958
        %3471 = vmatprep.subr.mxu0 0.0
        %3472 = vmatpush1.msra.mxu0 %v2959
        %3473 = vmatprep.subr.mxu0 0.0
        %3474 = vmatpush1.msra.mxu0 %v2960
        %3475 = vmatprep.subr.mxu0 0.0
        %3476 = vmatpush1.msra.mxu0 %v2961
        %3477 = vmatprep.subr.mxu0 0.0
        %3478 = vmatpush1.msra.mxu0 0.0
        %3479 = vmatprep.subr.mxu0 0.0
        %3480 = vmatpush1.msra.mxu0 0.0
        %3481 = vmatprep.subr.mxu0 0.0
        %3482 = vmatpush1.msra.mxu0 0.0
        %3483 = vmatprep.subr.mxu0 0.0
        %3484 = vmatpush1.msra.mxu0 0.0
        %3485 = vmatprep.subr.mxu0 0.0
        %3486 = vmatpush1.msra.mxu0 0.0
        %3487 = vmatprep.subr.mxu0 0.0
        %3488 = vmatpush1.msra.mxu0 0.0
        %3489 = vmatprep.subr.mxu0 0.0
        %3490 = vmatpush1.msra.mxu0 0.0
        %3491 = vmatprep.subr.mxu0 0.0
        %3492 = vmatpush1.msra.mxu0 0.0
        %3493 = vmatprep.subr.mxu0 0.0
        %3494 = vmatpush1.msra.mxu0 0.0
        %3495 = vmatprep.subr.mxu0 0.0
        %3496 = vmatpush1.msra.mxu0 0.0
        %3497 = vmatprep.subr.mxu0 0.0
        %3498 = vmatpush1.msra.mxu0 0.0
        %3499 = vmatprep.subr.mxu0 0.0
        %3500 = vmatpush1.msra.mxu0 0.0
        %3501 = vmatprep.subr.mxu0 0.0
        %3502 = vmatpush1.msra.mxu0 0.0
        %3503 = vmatprep.subr.mxu0 0.0
        %3504 = vmatpush1.msra.mxu0 0.0
        %3505 = vmatprep.subr.mxu0 0.0
        %3506 = vmatpush1.msra.mxu0 0.0
        %3507 = vmatprep.subr.mxu0 0.0
        %3508 = vmatpush1.msra.mxu0 0.0
        %3509 = vmatprep.subr.mxu0 0.0
        %3510 = vmatpush1.msra.mxu0 0.0
        %3511 = vmatprep.subr.mxu0 0.0
        %3512 = vmatpush1.msra.mxu0 0.0
        %3513 = vmatprep.subr.mxu0 0.0
        %3514 = vmatpush1.msra.mxu0 0.0
        %3515 = vmatprep.subr.mxu0 0.0
        %3516 = vmatpush1.msra.mxu0 0.0
        %3517 = vmatprep.subr.mxu0 0.0
        %3518 = vmatpush1.msra.mxu0 0.0
        %3519 = vmatprep.subr.mxu0 0.0
        %3520 = vmatpush1.msra.mxu0 0.0
        %3521 = vmatprep.subr.mxu0 0.0
        %3522 = vmatpush1.msra.mxu0 0.0
        %3523 = vmatprep.subr.mxu0 0.0
        %3524 = vmatpush1.msra.mxu0 0.0
        %3525 = vmatprep.subr.mxu0 0.0
        %3526 = vmatpush1.msra.mxu0 0.0
        %3527 = vmatprep.subr.mxu0 0.0
        %3528 = vmatpush1.msra.mxu0 0.0
        %3529 = vmatprep.subr.mxu0 0.0
        %3530 = vmatpush1.msra.mxu0 0.0
        %3531 = vmatprep.subr.mxu0 0.0
        %3532 = vmatpush1.msra.mxu0 0.0
        %3533 = vmatprep.mubr.f32.mxu0 0.0
        %3534 = vmatmul.mubr.f32.gmra.mrb[0].mxu0 %v3327
        %v3535 = vpop.f32.mrb[0].mxu0
        %v3536 = vadd.f32 %v3317, %v3535
        %v3537 = vpop.f32.mrb[0].mxu0
        %3538 = vdwg.mxu0
        %3539 = vmatprep.subr.mxu0 0.0
        %3540 = vmatpush1.msra.mxu0 %v2962
        %3541 = vmatprep.subr.mxu0 0.0
        %3542 = vmatpush1.msra.mxu0 %v2963
        %3543 = vmatprep.subr.mxu0 0.0
        %3544 = vmatpush1.msra.mxu0 %v2964
        %3545 = vmatprep.subr.mxu0 0.0
        %3546 = vmatpush1.msra.mxu0 %v2965
        %3547 = vmatprep.subr.mxu0 0.0
        %3548 = vmatpush1.msra.mxu0 0.0
        %3549 = vmatprep.subr.mxu0 0.0
        %3550 = vmatpush1.msra.mxu0 0.0
        %3551 = vmatprep.subr.mxu0 0.0
        %3552 = vmatpush1.msra.mxu0 0.0
        %3553 = vmatprep.subr.mxu0 0.0
        %3554 = vmatpush1.msra.mxu0 0.0
        %3555 = vmatprep.subr.mxu0 0.0
        %3556 = vmatpush1.msra.mxu0 0.0
        %3557 = vmatprep.subr.mxu0 0.0
        %3558 = vmatpush1.msra.mxu0 0.0
        %3559 = vmatprep.subr.mxu0 0.0
        %3560 = vmatpush1.msra.mxu0 0.0
        %3561 = vmatprep.subr.mxu0 0.0
        %3562 = vmatpush1.msra.mxu0 0.0
        %3563 = vmatprep.subr.mxu0 0.0
        %3564 = vmatpush1.msra.mxu0 0.0
        %3565 = vmatprep.subr.mxu0 0.0
        %3566 = vmatpush1.msra.mxu0 0.0
        %3567 = vmatprep.subr.mxu0 0.0
        %3568 = vmatpush1.msra.mxu0 0.0
        %3569 = vmatprep.subr.mxu0 0.0
        %3570 = vmatpush1.msra.mxu0 0.0
        %3571 = vmatprep.subr.mxu0 0.0
        %3572 = vmatpush1.msra.mxu0 0.0
        %3573 = vmatprep.subr.mxu0 0.0
        %3574 = vmatpush1.msra.mxu0 0.0
        %3575 = vmatprep.subr.mxu0 0.0
        %3576 = vmatpush1.msra.mxu0 0.0
        %3577 = vmatprep.subr.mxu0 0.0
        %3578 = vmatpush1.msra.mxu0 0.0
        %3579 = vmatprep.subr.mxu0 0.0
        %3580 = vmatpush1.msra.mxu0 0.0
        %3581 = vmatprep.subr.mxu0 0.0
        %3582 = vmatpush1.msra.mxu0 0.0
        %3583 = vmatprep.subr.mxu0 0.0
        %3584 = vmatpush1.msra.mxu0 0.0
        %3585 = vmatprep.subr.mxu0 0.0
        %3586 = vmatpush1.msra.mxu0 0.0
        %3587 = vmatprep.subr.mxu0 0.0
        %3588 = vmatpush1.msra.mxu0 0.0
        %3589 = vmatprep.subr.mxu0 0.0
        %3590 = vmatpush1.msra.mxu0 0.0
        %3591 = vmatprep.subr.mxu0 0.0
        %3592 = vmatpush1.msra.mxu0 0.0
        %3593 = vmatprep.subr.mxu0 0.0
        %3594 = vmatpush1.msra.mxu0 0.0
        %3595 = vmatprep.subr.mxu0 0.0
        %3596 = vmatpush1.msra.mxu0 0.0
        %3597 = vmatprep.subr.mxu0 0.0
        %3598 = vmatpush1.msra.mxu0 0.0
        %3599 = vmatprep.subr.mxu0 0.0
        %3600 = vmatpush1.msra.mxu0 0.0
        %3601 = vmatprep.subr.mxu0 0.0
        %3602 = vmatpush1.msra.mxu0 0.0
        %3603 = vmatprep.mubr.f32.mxu0 0.0
        %3604 = vmatmul.mubr.f32.gmra.mrb[0].mxu0 %v3327
        %v3605 = vpop.f32.mrb[0].mxu0
        %v3606 = vadd.f32 %v3321, %v3605
        %v3607 = vpop.f32.mrb[0].mxu0
        %3608 = vdwg.mxu0
        %v3613 = vlaneseq
        %v3614 = vshrl.u32 %v3613, 7
        %v3615 = vsub.s32 0, %v3614
        %v3616 = vrot.slane %v2986, %v3615
        %v3617 = vlaneseq
        %v3618 = vshrl.u32 %v3617, 7
        %v3619 = vsub.s32 0, %v3618
        %v3620 = vrot.slane %v2987, %v3619
        %v3621 = vlaneseq
        %v3622 = vshrl.u32 %v3621, 7
        %v3623 = vsub.s32 0, %v3622
        %v3624 = vrot.slane %v2988, %v3623
        %v3625 = vlaneseq
        %v3626 = vshrl.u32 %v3625, 7
        %v3627 = vsub.s32 0, %v3626
        %v3628 = vrot.slane %v2989, %v3627
        %3633 = vmatprep.subr.mxu0 0.0
        %3634 = vmatpush1.msra.mxu0 %v2970
        %3635 = vmatprep.subr.mxu0 0.0
        %3636 = vmatpush1.msra.mxu0 %v2971
        %3637 = vmatprep.subr.mxu0 0.0
        %3638 = vmatpush1.msra.mxu0 %v2972
        %3639 = vmatprep.subr.mxu0 0.0
        %3640 = vmatpush1.msra.mxu0 %v2973
        %3641 = vmatprep.subr.mxu0 0.0
        %3642 = vmatpush1.msra.mxu0 0.0
        %3643 = vmatprep.subr.mxu0 0.0
        %3644 = vmatpush1.msra.mxu0 0.0
        %3645 = vmatprep.subr.mxu0 0.0
        %3646 = vmatpush1.msra.mxu0 0.0
        %3647 = vmatprep.subr.mxu0 0.0
        %3648 = vmatpush1.msra.mxu0 0.0
        %3649 = vmatprep.subr.mxu0 0.0
        %3650 = vmatpush1.msra.mxu0 0.0
        %3651 = vmatprep.subr.mxu0 0.0
        %3652 = vmatpush1.msra.mxu0 0.0
        %3653 = vmatprep.subr.mxu0 0.0
        %3654 = vmatpush1.msra.mxu0 0.0
        %3655 = vmatprep.subr.mxu0 0.0
        %3656 = vmatpush1.msra.mxu0 0.0
        %3657 = vmatprep.subr.mxu0 0.0
        %3658 = vmatpush1.msra.mxu0 0.0
        %3659 = vmatprep.subr.mxu0 0.0
        %3660 = vmatpush1.msra.mxu0 0.0
        %3661 = vmatprep.subr.mxu0 0.0
        %3662 = vmatpush1.msra.mxu0 0.0
        %3663 = vmatprep.subr.mxu0 0.0
        %3664 = vmatpush1.msra.mxu0 0.0
        %3665 = vmatprep.subr.mxu0 0.0
        %3666 = vmatpush1.msra.mxu0 0.0
        %3667 = vmatprep.subr.mxu0 0.0
        %3668 = vmatpush1.msra.mxu0 0.0
        %3669 = vmatprep.subr.mxu0 0.0
        %3670 = vmatpush1.msra.mxu0 0.0
        %3671 = vmatprep.subr.mxu0 0.0
        %3672 = vmatpush1.msra.mxu0 0.0
        %3673 = vmatprep.subr.mxu0 0.0
        %3674 = vmatpush1.msra.mxu0 0.0
        %3675 = vmatprep.subr.mxu0 0.0
        %3676 = vmatpush1.msra.mxu0 0.0
        %3677 = vmatprep.subr.mxu0 0.0
        %3678 = vmatpush1.msra.mxu0 0.0
        %3679 = vmatprep.subr.mxu0 0.0
        %3680 = vmatpush1.msra.mxu0 0.0
        %3681 = vmatprep.subr.mxu0 0.0
        %3682 = vmatpush1.msra.mxu0 0.0
        %3683 = vmatprep.subr.mxu0 0.0
        %3684 = vmatpush1.msra.mxu0 0.0
        %3685 = vmatprep.subr.mxu0 0.0
        %3686 = vmatpush1.msra.mxu0 0.0
        %3687 = vmatprep.subr.mxu0 0.0
        %3688 = vmatpush1.msra.mxu0 0.0
        %3689 = vmatprep.subr.mxu0 0.0
        %3690 = vmatpush1.msra.mxu0 0.0
        %3691 = vmatprep.subr.mxu0 0.0
        %3692 = vmatpush1.msra.mxu0 0.0
        %3693 = vmatprep.subr.mxu0 0.0
        %3694 = vmatpush1.msra.mxu0 0.0
        %3695 = vmatprep.subr.mxu0 0.0
        %3696 = vmatpush1.msra.mxu0 0.0
        %3697 = vmatprep.mubr.f32.mxu0 0.0
        %3698 = vmatmul.mubr.f32.gmra.mrb[0].mxu0 %v3327
        %v3699 = vpop.f32.mrb[0].mxu0
        %v3700 = vadd.f32 %v3616, %v3699
        %v3701 = vpop.f32.mrb[0].mxu0
        %3702 = vdwg.mxu0
        %3703 = vmatprep.subr.mxu0 0.0
        %3704 = vmatpush1.msra.mxu0 %v2974
        %3705 = vmatprep.subr.mxu0 0.0
        %3706 = vmatpush1.msra.mxu0 %v2975
        %3707 = vmatprep.subr.mxu0 0.0
        %3708 = vmatpush1.msra.mxu0 %v2976
        %3709 = vmatprep.subr.mxu0 0.0
        %3710 = vmatpush1.msra.mxu0 %v2977
        %3711 = vmatprep.subr.mxu0 0.0
        %3712 = vmatpush1.msra.mxu0 0.0
        %3713 = vmatprep.subr.mxu0 0.0
        %3714 = vmatpush1.msra.mxu0 0.0
        %3715 = vmatprep.subr.mxu0 0.0
        %3716 = vmatpush1.msra.mxu0 0.0
        %3717 = vmatprep.subr.mxu0 0.0
        %3718 = vmatpush1.msra.mxu0 0.0
        %3719 = vmatprep.subr.mxu0 0.0
        %3720 = vmatpush1.msra.mxu0 0.0
        %3721 = vmatprep.subr.mxu0 0.0
        %3722 = vmatpush1.msra.mxu0 0.0
        %3723 = vmatprep.subr.mxu0 0.0
        %3724 = vmatpush1.msra.mxu0 0.0
        %3725 = vmatprep.subr.mxu0 0.0
        %3726 = vmatpush1.msra.mxu0 0.0
        %3727 = vmatprep.subr.mxu0 0.0
        %3728 = vmatpush1.msra.mxu0 0.0
        %3729 = vmatprep.subr.mxu0 0.0
        %3730 = vmatpush1.msra.mxu0 0.0
        %3731 = vmatprep.subr.mxu0 0.0
        %3732 = vmatpush1.msra.mxu0 0.0
        %3733 = vmatprep.subr.mxu0 0.0
        %3734 = vmatpush1.msra.mxu0 0.0
        %3735 = vmatprep.subr.mxu0 0.0
        %3736 = vmatpush1.msra.mxu0 0.0
        %3737 = vmatprep.subr.mxu0 0.0
        %3738 = vmatpush1.msra.mxu0 0.0
        %3739 = vmatprep.subr.mxu0 0.0
        %3740 = vmatpush1.msra.mxu0 0.0
        %3741 = vmatprep.subr.mxu0 0.0
        %3742 = vmatpush1.msra.mxu0 0.0
        %3743 = vmatprep.subr.mxu0 0.0
        %3744 = vmatpush1.msra.mxu0 0.0
        %3745 = vmatprep.subr.mxu0 0.0
        %3746 = vmatpush1.msra.mxu0 0.0
        %3747 = vmatprep.subr.mxu0 0.0
        %3748 = vmatpush1.msra.mxu0 0.0
        %3749 = vmatprep.subr.mxu0 0.0
        %3750 = vmatpush1.msra.mxu0 0.0
        %3751 = vmatprep.subr.mxu0 0.0
        %3752 = vmatpush1.msra.mxu0 0.0
        %3753 = vmatprep.subr.mxu0 0.0
        %3754 = vmatpush1.msra.mxu0 0.0
        %3755 = vmatprep.subr.mxu0 0.0
        %3756 = vmatpush1.msra.mxu0 0.0
        %3757 = vmatprep.subr.mxu0 0.0
        %3758 = vmatpush1.msra.mxu0 0.0
        %3759 = vmatprep.subr.mxu0 0.0
        %3760 = vmatpush1.msra.mxu0 0.0
        %3761 = vmatprep.subr.mxu0 0.0
        %3762 = vmatpush1.msra.mxu0 0.0
        %3763 = vmatprep.subr.mxu0 0.0
        %3764 = vmatpush1.msra.mxu0 0.0
        %3765 = vmatprep.subr.mxu0 0.0
        %3766 = vmatpush1.msra.mxu0 0.0
        %3767 = vmatprep.mubr.f32.mxu0 0.0
        %3768 = vmatmul.mubr.f32.gmra.mrb[0].mxu0 %v3327
        %v3769 = vpop.f32.mrb[0].mxu0
        %v3770 = vadd.f32 %v3620, %v3769
        %v3771 = vpop.f32.mrb[0].mxu0
        %3772 = vdwg.mxu0
        %3773 = vmatprep.subr.mxu0 0.0
        %3774 = vmatpush1.msra.mxu0 %v2978
        %3775 = vmatprep.subr.mxu0 0.0
        %3776 = vmatpush1.msra.mxu0 %v2979
        %3777 = vmatprep.subr.mxu0 0.0
        %3778 = vmatpush1.msra.mxu0 %v2980
        %3779 = vmatprep.subr.mxu0 0.0
        %3780 = vmatpush1.msra.mxu0 %v2981
        %3781 = vmatprep.subr.mxu0 0.0
        %3782 = vmatpush1.msra.mxu0 0.0
        %3783 = vmatprep.subr.mxu0 0.0
        %3784 = vmatpush1.msra.mxu0 0.0
        %3785 = vmatprep.subr.mxu0 0.0
        %3786 = vmatpush1.msra.mxu0 0.0
        %3787 = vmatprep.subr.mxu0 0.0
        %3788 = vmatpush1.msra.mxu0 0.0
        %3789 = vmatprep.subr.mxu0 0.0
        %3790 = vmatpush1.msra.mxu0 0.0
        %3791 = vmatprep.subr.mxu0 0.0
        %3792 = vmatpush1.msra.mxu0 0.0
        %3793 = vmatprep.subr.mxu0 0.0
        %3794 = vmatpush1.msra.mxu0 0.0
        %3795 = vmatprep.subr.mxu0 0.0
        %3796 = vmatpush1.msra.mxu0 0.0
        %3797 = vmatprep.subr.mxu0 0.0
        %3798 = vmatpush1.msra.mxu0 0.0
        %3799 = vmatprep.subr.mxu0 0.0
        %3800 = vmatpush1.msra.mxu0 0.0
        %3801 = vmatprep.subr.mxu0 0.0
        %3802 = vmatpush1.msra.mxu0 0.0
        %3803 = vmatprep.subr.mxu0 0.0
        %3804 = vmatpush1.msra.mxu0 0.0
        %3805 = vmatprep.subr.mxu0 0.0
        %3806 = vmatpush1.msra.mxu0 0.0
        %3807 = vmatprep.subr.mxu0 0.0
        %3808 = vmatpush1.msra.mxu0 0.0
        %3809 = vmatprep.subr.mxu0 0.0
        %3810 = vmatpush1.msra.mxu0 0.0
        %3811 = vmatprep.subr.mxu0 0.0
        %3812 = vmatpush1.msra.mxu0 0.0
        %3813 = vmatprep.subr.mxu0 0.0
        %3814 = vmatpush1.msra.mxu0 0.0
        %3815 = vmatprep.subr.mxu0 0.0
        %3816 = vmatpush1.msra.mxu0 0.0
        %3817 = vmatprep.subr.mxu0 0.0
        %3818 = vmatpush1.msra.mxu0 0.0
        %3819 = vmatprep.subr.mxu0 0.0
        %3820 = vmatpush1.msra.mxu0 0.0
        %3821 = vmatprep.subr.mxu0 0.0
        %3822 = vmatpush1.msra.mxu0 0.0
        %3823 = vmatprep.subr.mxu0 0.0
        %3824 = vmatpush1.msra.mxu0 0.0
        %3825 = vmatprep.subr.mxu0 0.0
        %3826 = vmatpush1.msra.mxu0 0.0
        %3827 = vmatprep.subr.mxu0 0.0
        %3828 = vmatpush1.msra.mxu0 0.0
        %3829 = vmatprep.subr.mxu0 0.0
        %3830 = vmatpush1.msra.mxu0 0.0
        %3831 = vmatprep.subr.mxu0 0.0
        %3832 = vmatpush1.msra.mxu0 0.0
        %3833 = vmatprep.subr.mxu0 0.0
        %3834 = vmatpush1.msra.mxu0 0.0
        %3835 = vmatprep.subr.mxu0 0.0
        %3836 = vmatpush1.msra.mxu0 0.0
        %3837 = vmatprep.mubr.f32.mxu0 0.0
        %3838 = vmatmul.mubr.f32.gmra.mrb[0].mxu0 %v3327
        %v3839 = vpop.f32.mrb[0].mxu0
        %v3840 = vadd.f32 %v3624, %v3839
        %v3841 = vpop.f32.mrb[0].mxu0
        %3842 = vdwg.mxu0
        %3843 = vmatprep.subr.mxu0 0.0
        %3844 = vmatpush1.msra.mxu0 %v2982
        %3845 = vmatprep.subr.mxu0 0.0
        %3846 = vmatpush1.msra.mxu0 %v2983
        %3847 = vmatprep.subr.mxu0 0.0
        %3848 = vmatpush1.msra.mxu0 %v2984
        %3849 = vmatprep.subr.mxu0 0.0
        %3850 = vmatpush1.msra.mxu0 %v2985
        %3851 = vmatprep.subr.mxu0 0.0
        %3852 = vmatpush1.msra.mxu0 0.0
        %3853 = vmatprep.subr.mxu0 0.0
        %3854 = vmatpush1.msra.mxu0 0.0
        %3855 = vmatprep.subr.mxu0 0.0
        %3856 = vmatpush1.msra.mxu0 0.0
        %3857 = vmatprep.subr.mxu0 0.0
        %3858 = vmatpush1.msra.mxu0 0.0
        %3859 = vmatprep.subr.mxu0 0.0
        %3860 = vmatpush1.msra.mxu0 0.0
        %3861 = vmatprep.subr.mxu0 0.0
        %3862 = vmatpush1.msra.mxu0 0.0
        %3863 = vmatprep.subr.mxu0 0.0
        %3864 = vmatpush1.msra.mxu0 0.0
        %3865 = vmatprep.subr.mxu0 0.0
        %3866 = vmatpush1.msra.mxu0 0.0
        %3867 = vmatprep.subr.mxu0 0.0
        %3868 = vmatpush1.msra.mxu0 0.0
        %3869 = vmatprep.subr.mxu0 0.0
        %3870 = vmatpush1.msra.mxu0 0.0
        %3871 = vmatprep.subr.mxu0 0.0
        %3872 = vmatpush1.msra.mxu0 0.0
        %3873 = vmatprep.subr.mxu0 0.0
        %3874 = vmatpush1.msra.mxu0 0.0
        %3875 = vmatprep.subr.mxu0 0.0
        %3876 = vmatpush1.msra.mxu0 0.0
        %3877 = vmatprep.subr.mxu0 0.0
        %3878 = vmatpush1.msra.mxu0 0.0
        %3879 = vmatprep.subr.mxu0 0.0
        %3880 = vmatpush1.msra.mxu0 0.0
        %3881 = vmatprep.subr.mxu0 0.0
        %3882 = vmatpush1.msra.mxu0 0.0
        %3883 = vmatprep.subr.mxu0 0.0
        %3884 = vmatpush1.msra.mxu0 0.0
        %3885 = vmatprep.subr.mxu0 0.0
        %3886 = vmatpush1.msra.mxu0 0.0
        %3887 = vmatprep.subr.mxu0 0.0
        %3888 = vmatpush1.msra.mxu0 0.0
        %3889 = vmatprep.subr.mxu0 0.0
        %3890 = vmatpush1.msra.mxu0 0.0
        %3891 = vmatprep.subr.mxu0 0.0
        %3892 = vmatpush1.msra.mxu0 0.0
        %3893 = vmatprep.subr.mxu0 0.0
        %3894 = vmatpush1.msra.mxu0 0.0
        %3895 = vmatprep.subr.mxu0 0.0
        %3896 = vmatpush1.msra.mxu0 0.0
        %3897 = vmatprep.subr.mxu0 0.0
        %3898 = vmatpush1.msra.mxu0 0.0
        %3899 = vmatprep.subr.mxu0 0.0
        %3900 = vmatpush1.msra.mxu0 0.0
        %3901 = vmatprep.subr.mxu0 0.0
        %3902 = vmatpush1.msra.mxu0 0.0
        %3903 = vmatprep.subr.mxu0 0.0
        %3904 = vmatpush1.msra.mxu0 0.0
        %3905 = vmatprep.subr.mxu0 0.0
        %3906 = vmatpush1.msra.mxu0 0.0
        %3907 = vmatprep.mubr.f32.mxu0 0.0
        %3908 = vmatmul.mubr.f32.gmra.mrb[0].mxu0 %v3327
        %v3909 = vpop.f32.mrb[0].mxu0
        %v3910 = vadd.f32 %v3628, %v3909
        %v3911 = vpop.f32.mrb[0].mxu0
        %3912 = vdwg.mxu0
        %v3914 = vsel %vm1944, %v3089, 0
        %v3917 = vsel %vm1944, %v3396, 0
        %3919 = vmatprep.subr.mxu0 0.0
        %3920 = vmatpush1.xpose.msra.mxu0 %v3917
        %3921 = vmatprep.subr.mxu0 0.0
        %3922 = vmatpush1.xpose.msra.mxu0 0.0
        %3923 = vmatprep.subr.mxu0 0.0
        %3924 = vmatpush1.xpose.msra.mxu0 0.0
        %3925 = vmatprep.subr.mxu0 0.0
        %3926 = vmatpush1.xpose.msra.mxu0 0.0
        %3927 = vmatprep.subr.mxu0 0.0
        %3928 = vmatpush1.xpose.msra.mxu0 0.0
        %3929 = vmatprep.subr.mxu0 0.0
        %3930 = vmatpush1.xpose.msra.mxu0 0.0
        %3931 = vmatprep.subr.mxu0 0.0
        %3932 = vmatpush1.xpose.msra.mxu0 0.0
        %3933 = vmatprep.subr.mxu0 0.0
        %3934 = vmatpush1.xpose.msra.mxu0 0.0
        %3935 = vmatprep.subr.mxu0 0.0
        %3936 = vmatpush1.xpose.msra.mxu0 0.0
        %3937 = vmatprep.subr.mxu0 0.0
        %3938 = vmatpush1.xpose.msra.mxu0 0.0
        %3939 = vmatprep.subr.mxu0 0.0
        %3940 = vmatpush1.xpose.msra.mxu0 0.0
        %3941 = vmatprep.subr.mxu0 0.0
        %3942 = vmatpush1.xpose.msra.mxu0 0.0
        %3943 = vmatprep.subr.mxu0 0.0
        %3944 = vmatpush1.xpose.msra.mxu0 0.0
        %3945 = vmatprep.subr.mxu0 0.0
        %3946 = vmatpush1.xpose.msra.mxu0 0.0
        %3947 = vmatprep.subr.mxu0 0.0
        %3948 = vmatpush1.xpose.msra.mxu0 0.0
        %3949 = vmatprep.subr.mxu0 0.0
        %3950 = vmatpush1.xpose.msra.mxu0 0.0
        %3951 = vmatprep.subr.mxu0 0.0
        %3952 = vmatpush1.xpose.msra.mxu0 0.0
        %3953 = vmatprep.subr.mxu0 0.0
        %3954 = vmatpush1.xpose.msra.mxu0 0.0
        %3955 = vmatprep.subr.mxu0 0.0
        %3956 = vmatpush1.xpose.msra.mxu0 0.0
        %3957 = vmatprep.subr.mxu0 0.0
        %3958 = vmatpush1.xpose.msra.mxu0 0.0
        %3959 = vmatprep.subr.mxu0 0.0
        %3960 = vmatpush1.xpose.msra.mxu0 0.0
        %3961 = vmatprep.subr.mxu0 0.0
        %3962 = vmatpush1.xpose.msra.mxu0 0.0
        %3963 = vmatprep.subr.mxu0 0.0
        %3964 = vmatpush1.xpose.msra.mxu0 0.0
        %3965 = vmatprep.subr.mxu0 0.0
        %3966 = vmatpush1.xpose.msra.mxu0 0.0
        %3967 = vmatprep.subr.mxu0 0.0
        %3968 = vmatpush1.xpose.msra.mxu0 0.0
        %3969 = vmatprep.subr.mxu0 0.0
        %3970 = vmatpush1.xpose.msra.mxu0 0.0
        %3971 = vmatprep.subr.mxu0 0.0
        %3972 = vmatpush1.xpose.msra.mxu0 0.0
        %3973 = vmatprep.subr.mxu0 0.0
        %3974 = vmatpush1.xpose.msra.mxu0 0.0
        %3975 = vmatprep.subr.mxu0 0.0
        %3976 = vmatpush1.xpose.msra.mxu0 0.0
        %3977 = vmatprep.subr.mxu0 0.0
        %3978 = vmatpush1.xpose.msra.mxu0 0.0
        %3979 = vmatprep.subr.mxu0 0.0
        %3980 = vmatpush1.xpose.msra.mxu0 0.0
        %3981 = vmatprep.subr.mxu0 0.0
        %3982 = vmatpush1.xpose.msra.mxu0 0.0
        %3983 = vmatprep.mubr.f32.mxu0 0.0
        %3984 = vmatmul.mubr.f32.gmra.mrb[0].mxu0 %v3914
        %v3985 = vpop.f32.mrb[0].mxu0
        %v3986 = vadd.f32 0.0, %v3985
        %v3987 = vpop.f32.mrb[0].mxu0
        %3988 = vdwg.mxu0
        %v3990 = vsel %vm1944, %v3159, 0
        %v3993 = vsel %vm1944, %v3466, 0
        %3995 = vmatprep.subr.mxu0 0.0
        %3996 = vmatpush1.xpose.msra.mxu0 %v3993
        %3997 = vmatprep.subr.mxu0 0.0
        %3998 = vmatpush1.xpose.msra.mxu0 0.0
        %3999 = vmatprep.subr.mxu0 0.0
        %4000 = vmatpush1.xpose.msra.mxu0 0.0
        %4001 = vmatprep.subr.mxu0 0.0
        %4002 = vmatpush1.xpose.msra.mxu0 0.0
        %4003 = vmatprep.subr.mxu0 0.0
        %4004 = vmatpush1.xpose.msra.mxu0 0.0
        %4005 = vmatprep.subr.mxu0 0.0
        %4006 = vmatpush1.xpose.msra.mxu0 0.0
        %4007 = vmatprep.subr.mxu0 0.0
        %4008 = vmatpush1.xpose.msra.mxu0 0.0
        %4009 = vmatprep.subr.mxu0 0.0
        %4010 = vmatpush1.xpose.msra.mxu0 0.0
        %4011 = vmatprep.subr.mxu0 0.0
        %4012 = vmatpush1.xpose.msra.mxu0 0.0
        %4013 = vmatprep.subr.mxu0 0.0
        %4014 = vmatpush1.xpose.msra.mxu0 0.0
        %4015 = vmatprep.subr.mxu0 0.0
        %4016 = vmatpush1.xpose.msra.mxu0 0.0
        %4017 = vmatprep.subr.mxu0 0.0
        %4018 = vmatpush1.xpose.msra.mxu0 0.0
        %4019 = vmatprep.subr.mxu0 0.0
        %4020 = vmatpush1.xpose.msra.mxu0 0.0
        %4021 = vmatprep.subr.mxu0 0.0
        %4022 = vmatpush1.xpose.msra.mxu0 0.0
        %4023 = vmatprep.subr.mxu0 0.0
        %4024 = vmatpush1.xpose.msra.mxu0 0.0
        %4025 = vmatprep.subr.mxu0 0.0
        %4026 = vmatpush1.xpose.msra.mxu0 0.0
        %4027 = vmatprep.subr.mxu0 0.0
        %4028 = vmatpush1.xpose.msra.mxu0 0.0
        %4029 = vmatprep.subr.mxu0 0.0
        %4030 = vmatpush1.xpose.msra.mxu0 0.0
        %4031 = vmatprep.subr.mxu0 0.0
        %4032 = vmatpush1.xpose.msra.mxu0 0.0
        %4033 = vmatprep.subr.mxu0 0.0
        %4034 = vmatpush1.xpose.msra.mxu0 0.0
        %4035 = vmatprep.subr.mxu0 0.0
        %4036 = vmatpush1.xpose.msra.mxu0 0.0
        %4037 = vmatprep.subr.mxu0 0.0
        %4038 = vmatpush1.xpose.msra.mxu0 0.0
        %4039 = vmatprep.subr.mxu0 0.0
        %4040 = vmatpush1.xpose.msra.mxu0 0.0
        %4041 = vmatprep.subr.mxu0 0.0
        %4042 = vmatpush1.xpose.msra.mxu0 0.0
        %4043 = vmatprep.subr.mxu0 0.0
        %4044 = vmatpush1.xpose.msra.mxu0 0.0
        %4045 = vmatprep.subr.mxu0 0.0
        %4046 = vmatpush1.xpose.msra.mxu0 0.0
        %4047 = vmatprep.subr.mxu0 0.0
        %4048 = vmatpush1.xpose.msra.mxu0 0.0
        %4049 = vmatprep.subr.mxu0 0.0
        %4050 = vmatpush1.xpose.msra.mxu0 0.0
        %4051 = vmatprep.subr.mxu0 0.0
        %4052 = vmatpush1.xpose.msra.mxu0 0.0
        %4053 = vmatprep.subr.mxu0 0.0
        %4054 = vmatpush1.xpose.msra.mxu0 0.0
        %4055 = vmatprep.subr.mxu0 0.0
        %4056 = vmatpush1.xpose.msra.mxu0 0.0
        %4057 = vmatprep.subr.mxu0 0.0
        %4058 = vmatpush1.xpose.msra.mxu0 0.0
        %4059 = vmatprep.mubr.f32.mxu0 0.0
        %4060 = vmatmul.mubr.f32.gmra.mrb[0].mxu0 %v3990
        %v4061 = vpop.f32.mrb[0].mxu0
        %v4062 = vadd.f32 0.0, %v4061
        %v4063 = vpop.f32.mrb[0].mxu0
        %4064 = vdwg.mxu0
        %v4066 = vsel %vm1944, %v3229, 0
        %v4069 = vsel %vm1944, %v3536, 0
        %4071 = vmatprep.subr.mxu0 0.0
        %4072 = vmatpush1.xpose.msra.mxu0 %v4069
        %4073 = vmatprep.subr.mxu0 0.0
        %4074 = vmatpush1.xpose.msra.mxu0 0.0
        %4075 = vmatprep.subr.mxu0 0.0
        %4076 = vmatpush1.xpose.msra.mxu0 0.0
        %4077 = vmatprep.subr.mxu0 0.0
        %4078 = vmatpush1.xpose.msra.mxu0 0.0
        %4079 = vmatprep.subr.mxu0 0.0
        %4080 = vmatpush1.xpose.msra.mxu0 0.0
        %4081 = vmatprep.subr.mxu0 0.0
        %4082 = vmatpush1.xpose.msra.mxu0 0.0
        %4083 = vmatprep.subr.mxu0 0.0
        %4084 = vmatpush1.xpose.msra.mxu0 0.0
        %4085 = vmatprep.subr.mxu0 0.0
        %4086 = vmatpush1.xpose.msra.mxu0 0.0
        %4087 = vmatprep.subr.mxu0 0.0
        %4088 = vmatpush1.xpose.msra.mxu0 0.0
        %4089 = vmatprep.subr.mxu0 0.0
        %4090 = vmatpush1.xpose.msra.mxu0 0.0
        %4091 = vmatprep.subr.mxu0 0.0
        %4092 = vmatpush1.xpose.msra.mxu0 0.0
        %4093 = vmatprep.subr.mxu0 0.0
        %4094 = vmatpush1.xpose.msra.mxu0 0.0
        %4095 = vmatprep.subr.mxu0 0.0
        %4096 = vmatpush1.xpose.msra.mxu0 0.0
        %4097 = vmatprep.subr.mxu0 0.0
        %4098 = vmatpush1.xpose.msra.mxu0 0.0
        %4099 = vmatprep.subr.mxu0 0.0
        %4100 = vmatpush1.xpose.msra.mxu0 0.0
        %4101 = vmatprep.subr.mxu0 0.0
        %4102 = vmatpush1.xpose.msra.mxu0 0.0
        %4103 = vmatprep.subr.mxu0 0.0
        %4104 = vmatpush1.xpose.msra.mxu0 0.0
        %4105 = vmatprep.subr.mxu0 0.0
        %4106 = vmatpush1.xpose.msra.mxu0 0.0
        %4107 = vmatprep.subr.mxu0 0.0
        %4108 = vmatpush1.xpose.msra.mxu0 0.0
        %4109 = vmatprep.subr.mxu0 0.0
        %4110 = vmatpush1.xpose.msra.mxu0 0.0
        %4111 = vmatprep.subr.mxu0 0.0
        %4112 = vmatpush1.xpose.msra.mxu0 0.0
        %4113 = vmatprep.subr.mxu0 0.0
        %4114 = vmatpush1.xpose.msra.mxu0 0.0
        %4115 = vmatprep.subr.mxu0 0.0
        %4116 = vmatpush1.xpose.msra.mxu0 0.0
        %4117 = vmatprep.subr.mxu0 0.0
        %4118 = vmatpush1.xpose.msra.mxu0 0.0
        %4119 = vmatprep.subr.mxu0 0.0
        %4120 = vmatpush1.xpose.msra.mxu0 0.0
        %4121 = vmatprep.subr.mxu0 0.0
        %4122 = vmatpush1.xpose.msra.mxu0 0.0
        %4123 = vmatprep.subr.mxu0 0.0
        %4124 = vmatpush1.xpose.msra.mxu0 0.0
        %4125 = vmatprep.subr.mxu0 0.0
        %4126 = vmatpush1.xpose.msra.mxu0 0.0
        %4127 = vmatprep.subr.mxu0 0.0
        %4128 = vmatpush1.xpose.msra.mxu0 0.0
        %4129 = vmatprep.subr.mxu0 0.0
        %4130 = vmatpush1.xpose.msra.mxu0 0.0
        %4131 = vmatprep.subr.mxu0 0.0
        %4132 = vmatpush1.xpose.msra.mxu0 0.0
        %4133 = vmatprep.subr.mxu0 0.0
        %4134 = vmatpush1.xpose.msra.mxu0 0.0
        %4135 = vmatprep.mubr.f32.mxu0 0.0
        %4136 = vmatmul.mubr.f32.gmra.mrb[0].mxu0 %v4066
        %v4137 = vpop.f32.mrb[0].mxu0
        %v4138 = vadd.f32 0.0, %v4137
        %v4139 = vpop.f32.mrb[0].mxu0
        %4140 = vdwg.mxu0
        %v4142 = vsel %vm1944, %v3299, 0
        %v4145 = vsel %vm1944, %v3606, 0
        %4147 = vmatprep.subr.mxu0 0.0
        %4148 = vmatpush1.xpose.msra.mxu0 %v4145
        %4149 = vmatprep.subr.mxu0 0.0
        %4150 = vmatpush1.xpose.msra.mxu0 0.0
        %4151 = vmatprep.subr.mxu0 0.0
        %4152 = vmatpush1.xpose.msra.mxu0 0.0
        %4153 = vmatprep.subr.mxu0 0.0
        %4154 = vmatpush1.xpose.msra.mxu0 0.0
        %4155 = vmatprep.subr.mxu0 0.0
        %4156 = vmatpush1.xpose.msra.mxu0 0.0
        %4157 = vmatprep.subr.mxu0 0.0
        %4158 = vmatpush1.xpose.msra.mxu0 0.0
        %4159 = vmatprep.subr.mxu0 0.0
        %4160 = vmatpush1.xpose.msra.mxu0 0.0
        %4161 = vmatprep.subr.mxu0 0.0
        %4162 = vmatpush1.xpose.msra.mxu0 0.0
        %4163 = vmatprep.subr.mxu0 0.0
        %4164 = vmatpush1.xpose.msra.mxu0 0.0
        %4165 = vmatprep.subr.mxu0 0.0
        %4166 = vmatpush1.xpose.msra.mxu0 0.0
        %4167 = vmatprep.subr.mxu0 0.0
        %4168 = vmatpush1.xpose.msra.mxu0 0.0
        %4169 = vmatprep.subr.mxu0 0.0
        %4170 = vmatpush1.xpose.msra.mxu0 0.0
        %4171 = vmatprep.subr.mxu0 0.0
        %4172 = vmatpush1.xpose.msra.mxu0 0.0
        %4173 = vmatprep.subr.mxu0 0.0
        %4174 = vmatpush1.xpose.msra.mxu0 0.0
        %4175 = vmatprep.subr.mxu0 0.0
        %4176 = vmatpush1.xpose.msra.mxu0 0.0
        %4177 = vmatprep.subr.mxu0 0.0
        %4178 = vmatpush1.xpose.msra.mxu0 0.0
        %4179 = vmatprep.subr.mxu0 0.0
        %4180 = vmatpush1.xpose.msra.mxu0 0.0
        %4181 = vmatprep.subr.mxu0 0.0
        %4182 = vmatpush1.xpose.msra.mxu0 0.0
        %4183 = vmatprep.subr.mxu0 0.0
        %4184 = vmatpush1.xpose.msra.mxu0 0.0
        %4185 = vmatprep.subr.mxu0 0.0
        %4186 = vmatpush1.xpose.msra.mxu0 0.0
        %4187 = vmatprep.subr.mxu0 0.0
        %4188 = vmatpush1.xpose.msra.mxu0 0.0
        %4189 = vmatprep.subr.mxu0 0.0
        %4190 = vmatpush1.xpose.msra.mxu0 0.0
        %4191 = vmatprep.subr.mxu0 0.0
        %4192 = vmatpush1.xpose.msra.mxu0 0.0
        %4193 = vmatprep.subr.mxu0 0.0
        %4194 = vmatpush1.xpose.msra.mxu0 0.0
        %4195 = vmatprep.subr.mxu0 0.0
        %4196 = vmatpush1.xpose.msra.mxu0 0.0
        %4197 = vmatprep.subr.mxu0 0.0
        %4198 = vmatpush1.xpose.msra.mxu0 0.0
        %4199 = vmatprep.subr.mxu0 0.0
        %4200 = vmatpush1.xpose.msra.mxu0 0.0
        %4201 = vmatprep.subr.mxu0 0.0
        %4202 = vmatpush1.xpose.msra.mxu0 0.0
        %4203 = vmatprep.subr.mxu0 0.0
        %4204 = vmatpush1.xpose.msra.mxu0 0.0
        %4205 = vmatprep.subr.mxu0 0.0
        %4206 = vmatpush1.xpose.msra.mxu0 0.0
        %4207 = vmatprep.subr.mxu0 0.0
        %4208 = vmatpush1.xpose.msra.mxu0 0.0
        %4209 = vmatprep.subr.mxu0 0.0
        %4210 = vmatpush1.xpose.msra.mxu0 0.0
        %4211 = vmatprep.mubr.f32.mxu0 0.0
        %4212 = vmatmul.mubr.f32.gmra.mrb[0].mxu0 %v4142
        %v4213 = vpop.f32.mrb[0].mxu0
        %v4214 = vadd.f32 0.0, %v4213
        %v4215 = vpop.f32.mrb[0].mxu0
        %4216 = vdwg.mxu0
        %v4217 = vmul.f32 %v3986, 0.35355338
        %v4218 = vmul.f32 %v4062, 0.35355338
        %v4219 = vmul.f32 %v4138, 0.35355338
        %v4220 = vmul.f32 %v4214, 0.35355338
        %v4221 = vsel %vm1944, %v4217, -inf
        %4222 = vmax.xlane.f32.xlu0 %v4221
        %v4223 = vpop.xlane.xlu0 %4222
        %v4224 = vsel %vm1944, %v4218, -inf
        %4225 = vmax.xlane.f32.xlu0 %v4224
        %v4226 = vpop.xlane.xlu0 %4225
        %v4227 = vsel %vm1944, %v4219, -inf
        %4228 = vmax.xlane.f32.xlu0 %v4227
        %v4229 = vpop.xlane.xlu0 %4228
        %v4230 = vsel %vm1944, %v4220, -inf
        %4231 = vmax.xlane.f32.xlu0 %v4230
        %v4232 = vpop.xlane.xlu0 %4231
        %v4233 = vsub.f32 %v4217, %v4223
        %v4234 = vsub.f32 %v4218, %v4226
        %v4235 = vsub.f32 %v4219, %v4229
        %v4236 = vsub.f32 %v4220, %v4232
        %v4237 = vmul.f32 %v4233, 1.442695
        %v4238 = vpow.pop %v4237
        %v4239 = vmul.f32 %v4234, 1.442695
        %v4240 = vpow.pop %v4239
        %v4241 = vmul.f32 %v4235, 1.442695
        %v4242 = vpow.pop %v4241
        %v4243 = vmul.f32 %v4236, 1.442695
        %v4244 = vpow.pop %v4243
        %v4245 = vsel %vm1944, %v4238, 0.0
        %4246 = vadd.xlane.f32.xlu0 %v4245
        %v4247 = vpop.xlane.xlu0 %4246
        %v4248 = vsel %vm1944, %v4240, 0.0
        %4249 = vadd.xlane.f32.xlu0 %v4248
        %v4250 = vpop.xlane.xlu0 %4249
        %v4251 = vsel %vm1944, %v4242, 0.0
        %4252 = vadd.xlane.f32.xlu0 %v4251
        %v4253 = vpop.xlane.xlu0 %4252
        %v4254 = vsel %vm1944, %v4244, 0.0
        %4255 = vadd.xlane.f32.xlu0 %v4254
        %v4256 = vpop.xlane.xlu0 %4255
        %v4257 = vrcp.pop %v4247
        %v4258 = vrcp.pop %v4250
        %v4259 = vrcp.pop %v4253
        %v4260 = vrcp.pop %v4256
        %v4261 = vmul.f32 %v4238, %v4257
        %v4262 = vmul.f32 %v4240, %v4258
        %v4263 = vmul.f32 %v4242, %v4259
        %v4264 = vmul.f32 %v4244, %v4260
        %v4266 = vsel %vm1944, %v4261, 0
        %4268 = vmatprep.subr.mxu0 0.0
        %4269 = vmatpush1.msra.mxu0 %v3700
        %4270 = vmatprep.subr.mxu0 0.0
        %4271 = vmatpush1.msra.mxu0 0.0
        %4272 = vmatprep.subr.mxu0 0.0
        %4273 = vmatpush1.msra.mxu0 0.0
        %4274 = vmatprep.subr.mxu0 0.0
        %4275 = vmatpush1.msra.mxu0 0.0
        %4276 = vmatprep.subr.mxu0 0.0
        %4277 = vmatpush1.msra.mxu0 0.0
        %4278 = vmatprep.subr.mxu0 0.0
        %4279 = vmatpush1.msra.mxu0 0.0
        %4280 = vmatprep.subr.mxu0 0.0
        %4281 = vmatpush1.msra.mxu0 0.0
        %4282 = vmatprep.subr.mxu0 0.0
        %4283 = vmatpush1.msra.mxu0 0.0
        %4284 = vmatprep.subr.mxu0 0.0
        %4285 = vmatpush1.msra.mxu0 0.0
        %4286 = vmatprep.subr.mxu0 0.0
        %4287 = vmatpush1.msra.mxu0 0.0
        %4288 = vmatprep.subr.mxu0 0.0
        %4289 = vmatpush1.msra.mxu0 0.0
        %4290 = vmatprep.subr.mxu0 0.0
        %4291 = vmatpush1.msra.mxu0 0.0
        %4292 = vmatprep.subr.mxu0 0.0
        %4293 = vmatpush1.msra.mxu0 0.0
        %4294 = vmatprep.subr.mxu0 0.0
        %4295 = vmatpush1.msra.mxu0 0.0
        %4296 = vmatprep.subr.mxu0 0.0
        %4297 = vmatpush1.msra.mxu0 0.0
        %4298 = vmatprep.subr.mxu0 0.0
        %4299 = vmatpush1.msra.mxu0 0.0
        %4300 = vmatprep.subr.mxu0 0.0
        %4301 = vmatpush1.msra.mxu0 0.0
        %4302 = vmatprep.subr.mxu0 0.0
        %4303 = vmatpush1.msra.mxu0 0.0
        %4304 = vmatprep.subr.mxu0 0.0
        %4305 = vmatpush1.msra.mxu0 0.0
        %4306 = vmatprep.subr.mxu0 0.0
        %4307 = vmatpush1.msra.mxu0 0.0
        %4308 = vmatprep.subr.mxu0 0.0
        %4309 = vmatpush1.msra.mxu0 0.0
        %4310 = vmatprep.subr.mxu0 0.0
        %4311 = vmatpush1.msra.mxu0 0.0
        %4312 = vmatprep.subr.mxu0 0.0
        %4313 = vmatpush1.msra.mxu0 0.0
        %4314 = vmatprep.subr.mxu0 0.0
        %4315 = vmatpush1.msra.mxu0 0.0
        %4316 = vmatprep.subr.mxu0 0.0
        %4317 = vmatpush1.msra.mxu0 0.0
        %4318 = vmatprep.subr.mxu0 0.0
        %4319 = vmatpush1.msra.mxu0 0.0
        %4320 = vmatprep.subr.mxu0 0.0
        %4321 = vmatpush1.msra.mxu0 0.0
        %4322 = vmatprep.subr.mxu0 0.0
        %4323 = vmatpush1.msra.mxu0 0.0
        %4324 = vmatprep.subr.mxu0 0.0
        %4325 = vmatpush1.msra.mxu0 0.0
        %4326 = vmatprep.subr.mxu0 0.0
        %4327 = vmatpush1.msra.mxu0 0.0
        %4328 = vmatprep.subr.mxu0 0.0
        %4329 = vmatpush1.msra.mxu0 0.0
        %4330 = vmatprep.subr.mxu0 0.0
        %4331 = vmatpush1.msra.mxu0 0.0
        %4332 = vmatprep.mubr.f32.mxu0 0.0
        %4333 = vmatmul.mubr.f32.gmra.mrb[0].mxu0 %v4266
        %v4334 = vpop.f32.mrb[0].mxu0
        %v4335 = vadd.f32 0.0, %v4334
        %v4336 = vpop.f32.mrb[0].mxu0
        %4337 = vdwg.mxu0
        %v4339 = vsel %vm1944, %v4262, 0
        %4341 = vmatprep.subr.mxu0 0.0
        %4342 = vmatpush1.msra.mxu0 %v3770
        %4343 = vmatprep.subr.mxu0 0.0
        %4344 = vmatpush1.msra.mxu0 0.0
        %4345 = vmatprep.subr.mxu0 0.0
        %4346 = vmatpush1.msra.mxu0 0.0
        %4347 = vmatprep.subr.mxu0 0.0
        %4348 = vmatpush1.msra.mxu0 0.0
        %4349 = vmatprep.subr.mxu0 0.0
        %4350 = vmatpush1.msra.mxu0 0.0
        %4351 = vmatprep.subr.mxu0 0.0
        %4352 = vmatpush1.msra.mxu0 0.0
        %4353 = vmatprep.subr.mxu0 0.0
        %4354 = vmatpush1.msra.mxu0 0.0
        %4355 = vmatprep.subr.mxu0 0.0
        %4356 = vmatpush1.msra.mxu0 0.0
        %4357 = vmatprep.subr.mxu0 0.0
        %4358 = vmatpush1.msra.mxu0 0.0
        %4359 = vmatprep.subr.mxu0 0.0
        %4360 = vmatpush1.msra.mxu0 0.0
        %4361 = vmatprep.subr.mxu0 0.0
        %4362 = vmatpush1.msra.mxu0 0.0
        %4363 = vmatprep.subr.mxu0 0.0
        %4364 = vmatpush1.msra.mxu0 0.0
        %4365 = vmatprep.subr.mxu0 0.0
        %4366 = vmatpush1.msra.mxu0 0.0
        %4367 = vmatprep.subr.mxu0 0.0
        %4368 = vmatpush1.msra.mxu0 0.0
        %4369 = vmatprep.subr.mxu0 0.0
        %4370 = vmatpush1.msra.mxu0 0.0
        %4371 = vmatprep.subr.mxu0 0.0
        %4372 = vmatpush1.msra.mxu0 0.0
        %4373 = vmatprep.subr.mxu0 0.0
        %4374 = vmatpush1.msra.mxu0 0.0
        %4375 = vmatprep.subr.mxu0 0.0
        %4376 = vmatpush1.msra.mxu0 0.0
        %4377 = vmatprep.subr.mxu0 0.0
        %4378 = vmatpush1.msra.mxu0 0.0
        %4379 = vmatprep.subr.mxu0 0.0
        %4380 = vmatpush1.msra.mxu0 0.0
        %4381 = vmatprep.subr.mxu0 0.0
        %4382 = vmatpush1.msra.mxu0 0.0
        %4383 = vmatprep.subr.mxu0 0.0
        %4384 = vmatpush1.msra.mxu0 0.0
        %4385 = vmatprep.subr.mxu0 0.0
        %4386 = vmatpush1.msra.mxu0 0.0
        %4387 = vmatprep.subr.mxu0 0.0
        %4388 = vmatpush1.msra.mxu0 0.0
        %4389 = vmatprep.subr.mxu0 0.0
        %4390 = vmatpush1.msra.mxu0 0.0
        %4391 = vmatprep.subr.mxu0 0.0
        %4392 = vmatpush1.msra.mxu0 0.0
        %4393 = vmatprep.subr.mxu0 0.0
        %4394 = vmatpush1.msra.mxu0 0.0
        %4395 = vmatprep.subr.mxu0 0.0
        %4396 = vmatpush1.msra.mxu0 0.0
        %4397 = vmatprep.subr.mxu0 0.0
        %4398 = vmatpush1.msra.mxu0 0.0
        %4399 = vmatprep.subr.mxu0 0.0
        %4400 = vmatpush1.msra.mxu0 0.0
        %4401 = vmatprep.subr.mxu0 0.0
        %4402 = vmatpush1.msra.mxu0 0.0
        %4403 = vmatprep.subr.mxu0 0.0
        %4404 = vmatpush1.msra.mxu0 0.0
        %4405 = vmatprep.mubr.f32.mxu0 0.0
        %4406 = vmatmul.mubr.f32.gmra.mrb[0].mxu0 %v4339
        %v4407 = vpop.f32.mrb[0].mxu0
        %v4408 = vadd.f32 0.0, %v4407
        %v4409 = vpop.f32.mrb[0].mxu0
        %4410 = vdwg.mxu0
        %v4412 = vsel %vm1944, %v4263, 0
        %4414 = vmatprep.subr.mxu0 0.0
        %4415 = vmatpush1.msra.mxu0 %v3840
        %4416 = vmatprep.subr.mxu0 0.0
        %4417 = vmatpush1.msra.mxu0 0.0
        %4418 = vmatprep.subr.mxu0 0.0
        %4419 = vmatpush1.msra.mxu0 0.0
        %4420 = vmatprep.subr.mxu0 0.0
        %4421 = vmatpush1.msra.mxu0 0.0
        %4422 = vmatprep.subr.mxu0 0.0
        %4423 = vmatpush1.msra.mxu0 0.0
        %4424 = vmatprep.subr.mxu0 0.0
        %4425 = vmatpush1.msra.mxu0 0.0
        %4426 = vmatprep.subr.mxu0 0.0
        %4427 = vmatpush1.msra.mxu0 0.0
        %4428 = vmatprep.subr.mxu0 0.0
        %4429 = vmatpush1.msra.mxu0 0.0
        %4430 = vmatprep.subr.mxu0 0.0
        %4431 = vmatpush1.msra.mxu0 0.0
        %4432 = vmatprep.subr.mxu0 0.0
        %4433 = vmatpush1.msra.mxu0 0.0
        %4434 = vmatprep.subr.mxu0 0.0
        %4435 = vmatpush1.msra.mxu0 0.0
        %4436 = vmatprep.subr.mxu0 0.0
        %4437 = vmatpush1.msra.mxu0 0.0
        %4438 = vmatprep.subr.mxu0 0.0
        %4439 = vmatpush1.msra.mxu0 0.0
        %4440 = vmatprep.subr.mxu0 0.0
        %4441 = vmatpush1.msra.mxu0 0.0
        %4442 = vmatprep.subr.mxu0 0.0
        %4443 = vmatpush1.msra.mxu0 0.0
        %4444 = vmatprep.subr.mxu0 0.0
        %4445 = vmatpush1.msra.mxu0 0.0
        %4446 = vmatprep.subr.mxu0 0.0
        %4447 = vmatpush1.msra.mxu0 0.0
        %4448 = vmatprep.subr.mxu0 0.0
        %4449 = vmatpush1.msra.mxu0 0.0
        %4450 = vmatprep.subr.mxu0 0.0
        %4451 = vmatpush1.msra.mxu0 0.0
        %4452 = vmatprep.subr.mxu0 0.0
        %4453 = vmatpush1.msra.mxu0 0.0
        %4454 = vmatprep.subr.mxu0 0.0
        %4455 = vmatpush1.msra.mxu0 0.0
        %4456 = vmatprep.subr.mxu0 0.0
        %4457 = vmatpush1.msra.mxu0 0.0
        %4458 = vmatprep.subr.mxu0 0.0
        %4459 = vmatpush1.msra.mxu0 0.0
        %4460 = vmatprep.subr.mxu0 0.0
        %4461 = vmatpush1.msra.mxu0 0.0
        %4462 = vmatprep.subr.mxu0 0.0
        %4463 = vmatpush1.msra.mxu0 0.0
        %4464 = vmatprep.subr.mxu0 0.0
        %4465 = vmatpush1.msra.mxu0 0.0
        %4466 = vmatprep.subr.mxu0 0.0
        %4467 = vmatpush1.msra.mxu0 0.0
        %4468 = vmatprep.subr.mxu0 0.0
        %4469 = vmatpush1.msra.mxu0 0.0
        %4470 = vmatprep.subr.mxu0 0.0
        %4471 = vmatpush1.msra.mxu0 0.0
        %4472 = vmatprep.subr.mxu0 0.0
        %4473 = vmatpush1.msra.mxu0 0.0
        %4474 = vmatprep.subr.mxu0 0.0
        %4475 = vmatpush1.msra.mxu0 0.0
        %4476 = vmatprep.subr.mxu0 0.0
        %4477 = vmatpush1.msra.mxu0 0.0
        %4478 = vmatprep.mubr.f32.mxu0 0.0
        %4479 = vmatmul.mubr.f32.gmra.mrb[0].mxu0 %v4412
        %v4480 = vpop.f32.mrb[0].mxu0
        %v4481 = vadd.f32 0.0, %v4480
        %v4482 = vpop.f32.mrb[0].mxu0
        %4483 = vdwg.mxu0
        %v4485 = vsel %vm1944, %v4264, 0
        %4487 = vmatprep.subr.mxu0 0.0
        %4488 = vmatpush1.msra.mxu0 %v3910
        %4489 = vmatprep.subr.mxu0 0.0
        %4490 = vmatpush1.msra.mxu0 0.0
        %4491 = vmatprep.subr.mxu0 0.0
        %4492 = vmatpush1.msra.mxu0 0.0
        %4493 = vmatprep.subr.mxu0 0.0
        %4494 = vmatpush1.msra.mxu0 0.0
        %4495 = vmatprep.subr.mxu0 0.0
        %4496 = vmatpush1.msra.mxu0 0.0
        %4497 = vmatprep.subr.mxu0 0.0
        %4498 = vmatpush1.msra.mxu0 0.0
        %4499 = vmatprep.subr.mxu0 0.0
        %4500 = vmatpush1.msra.mxu0 0.0
        %4501 = vmatprep.subr.mxu0 0.0
        %4502 = vmatpush1.msra.mxu0 0.0
        %4503 = vmatprep.subr.mxu0 0.0
        %4504 = vmatpush1.msra.mxu0 0.0
        %4505 = vmatprep.subr.mxu0 0.0
        %4506 = vmatpush1.msra.mxu0 0.0
        %4507 = vmatprep.subr.mxu0 0.0
        %4508 = vmatpush1.msra.mxu0 0.0
        %4509 = vmatprep.subr.mxu0 0.0
        %4510 = vmatpush1.msra.mxu0 0.0
        %4511 = vmatprep.subr.mxu0 0.0
        %4512 = vmatpush1.msra.mxu0 0.0
        %4513 = vmatprep.subr.mxu0 0.0
        %4514 = vmatpush1.msra.mxu0 0.0
        %4515 = vmatprep.subr.mxu0 0.0
        %4516 = vmatpush1.msra.mxu0 0.0
        %4517 = vmatprep.subr.mxu0 0.0
        %4518 = vmatpush1.msra.mxu0 0.0
        %4519 = vmatprep.subr.mxu0 0.0
        %4520 = vmatpush1.msra.mxu0 0.0
        %4521 = vmatprep.subr.mxu0 0.0
        %4522 = vmatpush1.msra.mxu0 0.0
        %4523 = vmatprep.subr.mxu0 0.0
        %4524 = vmatpush1.msra.mxu0 0.0
        %4525 = vmatprep.subr.mxu0 0.0
        %4526 = vmatpush1.msra.mxu0 0.0
        %4527 = vmatprep.subr.mxu0 0.0
        %4528 = vmatpush1.msra.mxu0 0.0
        %4529 = vmatprep.subr.mxu0 0.0
        %4530 = vmatpush1.msra.mxu0 0.0
        %4531 = vmatprep.subr.mxu0 0.0
        %4532 = vmatpush1.msra.mxu0 0.0
        %4533 = vmatprep.subr.mxu0 0.0
        %4534 = vmatpush1.msra.mxu0 0.0
        %4535 = vmatprep.subr.mxu0 0.0
        %4536 = vmatpush1.msra.mxu0 0.0
        %4537 = vmatprep.subr.mxu0 0.0
        %4538 = vmatpush1.msra.mxu0 0.0
        %4539 = vmatprep.subr.mxu0 0.0
        %4540 = vmatpush1.msra.mxu0 0.0
        %4541 = vmatprep.subr.mxu0 0.0
        %4542 = vmatpush1.msra.mxu0 0.0
        %4543 = vmatprep.subr.mxu0 0.0
        %4544 = vmatpush1.msra.mxu0 0.0
        %4545 = vmatprep.subr.mxu0 0.0
        %4546 = vmatpush1.msra.mxu0 0.0
        %4547 = vmatprep.subr.mxu0 0.0
        %4548 = vmatpush1.msra.mxu0 0.0
        %4549 = vmatprep.subr.mxu0 0.0
        %4550 = vmatpush1.msra.mxu0 0.0
        %4551 = vmatprep.mubr.f32.mxu0 0.0
        %4552 = vmatmul.mubr.f32.gmra.mrb[0].mxu0 %v4485
        %v4553 = vpop.f32.mrb[0].mxu0
        %v4554 = vadd.f32 0.0, %v4553
        %v4555 = vpop.f32.mrb[0].mxu0
        %4556 = vdwg.mxu0
        %v4558 = vsel %vm1944, %v4335, 0
        %4560 = vmatprep.subr.mxu0 0.0
        %4561 = vmatpush1.msra.mxu0 %v2990
        %4562 = vmatprep.subr.mxu0 0.0
        %4563 = vmatpush1.msra.mxu0 0.0
        %4564 = vmatprep.subr.mxu0 0.0
        %4565 = vmatpush1.msra.mxu0 0.0
        %4566 = vmatprep.subr.mxu0 0.0
        %4567 = vmatpush1.msra.mxu0 0.0
        %4568 = vmatprep.subr.mxu0 0.0
        %4569 = vmatpush1.msra.mxu0 0.0
        %4570 = vmatprep.subr.mxu0 0.0
        %4571 = vmatpush1.msra.mxu0 0.0
        %4572 = vmatprep.subr.mxu0 0.0
        %4573 = vmatpush1.msra.mxu0 0.0
        %4574 = vmatprep.subr.mxu0 0.0
        %4575 = vmatpush1.msra.mxu0 0.0
        %4576 = vmatprep.subr.mxu0 0.0
        %4577 = vmatpush1.msra.mxu0 0.0
        %4578 = vmatprep.subr.mxu0 0.0
        %4579 = vmatpush1.msra.mxu0 0.0
        %4580 = vmatprep.subr.mxu0 0.0
        %4581 = vmatpush1.msra.mxu0 0.0
        %4582 = vmatprep.subr.mxu0 0.0
        %4583 = vmatpush1.msra.mxu0 0.0
        %4584 = vmatprep.subr.mxu0 0.0
        %4585 = vmatpush1.msra.mxu0 0.0
        %4586 = vmatprep.subr.mxu0 0.0
        %4587 = vmatpush1.msra.mxu0 0.0
        %4588 = vmatprep.subr.mxu0 0.0
        %4589 = vmatpush1.msra.mxu0 0.0
        %4590 = vmatprep.subr.mxu0 0.0
        %4591 = vmatpush1.msra.mxu0 0.0
        %4592 = vmatprep.subr.mxu0 0.0
        %4593 = vmatpush1.msra.mxu0 0.0
        %4594 = vmatprep.subr.mxu0 0.0
        %4595 = vmatpush1.msra.mxu0 0.0
        %4596 = vmatprep.subr.mxu0 0.0
        %4597 = vmatpush1.msra.mxu0 0.0
        %4598 = vmatprep.subr.mxu0 0.0
        %4599 = vmatpush1.msra.mxu0 0.0
        %4600 = vmatprep.subr.mxu0 0.0
        %4601 = vmatpush1.msra.mxu0 0.0
        %4602 = vmatprep.subr.mxu0 0.0
        %4603 = vmatpush1.msra.mxu0 0.0
        %4604 = vmatprep.subr.mxu0 0.0
        %4605 = vmatpush1.msra.mxu0 0.0
        %4606 = vmatprep.subr.mxu0 0.0
        %4607 = vmatpush1.msra.mxu0 0.0
        %4608 = vmatprep.subr.mxu0 0.0
        %4609 = vmatpush1.msra.mxu0 0.0
        %4610 = vmatprep.subr.mxu0 0.0
        %4611 = vmatpush1.msra.mxu0 0.0
        %4612 = vmatprep.subr.mxu0 0.0
        %4613 = vmatpush1.msra.mxu0 0.0
        %4614 = vmatprep.subr.mxu0 0.0
        %4615 = vmatpush1.msra.mxu0 0.0
        %4616 = vmatprep.subr.mxu0 0.0
        %4617 = vmatpush1.msra.mxu0 0.0
        %4618 = vmatprep.subr.mxu0 0.0
        %4619 = vmatpush1.msra.mxu0 0.0
        %4620 = vmatprep.subr.mxu0 0.0
        %4621 = vmatpush1.msra.mxu0 0.0
        %4622 = vmatprep.subr.mxu0 0.0
        %4623 = vmatpush1.msra.mxu0 0.0
        %4624 = vmatprep.mubr.f32.mxu0 0.0
        %4625 = vmatmul.mubr.f32.gmra.mrb[0].mxu0 %v4558
        %v4626 = vpop.f32.mrb[0].mxu0
        %v4627 = vadd.f32 0.0, %v4626
        %v4628 = vpop.f32.mrb[0].mxu0
        %4629 = vdwg.mxu0
        %v4631 = vsel %vm1944, %v4408, 0
        %4633 = vmatprep.subr.mxu0 0.0
        %4634 = vmatpush1.msra.mxu0 %v2991
        %4635 = vmatprep.subr.mxu0 0.0
        %4636 = vmatpush1.msra.mxu0 0.0
        %4637 = vmatprep.subr.mxu0 0.0
        %4638 = vmatpush1.msra.mxu0 0.0
        %4639 = vmatprep.subr.mxu0 0.0
        %4640 = vmatpush1.msra.mxu0 0.0
        %4641 = vmatprep.subr.mxu0 0.0
        %4642 = vmatpush1.msra.mxu0 0.0
        %4643 = vmatprep.subr.mxu0 0.0
        %4644 = vmatpush1.msra.mxu0 0.0
        %4645 = vmatprep.subr.mxu0 0.0
        %4646 = vmatpush1.msra.mxu0 0.0
        %4647 = vmatprep.subr.mxu0 0.0
        %4648 = vmatpush1.msra.mxu0 0.0
        %4649 = vmatprep.subr.mxu0 0.0
        %4650 = vmatpush1.msra.mxu0 0.0
        %4651 = vmatprep.subr.mxu0 0.0
        %4652 = vmatpush1.msra.mxu0 0.0
        %4653 = vmatprep.subr.mxu0 0.0
        %4654 = vmatpush1.msra.mxu0 0.0
        %4655 = vmatprep.subr.mxu0 0.0
        %4656 = vmatpush1.msra.mxu0 0.0
        %4657 = vmatprep.subr.mxu0 0.0
        %4658 = vmatpush1.msra.mxu0 0.0
        %4659 = vmatprep.subr.mxu0 0.0
        %4660 = vmatpush1.msra.mxu0 0.0
        %4661 = vmatprep.subr.mxu0 0.0
        %4662 = vmatpush1.msra.mxu0 0.0
        %4663 = vmatprep.subr.mxu0 0.0
        %4664 = vmatpush1.msra.mxu0 0.0
        %4665 = vmatprep.subr.mxu0 0.0
        %4666 = vmatpush1.msra.mxu0 0.0
        %4667 = vmatprep.subr.mxu0 0.0
        %4668 = vmatpush1.msra.mxu0 0.0
        %4669 = vmatprep.subr.mxu0 0.0
        %4670 = vmatpush1.msra.mxu0 0.0
        %4671 = vmatprep.subr.mxu0 0.0
        %4672 = vmatpush1.msra.mxu0 0.0
        %4673 = vmatprep.subr.mxu0 0.0
        %4674 = vmatpush1.msra.mxu0 0.0
        %4675 = vmatprep.subr.mxu0 0.0
        %4676 = vmatpush1.msra.mxu0 0.0
        %4677 = vmatprep.subr.mxu0 0.0
        %4678 = vmatpush1.msra.mxu0 0.0
        %4679 = vmatprep.subr.mxu0 0.0
        %4680 = vmatpush1.msra.mxu0 0.0
        %4681 = vmatprep.subr.mxu0 0.0
        %4682 = vmatpush1.msra.mxu0 0.0
        %4683 = vmatprep.subr.mxu0 0.0
        %4684 = vmatpush1.msra.mxu0 0.0
        %4685 = vmatprep.subr.mxu0 0.0
        %4686 = vmatpush1.msra.mxu0 0.0
        %4687 = vmatprep.subr.mxu0 0.0
        %4688 = vmatpush1.msra.mxu0 0.0
        %4689 = vmatprep.subr.mxu0 0.0
        %4690 = vmatpush1.msra.mxu0 0.0
        %4691 = vmatprep.subr.mxu0 0.0
        %4692 = vmatpush1.msra.mxu0 0.0
        %4693 = vmatprep.subr.mxu0 0.0
        %4694 = vmatpush1.msra.mxu0 0.0
        %4695 = vmatprep.subr.mxu0 0.0
        %4696 = vmatpush1.msra.mxu0 0.0
        %4697 = vmatprep.mubr.f32.mxu0 0.0
        %4698 = vmatmul.mubr.f32.gmra.mrb[0].mxu0 %v4631
        %v4699 = vpop.f32.mrb[0].mxu0
        %v4700 = vadd.f32 0.0, %v4699
        %v4701 = vpop.f32.mrb[0].mxu0
        %4702 = vdwg.mxu0
        %v4704 = vsel %vm1944, %v4481, 0
        %4706 = vmatprep.subr.mxu0 0.0
        %4707 = vmatpush1.msra.mxu0 %v2992
        %4708 = vmatprep.subr.mxu0 0.0
        %4709 = vmatpush1.msra.mxu0 0.0
        %4710 = vmatprep.subr.mxu0 0.0
        %4711 = vmatpush1.msra.mxu0 0.0
        %4712 = vmatprep.subr.mxu0 0.0
        %4713 = vmatpush1.msra.mxu0 0.0
        %4714 = vmatprep.subr.mxu0 0.0
        %4715 = vmatpush1.msra.mxu0 0.0
        %4716 = vmatprep.subr.mxu0 0.0
        %4717 = vmatpush1.msra.mxu0 0.0
        %4718 = vmatprep.subr.mxu0 0.0
        %4719 = vmatpush1.msra.mxu0 0.0
        %4720 = vmatprep.subr.mxu0 0.0
        %4721 = vmatpush1.msra.mxu0 0.0
        %4722 = vmatprep.subr.mxu0 0.0
        %4723 = vmatpush1.msra.mxu0 0.0
        %4724 = vmatprep.subr.mxu0 0.0
        %4725 = vmatpush1.msra.mxu0 0.0
        %4726 = vmatprep.subr.mxu0 0.0
        %4727 = vmatpush1.msra.mxu0 0.0
        %4728 = vmatprep.subr.mxu0 0.0
        %4729 = vmatpush1.msra.mxu0 0.0
        %4730 = vmatprep.subr.mxu0 0.0
        %4731 = vmatpush1.msra.mxu0 0.0
        %4732 = vmatprep.subr.mxu0 0.0
        %4733 = vmatpush1.msra.mxu0 0.0
        %4734 = vmatprep.subr.mxu0 0.0
        %4735 = vmatpush1.msra.mxu0 0.0
        %4736 = vmatprep.subr.mxu0 0.0
        %4737 = vmatpush1.msra.mxu0 0.0
        %4738 = vmatprep.subr.mxu0 0.0
        %4739 = vmatpush1.msra.mxu0 0.0
        %4740 = vmatprep.subr.mxu0 0.0
        %4741 = vmatpush1.msra.mxu0 0.0
        %4742 = vmatprep.subr.mxu0 0.0
        %4743 = vmatpush1.msra.mxu0 0.0
        %4744 = vmatprep.subr.mxu0 0.0
        %4745 = vmatpush1.msra.mxu0 0.0
        %4746 = vmatprep.subr.mxu0 0.0
        %4747 = vmatpush1.msra.mxu0 0.0
        %4748 = vmatprep.subr.mxu0 0.0
        %4749 = vmatpush1.msra.mxu0 0.0
        %4750 = vmatprep.subr.mxu0 0.0
        %4751 = vmatpush1.msra.mxu0 0.0
        %4752 = vmatprep.subr.mxu0 0.0
        %4753 = vmatpush1.msra.mxu0 0.0
        %4754 = vmatprep.subr.mxu0 0.0
        %4755 = vmatpush1.msra.mxu0 0.0
        %4756 = vmatprep.subr.mxu0 0.0
        %4757 = vmatpush1.msra.mxu0 0.0
        %4758 = vmatprep.subr.mxu0 0.0
        %4759 = vmatpush1.msra.mxu0 0.0
        %4760 = vmatprep.subr.mxu0 0.0
        %4761 = vmatpush1.msra.mxu0 0.0
        %4762 = vmatprep.subr.mxu0 0.0
        %4763 = vmatpush1.msra.mxu0 0.0
        %4764 = vmatprep.subr.mxu0 0.0
        %4765 = vmatpush1.msra.mxu0 0.0
        %4766 = vmatprep.subr.mxu0 0.0
        %4767 = vmatpush1.msra.mxu0 0.0
        %4768 = vmatprep.subr.mxu0 0.0
        %4769 = vmatpush1.msra.mxu0 0.0
        %4770 = vmatprep.mubr.f32.mxu0 0.0
        %4771 = vmatmul.mubr.f32.gmra.mrb[0].mxu0 %v4704
        %v4772 = vpop.f32.mrb[0].mxu0
        %v4773 = vadd.f32 0.0, %v4772
        %v4774 = vpop.f32.mrb[0].mxu0
        %4775 = vdwg.mxu0
        %v4777 = vsel %vm1944, %v4554, 0
        %4779 = vmatprep.subr.mxu0 0.0
        %4780 = vmatpush1.msra.mxu0 %v2993
        %4781 = vmatprep.subr.mxu0 0.0
        %4782 = vmatpush1.msra.mxu0 0.0
        %4783 = vmatprep.subr.mxu0 0.0
        %4784 = vmatpush1.msra.mxu0 0.0
        %4785 = vmatprep.subr.mxu0 0.0
        %4786 = vmatpush1.msra.mxu0 0.0
        %4787 = vmatprep.subr.mxu0 0.0
        %4788 = vmatpush1.msra.mxu0 0.0
        %4789 = vmatprep.subr.mxu0 0.0
        %4790 = vmatpush1.msra.mxu0 0.0
        %4791 = vmatprep.subr.mxu0 0.0
        %4792 = vmatpush1.msra.mxu0 0.0
        %4793 = vmatprep.subr.mxu0 0.0
        %4794 = vmatpush1.msra.mxu0 0.0
        %4795 = vmatprep.subr.mxu0 0.0
        %4796 = vmatpush1.msra.mxu0 0.0
        %4797 = vmatprep.subr.mxu0 0.0
        %4798 = vmatpush1.msra.mxu0 0.0
        %4799 = vmatprep.subr.mxu0 0.0
        %4800 = vmatpush1.msra.mxu0 0.0
        %4801 = vmatprep.subr.mxu0 0.0
        %4802 = vmatpush1.msra.mxu0 0.0
        %4803 = vmatprep.subr.mxu0 0.0
        %4804 = vmatpush1.msra.mxu0 0.0
        %4805 = vmatprep.subr.mxu0 0.0
        %4806 = vmatpush1.msra.mxu0 0.0
        %4807 = vmatprep.subr.mxu0 0.0
        %4808 = vmatpush1.msra.mxu0 0.0
        %4809 = vmatprep.subr.mxu0 0.0
        %4810 = vmatpush1.msra.mxu0 0.0
        %4811 = vmatprep.subr.mxu0 0.0
        %4812 = vmatpush1.msra.mxu0 0.0
        %4813 = vmatprep.subr.mxu0 0.0
        %4814 = vmatpush1.msra.mxu0 0.0
        %4815 = vmatprep.subr.mxu0 0.0
        %4816 = vmatpush1.msra.mxu0 0.0
        %4817 = vmatprep.subr.mxu0 0.0
        %4818 = vmatpush1.msra.mxu0 0.0
        %4819 = vmatprep.subr.mxu0 0.0
        %4820 = vmatpush1.msra.mxu0 0.0
        %4821 = vmatprep.subr.mxu0 0.0
        %4822 = vmatpush1.msra.mxu0 0.0
        %4823 = vmatprep.subr.mxu0 0.0
        %4824 = vmatpush1.msra.mxu0 0.0
        %4825 = vmatprep.subr.mxu0 0.0
        %4826 = vmatpush1.msra.mxu0 0.0
        %4827 = vmatprep.subr.mxu0 0.0
        %4828 = vmatpush1.msra.mxu0 0.0
        %4829 = vmatprep.subr.mxu0 0.0
        %4830 = vmatpush1.msra.mxu0 0.0
        %4831 = vmatprep.subr.mxu0 0.0
        %4832 = vmatpush1.msra.mxu0 0.0
        %4833 = vmatprep.subr.mxu0 0.0
        %4834 = vmatpush1.msra.mxu0 0.0
        %4835 = vmatprep.subr.mxu0 0.0
        %4836 = vmatpush1.msra.mxu0 0.0
        %4837 = vmatprep.subr.mxu0 0.0
        %4838 = vmatpush1.msra.mxu0 0.0
        %4839 = vmatprep.subr.mxu0 0.0
        %4840 = vmatpush1.msra.mxu0 0.0
        %4841 = vmatprep.subr.mxu0 0.0
        %4842 = vmatpush1.msra.mxu0 0.0
        %4843 = vmatprep.mubr.f32.mxu0 0.0
        %4844 = vmatmul.mubr.f32.gmra.mrb[0].mxu0 %v4777
        %v4845 = vpop.f32.mrb[0].mxu0
        %v4846 = vadd.f32 0.0, %v4845
        %v4847 = vpop.f32.mrb[0].mxu0
        %4848 = vdwg.mxu0
        %v4849 = vsel %vm1052, %v4627, 0.0
        %v4850 = vsel %vm1052, %v4700, 0.0
        %v4851 = vadd.f32 %v4849, %v4850
        %v4852 = vsel %vm1052, %v4773, 0.0
        %v4853 = vadd.f32 %v4851, %v4852
        %v4854 = vsel %vm1052, %v4846, 0.0
        %v4855 = vadd.f32 %v4853, %v4854
        %v4857 = vlaneseq
        %v4858 = vshrl.u32 %v4857, 7
        %v4859 = vsub.s32 0, %v4858
        %v4860 = vrot.slane %v2994, %v4859
        %v4862 = vadd.f32 %v4855, %v4860
        %4863 = vst.msk [vmem:[%s952] sm:$0xff] %vm1944, %v4261
        %4864 = vst.msk [vmem:[%s952 + $0x8] sm:$0xff] %vm1944, %v4262
        %4865 = vst.msk [vmem:[%s952 + $0x10] sm:$0xff] %vm1944, %v4263
        %4866 = vst.msk [vmem:[%s952 + $0x18] sm:$0xff] %vm1944, %v4264
        %v4867 = vadd.f32 %v2929, %v4862
        %v4868 = vld [vmem:[%s49] sm:$0x1]
        %v4869 = vld [vmem:[%s51] sm:$0x1]
        %v4870 = vsel %vm1052, %v4867, 0.0
        %4871 = vadd.xlane.f32.xlu0 %v4870
        %v4872 = vpop.xlane.xlu0 %4871
        %v4873 = vmul.f32 %v4872, %v2905
        %v4874 = vsub.f32 %v4867, %v4873
        %v4875 = vmul.f32 %v4874, %v4874
        %v4876 = vsel %vm1052, %v4875, 0.0
        %4877 = vadd.xlane.f32.xlu0 %v4876
        %v4878 = vpop.xlane.xlu0 %4877
        %v4879 = vmul.f32 %v4878, %v2905
        %v4880 = vadd.f32 %v4879, 1e-05
        %v4881 = vrsqrt.pop %v4880
        %v4882 = vmul.f32 %v4874, %v4881
        %v4884 = vlaneseq
        %v4885 = vshrl.u32 %v4884, 7
        %v4886 = vsub.s32 0, %v4885
        %v4887 = vrot.slane %v4868, %v4886
        %v4889 = vmul.f32 %v4882, %v4887
        %v4891 = vlaneseq
        %v4892 = vshrl.u32 %v4891, 7
        %v4893 = vsub.s32 0, %v4892
        %v4894 = vrot.slane %v4869, %v4893
        %v4896 = vadd.f32 %v4889, %v4894
        %v4897 = vld [vmem:[%s37] sm:$0xff]
        %v4898 = vld [vmem:[%s37 + $0x8] sm:$0xff]
        %v4899 = vld [vmem:[%s37 + $0x10] sm:$0xff]
        %v4900 = vld [vmem:[%s37 + $0x18] sm:$0xff]
        %v4901 = vld [vmem:[%s39] sm:$0x1]
        %v4903 = vlaneseq
        %v4904 = vshrl.u32 %v4903, 7
        %v4905 = vsub.s32 0, %v4904
        %v4906 = vrot.slane %v4901, %v4905
        %v4909 = vsel %vm1052, %v4896, 0
        %4911 = vmatprep.subr.mxu0 0.0
        %4912 = vmatpush1.msra.mxu0 %v4897
        %4913 = vmatprep.subr.mxu0 0.0
        %4914 = vmatpush1.msra.mxu0 %v4898
        %4915 = vmatprep.subr.mxu0 0.0
        %4916 = vmatpush1.msra.mxu0 %v4899
        %4917 = vmatprep.subr.mxu0 0.0
        %4918 = vmatpush1.msra.mxu0 %v4900
        %4919 = vmatprep.subr.mxu0 0.0
        %4920 = vmatpush1.msra.mxu0 0.0
        %4921 = vmatprep.subr.mxu0 0.0
        %4922 = vmatpush1.msra.mxu0 0.0
        %4923 = vmatprep.subr.mxu0 0.0
        %4924 = vmatpush1.msra.mxu0 0.0
        %4925 = vmatprep.subr.mxu0 0.0
        %4926 = vmatpush1.msra.mxu0 0.0
        %4927 = vmatprep.subr.mxu0 0.0
        %4928 = vmatpush1.msra.mxu0 0.0
        %4929 = vmatprep.subr.mxu0 0.0
        %4930 = vmatpush1.msra.mxu0 0.0
        %4931 = vmatprep.subr.mxu0 0.0
        %4932 = vmatpush1.msra.mxu0 0.0
        %4933 = vmatprep.subr.mxu0 0.0
        %4934 = vmatpush1.msra.mxu0 0.0
        %4935 = vmatprep.subr.mxu0 0.0
        %4936 = vmatpush1.msra.mxu0 0.0
        %4937 = vmatprep.subr.mxu0 0.0
        %4938 = vmatpush1.msra.mxu0 0.0
        %4939 = vmatprep.subr.mxu0 0.0
        %4940 = vmatpush1.msra.mxu0 0.0
        %4941 = vmatprep.subr.mxu0 0.0
        %4942 = vmatpush1.msra.mxu0 0.0
        %4943 = vmatprep.subr.mxu0 0.0
        %4944 = vmatpush1.msra.mxu0 0.0
        %4945 = vmatprep.subr.mxu0 0.0
        %4946 = vmatpush1.msra.mxu0 0.0
        %4947 = vmatprep.subr.mxu0 0.0
        %4948 = vmatpush1.msra.mxu0 0.0
        %4949 = vmatprep.subr.mxu0 0.0
        %4950 = vmatpush1.msra.mxu0 0.0
        %4951 = vmatprep.subr.mxu0 0.0
        %4952 = vmatpush1.msra.mxu0 0.0
        %4953 = vmatprep.subr.mxu0 0.0
        %4954 = vmatpush1.msra.mxu0 0.0
        %4955 = vmatprep.subr.mxu0 0.0
        %4956 = vmatpush1.msra.mxu0 0.0
        %4957 = vmatprep.subr.mxu0 0.0
        %4958 = vmatpush1.msra.mxu0 0.0
        %4959 = vmatprep.subr.mxu0 0.0
        %4960 = vmatpush1.msra.mxu0 0.0
        %4961 = vmatprep.subr.mxu0 0.0
        %4962 = vmatpush1.msra.mxu0 0.0
        %4963 = vmatprep.subr.mxu0 0.0
        %4964 = vmatpush1.msra.mxu0 0.0
        %4965 = vmatprep.subr.mxu0 0.0
        %4966 = vmatpush1.msra.mxu0 0.0
        %4967 = vmatprep.subr.mxu0 0.0
        %4968 = vmatpush1.msra.mxu0 0.0
        %4969 = vmatprep.subr.mxu0 0.0
        %4970 = vmatpush1.msra.mxu0 0.0
        %4971 = vmatprep.subr.mxu0 0.0
        %4972 = vmatpush1.msra.mxu0 0.0
        %4973 = vmatprep.subr.mxu0 0.0
        %4974 = vmatpush1.msra.mxu0 0.0
        %4975 = vmatprep.mubr.f32.mxu0 0.0
        %4976 = vmatmul.mubr.f32.gmra.mrb[0].mxu0 %v4909
        %v4977 = vpop.f32.mrb[0].mxu0
        %v4978 = vadd.f32 %v4906, %v4977
        %v4979 = vpop.f32.mrb[0].mxu0
        %4980 = vdwg.mxu0
        %v4981 = vmax.f32 %v4978, 0.0
        %v4982 = vld [vmem:[%s41] sm:$0xff]
        %v4983 = vld [vmem:[%s41 + $0x8] sm:$0xff]
        %v4984 = vld [vmem:[%s41 + $0x10] sm:$0xff]
        %v4985 = vld [vmem:[%s41 + $0x18] sm:$0xff]
        %v4986 = vld [vmem:[%s41 + $0x20] sm:$0xff]
        %v4987 = vld [vmem:[%s41 + $0x28] sm:$0xff]
        %v4988 = vld [vmem:[%s41 + $0x30] sm:$0xff]
        %v4989 = vld [vmem:[%s41 + $0x38] sm:$0xff]
        %v4990 = vld [vmem:[%s43] sm:$0x1]
        %v4992 = vlaneseq
        %v4993 = vshrl.u32 %v4992, 7
        %v4994 = vsub.s32 0, %v4993
        %v4995 = vrot.slane %v4990, %v4994
        %vm4997 = vcmask 523264
        %v4999 = vsel %vm4997, %v4981, 0
        %5001 = vmatprep.subr.mxu0 0.0
        %5002 = vmatpush1.msra.mxu0 %v4982
        %5003 = vmatprep.subr.mxu0 0.0
        %5004 = vmatpush1.msra.mxu0 %v4983
        %5005 = vmatprep.subr.mxu0 0.0
        %5006 = vmatpush1.msra.mxu0 %v4984
        %5007 = vmatprep.subr.mxu0 0.0
        %5008 = vmatpush1.msra.mxu0 %v4985
        %5009 = vmatprep.subr.mxu0 0.0
        %5010 = vmatpush1.msra.mxu0 %v4986
        %5011 = vmatprep.subr.mxu0 0.0
        %5012 = vmatpush1.msra.mxu0 %v4987
        %5013 = vmatprep.subr.mxu0 0.0
        %5014 = vmatpush1.msra.mxu0 %v4988
        %5015 = vmatprep.subr.mxu0 0.0
        %5016 = vmatpush1.msra.mxu0 %v4989
        %5017 = vmatprep.subr.mxu0 0.0
        %5018 = vmatpush1.msra.mxu0 0.0
        %5019 = vmatprep.subr.mxu0 0.0
        %5020 = vmatpush1.msra.mxu0 0.0
        %5021 = vmatprep.subr.mxu0 0.0
        %5022 = vmatpush1.msra.mxu0 0.0
        %5023 = vmatprep.subr.mxu0 0.0
        %5024 = vmatpush1.msra.mxu0 0.0
        %5025 = vmatprep.subr.mxu0 0.0
        %5026 = vmatpush1.msra.mxu0 0.0
        %5027 = vmatprep.subr.mxu0 0.0
        %5028 = vmatpush1.msra.mxu0 0.0
        %5029 = vmatprep.subr.mxu0 0.0
        %5030 = vmatpush1.msra.mxu0 0.0
        %5031 = vmatprep.subr.mxu0 0.0
        %5032 = vmatpush1.msra.mxu0 0.0
        %5033 = vmatprep.subr.mxu0 0.0
        %5034 = vmatpush1.msra.mxu0 0.0
        %5035 = vmatprep.subr.mxu0 0.0
        %5036 = vmatpush1.msra.mxu0 0.0
        %5037 = vmatprep.subr.mxu0 0.0
        %5038 = vmatpush1.msra.mxu0 0.0
        %5039 = vmatprep.subr.mxu0 0.0
        %5040 = vmatpush1.msra.mxu0 0.0
        %5041 = vmatprep.subr.mxu0 0.0
        %5042 = vmatpush1.msra.mxu0 0.0
        %5043 = vmatprep.subr.mxu0 0.0
        %5044 = vmatpush1.msra.mxu0 0.0
        %5045 = vmatprep.subr.mxu0 0.0
        %5046 = vmatpush1.msra.mxu0 0.0
        %5047 = vmatprep.subr.mxu0 0.0
        %5048 = vmatpush1.msra.mxu0 0.0
        %5049 = vmatprep.subr.mxu0 0.0
        %5050 = vmatpush1.msra.mxu0 0.0
        %5051 = vmatprep.subr.mxu0 0.0
        %5052 = vmatpush1.msra.mxu0 0.0
        %5053 = vmatprep.subr.mxu0 0.0
        %5054 = vmatpush1.msra.mxu0 0.0
        %5055 = vmatprep.subr.mxu0 0.0
        %5056 = vmatpush1.msra.mxu0 0.0
        %5057 = vmatprep.subr.mxu0 0.0
        %5058 = vmatpush1.msra.mxu0 0.0
        %5059 = vmatprep.subr.mxu0 0.0
        %5060 = vmatpush1.msra.mxu0 0.0
        %5061 = vmatprep.subr.mxu0 0.0
        %5062 = vmatpush1.msra.mxu0 0.0
        %5063 = vmatprep.subr.mxu0 0.0
        %5064 = vmatpush1.msra.mxu0 0.0
        %5065 = vmatprep.mubr.f32.mxu0 0.0
        %5066 = vmatmul.mubr.f32.gmra.mrb[0].mxu0 %v4999
        %v5067 = vpop.f32.mrb[0].mxu0
        %v5068 = vadd.f32 %v4995, %v5067
        %v5069 = vpop.f32.mrb[0].mxu0
        %5070 = vdwg.mxu0
        %v5071 = vadd.f32 %v4896, %v5068
        %v5072 = vld [vmem:[%s53] sm:$0x1]
        %v5073 = vld [vmem:[%s55] sm:$0x1]
        %v5074 = vsel %vm1052, %v5071, 0.0
        %5075 = vadd.xlane.f32.xlu0 %v5074
        %v5076 = vpop.xlane.xlu0 %5075
        %v5077 = vmul.f32 %v5076, %v2905
        %v5078 = vsub.f32 %v5071, %v5077
        %v5079 = vmul.f32 %v5078, %v5078
        %v5080 = vsel %vm1052, %v5079, 0.0
        %5081 = vadd.xlane.f32.xlu0 %v5080
        %v5082 = vpop.xlane.xlu0 %5081
        %v5083 = vmul.f32 %v5082, %v2905
        %v5084 = vadd.f32 %v5083, 1e-05
        %v5085 = vrsqrt.pop %v5084
        %v5086 = vmul.f32 %v5078, %v5085
        %v5088 = vlaneseq
        %v5089 = vshrl.u32 %v5088, 7
        %v5090 = vsub.s32 0, %v5089
        %v5091 = vrot.slane %v5072, %v5090
        %v5093 = vmul.f32 %v5086, %v5091
        %v5095 = vlaneseq
        %v5096 = vshrl.u32 %v5095, 7
        %v5097 = vsub.s32 0, %v5096
        %v5098 = vrot.slane %v5073, %v5097
        %v5100 = vadd.f32 %v5093, %v5098
        %5101 = vst.msk [vmem:[%s938] sm:$0xff] %vm1052, %v5100
        %s5102 = sand.u32 %s685, 1
        %s5103 = scalar_lea.sflag [#allocation3], %s5102
        %s5104 = sand.u32 %s685, 1
        %s5105 = smul.addr %s5104, 8
        %s5106 = scalar_lea.vmem [#allocation2], %s5105
        %s5107 = sand.u32 %s79, 1
        %s5108 = scalar_lea.sflag [#allocation5], %s5107
        %s5109 = sand.u32 %s711, 1
        %s5110 = smul.addr %s5109, 32
        %s5111 = scalar_lea.vmem [#allocation4], %s5110
        %s5112 = sand.u32 %s79, 1
        %s5113 = scalar_lea.sflag [#allocation5], %s5112
        %s5114 = sand.u32 %s737, 1
        %s5115 = smul.addr %s5114, 32
        %s5116 = scalar_lea.vmem [#allocation6], %s5115
        // Predicated region
        $region133: #{tpu_custom_call.1} parent=131 // pred_check
          %p5117 = pneg %p695
        $region134: #{tpu_custom_call.1} parent=131 // pred_check_branch
          %5119 = sbr.rel (%p5117) target = $region136
        $region135: #{tpu_custom_call.1} parent=131 // pred_region
          %s5121 = ssub.s32 128, 128
          %5122 = vsyncadd %s5103, %s5121
          %s5123 = smul.addr %s79, 128
          %s5124 = scalar_lea.hbm %s57, %s5123
          %s5126 = sshll.u32 %s5106, 4
          %s5127 = int_to_ptr.vmem [resolvable:$true] %s5126
          %5129 = dma.vmem_to_hbm [thread:$0]  %s5127, 128, %s5124, %s5103
        $region136: #{tpu_custom_call.1} parent=131 // pred_fallthru
          _
        // Predicated region
        $region137: #{tpu_custom_call.1} parent=131 // pred_check
          %p5130 = pneg %p721
        $region138: #{tpu_custom_call.1} parent=131 // pred_check_branch
          %5132 = sbr.rel (%p5130) target = $region140
        $region139: #{tpu_custom_call.1} parent=131 // pred_region
          %s5134 = ssub.s32 512, 512
          %5135 = vsyncadd %s5108, %s5134
          %s5136 = smul.addr %s79, 4
          %s5137 = smul.addr %s5136, 128
          %s5138 = scalar_lea.hbm %s59, %s5137
          %s5139 = sshll.u32 %s5111, 4
          %s5140 = int_to_ptr.vmem [resolvable:$true] %s5139
          %5145 = dma.vmem_to_hbm [thread:$0]  %s5140, 512, %s5138, %s5108, 128, 128, 8
        $region140: #{tpu_custom_call.1} parent=131 // pred_fallthru
          _
        // Predicated region
        $region141: #{tpu_custom_call.1} parent=131 // pred_check
          %p5146 = pneg %p747
        $region142: #{tpu_custom_call.1} parent=131 // pred_check_branch
          %5148 = sbr.rel (%p5146) target = $region144
        $region143: #{tpu_custom_call.1} parent=131 // pred_region
          %s5150 = ssub.s32 512, 512
          %5151 = vsyncadd %s5113, %s5150
          %s5152 = smul.addr %s79, 4
          %s5153 = smul.addr %s5152, 128
          %s5154 = scalar_lea.hbm %s61, %s5153
          %s5155 = sshll.u32 %s5116, 4
          %s5156 = int_to_ptr.vmem [resolvable:$true] %s5155
          %5161 = dma.vmem_to_hbm [thread:$0]  %s5156, 512, %s5154, %s5113, 128, 128, 8
        $region144: #{tpu_custom_call.1} parent=131 // pred_fallthru
          _
      $region132: #{tpu_custom_call.1} parent=5 // pred_fallthru
        _
      %p5162 = scmp.le.s32.totalorder 2, %s74
      // Predicated region
      $region145: #{tpu_custom_call.1} parent=5 // pred_check
        %p5163 = pneg %p5162
      $region146: #{tpu_custom_call.1} parent=5 // pred_check_branch
        %5165 = sbr.rel (%p5163) target = $region148
      $region147: #{tpu_custom_call.1} parent=5 // pred_region
        %s5166 = ssub.s32 %s74, 2
        // Predicated region
        $region149: #{tpu_custom_call.1} parent=147 // pred_check
          %p5167 = pneg %p701
        $region150: #{tpu_custom_call.1} parent=147 // pred_check_branch
          %5169 = sbr.rel (%p5167) target = $region152
        $region151: #{tpu_custom_call.1} parent=147 // pred_region
          %s5170 = sand.u32 %s686, 1
          %s5171 = scalar_lea.sflag [#allocation3], %s5170
          %s5172 = sand.u32 %s686, 1
          %s5173 = smul.addr %s5172, 8
          %s5174 = scalar_lea.vmem [#allocation2], %s5173
          %5175 = dma.done %s5171, 128
        $region152: #{tpu_custom_call.1} parent=147 // pred_fallthru
          _
        // Predicated region
        $region153: #{tpu_custom_call.1} parent=147 // pred_check
          %p5176 = pneg %p727
        $region154: #{tpu_custom_call.1} parent=147 // pred_check_branch
          %5178 = sbr.rel (%p5176) target = $region156
        $region155: #{tpu_custom_call.1} parent=147 // pred_region
          %s5179 = sand.u32 %s80, 1
          %s5180 = scalar_lea.sflag [#allocation5], %s5179
          %s5181 = sand.u32 %s712, 1
          %s5182 = smul.addr %s5181, 32
          %s5183 = scalar_lea.vmem [#allocation4], %s5182
          %5184 = dma.done %s5180, 512
        $region156: #{tpu_custom_call.1} parent=147 // pred_fallthru
          _
        // Predicated region
        $region157: #{tpu_custom_call.1} parent=147 // pred_check
          %p5185 = pneg %p753
        $region158: #{tpu_custom_call.1} parent=147 // pred_check_branch
          %5187 = sbr.rel (%p5185) target = $region160
        $region159: #{tpu_custom_call.1} parent=147 // pred_region
          %s5188 = sand.u32 %s80, 1
          %s5189 = scalar_lea.sflag [#allocation5], %s5188
          %s5190 = sand.u32 %s738, 1
          %s5191 = smul.addr %s5190, 32
          %s5192 = scalar_lea.vmem [#allocation6], %s5191
          %5193 = dma.done %s5189, 512
        $region160: #{tpu_custom_call.1} parent=147 // pred_fallthru
          _
      $region148: #{tpu_custom_call.1} parent=5 // pred_fallthru
        _
    $region6: #{tpu_custom_call.1} parent=1 // loop_footer
      %s78 = sadd.s32 1, %s74
    $region7: #{tpu_custom_call.1} parent=1 // loop_footer_branch
      %73 = sbr.rel target = $region3
    $region8: #{tpu_custom_call.1} parent=1 // loop_exit
      _
    %5194 = vsyncpa [#allocation3], 1
    %s5195 = scalar_lea.sflag [#allocation3], 1
    %5196 = vsyncpa %s5195, 1
    %5197 = vsyncpa [#allocation5], 1
    %s5198 = scalar_lea.sflag [#allocation5], 1
    %5199 = vsyncpa %s5198, 1

</llo_original>
